<compile_context>
chip_gen: v7x
topology: tpu7x:2x2x1
jax: 0.10.0
libtpu: 0.0.40
codegen_flags: <defaults>
</compile_context>

<pallas_src>
import functools

import jax
import jax.numpy as jnp
from jax.experimental import pallas as pl
from jax.experimental.pallas import tpu as pltpu

LANE = 128


def _round_up(x, m):
    return (x + m - 1) // m * m


# ----------------------------------------------------------------------------
# Fused DownBlock kernel (one batch image per grid step)
# ----------------------------------------------------------------------------
def _down_block_kernel(x_ref, w1_ref, b1_ref, w2_ref, b2_ref,
                       feat_ref, pool_ref, xp1_ref, xp2_ref,
                       *, H, W, d, compute_dtype):
    """conv1(+BN+ReLU) -> conv2(+BN+ReLU) -> maxpool2x2, all in VMEM.

    x_ref   : (1, H, W, C1)         input, channels lane-padded to C1
    w1_ref  : (9*C1, C2)            conv1 taps, im2col layout, BN folded, compute_dtype
    b1_ref  : (1, C2)               f32
    w2_ref  : (9*C2, C3)            conv2 taps, im2col layout, BN folded, compute_dtype
    b2_ref  : (1, C3)               f32
    feat_ref: (1, H, W, C3)         conv2 output (pre-pool)
    pool_ref: (1, H//2, W//2, C3)   maxpool output
    xp1_ref : (H+2d, W+2d, C1) f32  VMEM halo buffer for conv1
    xp2_ref : (H+2,  W+2,  C2) f32  VMEM halo buffer for conv2
    """
    C1 = xp1_ref.shape[-1]
    C2 = xp2_ref.shape[-1]
    C3 = feat_ref.shape[-1]
    H2, W2 = H // 2, W // 2

    # ---- conv1: build the zero halo in VMEM (no padded HBM copy), one im2col matmul.
    xp1_ref[...] = jnp.zeros_like(xp1_ref)
    xp1_ref[d:d + H, d:d + W, :] = x_ref[0].astype(jnp.float32)
    xp1 = xp1_ref[...]
    taps1 = [xp1[kh * d:kh * d + H, kw * d:kw * d + W, :]
             for kh in range(3) for kw in range(3)]
    im1 = jnp.concatenate(taps1, axis=-1).reshape(H * W, 9 * C1).astype(compute_dtype)
    y1 = jnp.dot(im1, w1_ref[...], preferred_element_type=jnp.float32)
    y1 = jnp.maximum(y1 + b1_ref[...], 0.0)                      # (H*W, C2) f32

    # ---- conv2 (dilation=1): conv1's output never leaves VMEM.
    xp2_ref[...] = jnp.zeros_like(xp2_ref)
    xp2_ref[1:1 + H, 1:1 + W, :] = y1.reshape(H, W, C2)
    xp2 = xp2_ref[...]
    taps2 = [xp2[kh:kh + H, kw:kw + W, :] for kh in range(3) for kw in range(3)]
    im2 = jnp.concatenate(taps2, axis=-1).reshape(H * W, 9 * C2).astype(compute_dtype)
    y2 = jnp.dot(im2, w2_ref[...], preferred_element_type=jnp.float32)
    y2 = jnp.maximum(y2 + b2_ref[...], 0.0).reshape(H, W, C3)    # f32

    feat_ref[0] = y2.astype(feat_ref.dtype)

    # ---- fused 2x2 max-pool epilogue via strided reads of the just-written tile.
    # (floors odd H/W like nn.MaxPool2d(2))
    p00 = feat_ref[:, pl.ds(0, H2, 2), pl.ds(0, W2, 2), :]
    p01 = feat_ref[:, pl.ds(0, H2, 2), pl.ds(1, W2, 2), :]
    p10 = feat_ref[:, pl.ds(1, H2, 2), pl.ds(0, W2, 2), :]
    p11 = feat_ref[:, pl.ds(1, H2, 2), pl.ds(1, W2, 2), :]
    pool_ref[...] = jnp.maximum(jnp.maximum(p00, p01), jnp.maximum(p10, p11))


def down_block_fused(x_nhwc, w1_2d, b1, w2_2d, b2, *, dilation, compute_dtype):
    """x_nhwc: (N,H,W,C1) with C1 lane-padded. Returns (feat_padded, pool_padded)."""
    N, H, W, C1 = x_nhwc.shape
    C2 = w1_2d.shape[-1]
    C3 = w2_2d.shape[-1]
    H2, W2 = H // 2, W // 2
    d = dilation

    kernel = functools.partial(_down_block_kernel, H=H, W=W, d=d,
                               compute_dtype=compute_dtype)
    return pl.pallas_call(
        kernel,
        out_shape=(jax.ShapeDtypeStruct((N, H, W, C3), x_nhwc.dtype),
                   jax.ShapeDtypeStruct((N, H2, W2, C3), x_nhwc.dtype)),
        grid_spec=pltpu.PrefetchScalarGridSpec(
            num_scalar_prefetch=0,
            grid=(N,),
            in_specs=[
                pl.BlockSpec((1, H, W, C1), lambda n: (n, 0, 0, 0)),
                pl.BlockSpec((9 * C1, C2), lambda n: (0, 0)),
                pl.BlockSpec((1, C2), lambda n: (0, 0)),
                pl.BlockSpec((9 * C2, C3), lambda n: (0, 0)),
                pl.BlockSpec((1, C3), lambda n: (0, 0)),
            ],
            out_specs=[
                pl.BlockSpec((1, H, W, C3), lambda n: (n, 0, 0, 0)),
                pl.BlockSpec((1, H2, W2, C3), lambda n: (n, 0, 0, 0)),
            ],
            scratch_shapes=[
                pltpu.VMEM((H + 2 * d, W + 2 * d, C1), jnp.float32),
                pltpu.VMEM((H + 2, W + 2, C2), jnp.float32),
            ],
        ),
        compiler_params=pltpu.CompilerParams(
            dimension_semantics=("parallel",),        # batch axis -> megacore sharding
            vmem_limit_bytes=48 * 1024 * 1024,        # < v7x's 64 MiB physical VMEM
        ),
    )(x_nhwc, w1_2d, b1, w2_2d, b2)


# ----------------------------------------------------------------------------
# Parameter construction (deterministic) + DownBlock forward
# ----------------------------------------------------------------------------
def make_conv_block_params(key, cin, cout, cin_pad, cout_pad, norm, eps=1e-5):
    kw_, kb, kg, kbt = jax.random.split(key, 4)
    # PyTorch layout (Cout, Cin, 3, 3), deterministic init
    w_oihw = 0.1 * jax.random.normal(kw_, (cout, cin, 3, 3), jnp.float32)
    b = 0.1 * jax.random.normal(kb, (cout,), jnp.float32)
    if norm:
        # eval-mode BatchNorm2d fold (running_mean=0, running_var=1, random affine)
        gamma = 1.0 + 0.1 * jax.random.normal(kg, (cout,), jnp.float32)
        beta = 0.1 * jax.random.normal(kbt, (cout,), jnp.float32)
        mean = jnp.zeros((cout,), jnp.float32)
        var = jnp.ones((cout,), jnp.float32)
        scale = gamma / jnp.sqrt(var + eps)
        w_oihw = w_oihw * scale[:, None, None, None]
        b = (b - mean) * scale + beta
    w_hwio = jnp.transpose(w_oihw, (2, 3, 1, 0))            # (3,3,cin,cout) for reference
    # lane-padded im2col layout for the kernel: (9*cin_pad, cout_pad), zero padding
    w_pad = jnp.zeros((3, 3, cin_pad, cout_pad), jnp.float32)
    w_pad = w_pad.at[:, :, :cin, :cout].set(w_hwio)
    w2d = w_pad.reshape(9 * cin_pad, cout_pad)
    b_pad = jnp.zeros((1, cout_pad), jnp.float32).at[0, :cout].set(b)
    return w_hwio, b, w2d, b_pad


class DownBlockPallas:
    def __init__(self, in_channels, out_channels, dilation, norm, key,
                 compute_dtype=jnp.float32):
        k1, k2 = jax.random.split(key)
        self.dilation = dilation
        self.out_channels = out_channels
        self.compute_dtype = compute_dtype
        self.cin_pad = _round_up(in_channels, LANE)
        self.cout_pad = _round_up(out_channels, LANE)
        (self.w1_hwio, self.b1_vec, w1_2d, self.b1_2d) = make_conv_block_params(
            k1, in_channels, out_channels, self.cin_pad, self.cout_pad, norm)
        (self.w2_hwio, self.b2_vec, w2_2d, self.b2_2d) = make_conv_block_params(
            k2, out_channels, out_channels, self.cout_pad, self.cout_pad, norm)
        # MXU operands in compute_dtype (bf16 on v6e/v7x halves weight HBM traffic);
        # accumulation stays f32 inside the kernel.
        self.w1_2d = w1_2d.astype(compute_dtype)
        self.w2_2d = w2_2d.astype(compute_dtype)

    def __call__(self, x_nchw):
        N, Cin, H, W = x_nchw.shape
        x = jnp.transpose(x_nchw, (0, 2, 3, 1))              # NCHW -> NHWC (C on lanes)
        # one-time lane padding of channels (no-op when Cin is already 128-aligned);
        # the spatial conv halo is built in VMEM inside the kernel (no padded HBM copy).
        x = jnp.pad(x, ((0, 0), (0, 0), (0, 0), (0, self.cin_pad - Cin)))
        feat_p, pool_p = down_block_fused(
            x, self.w1_2d, self.b1_2d, self.w2_2d, self.b2_2d,
            dilation=self.dilation, compute_dtype=self.compute_dtype)
        co = self.out_channels
        pool = jnp.transpose(pool_p[..., :co], (0, 3, 1, 2))
        feat = jnp.transpose(feat_p[..., :co], (0, 3, 1, 2))
        # match the PyTorch return: (maxpool(x), x), NCHW
        return (pool, feat)


# ----------------------------------------------------------------------------
# Pure-JAX reference (for correctness check)
# ----------------------------------------------------------------------------
def _ref_conv_relu(x_nhwc, w_hwio, b, dilation):
    y = jax.lax.conv_general_dilated(
        x_nhwc, w_hwio, window_strides=(1, 1),
        padding=[(dilation, dilation), (dilation, dilation)],
        rhs_dilation=(dilation, dilation),
        dimension_numbers=("NHWC", "HWIO", "NHWC"),
        precision=jax.lax.Precision.HIGHEST)
    return jnp.maximum(y + b, 0.0)


def _ref_forward(block, x_nchw):
    x = jnp.transpose(x_nchw, (0, 2, 3, 1))
    x = _ref_conv_relu(x, block.w1_hwio, block.b1_vec, block.dilation)
    x = _ref_conv_relu(x, block.w2_hwio, block.b2_vec, 1)
    N, H, W, C = x.shape
    p = x.reshape(N, H // 2, 2, W // 2, 2, C).max(axis=(2, 4))
    return (jnp.transpose(p, (0, 3, 1, 2)), jnp.transpose(x, (0, 3, 1, 2)))


if __name__ == "__main__":
    key = jax.random.PRNGKey(0)
    kx, kp = jax.random.split(key)

    # small shapes: batch=2, in_channels=4, out_channels=8, spatial=16x16 (NCHW like PyTorch)
    x = jax.random.normal(kx, (2, 4, 16, 16), jnp.float32)

    # f32 MXU operands: exact-parity path.
    block = DownBlockPallas(in_channels=4, out_channels=8, dilation=2, norm=True,
                            key=kp, compute_dtype=jnp.float32)
    pooled, feat = block(x)
    pooled = jax.block_until_ready(pooled)
    feat = jax.block_until_ready(feat)
    assert pooled.shape == (2, 8, 8, 8) and feat.shape == (2, 8, 16, 16)

    pooled_ref, feat_ref = _ref_forward(block, x)
    assert jnp.allclose(pooled, pooled_ref, atol=1e-3, rtol=1e-3)
    assert jnp.allclose(feat, feat_ref, atol=1e-3, rtol=1e-3)

    # bf16 MXU operands (v6e/v7x recommendation), f32 accumulation: looser tolerance.
    block_bf16 = DownBlockPallas(in_channels=4, out_channels=8, dilation=2, norm=True,
                                 key=kp, compute_dtype=jnp.bfloat16)
    pooled_b, feat_b = block_bf16(x)
    pooled_b = jax.block_until_ready(pooled_b)
    feat_b = jax.block_until_ready(feat_b)
    assert jnp.allclose(pooled_b, pooled_ref, atol=5e-2, rtol=5e-2)
    assert jnp.allclose(feat_b, feat_ref, atol=5e-2, rtol=5e-2)

    print("KERNEL_OK")
</pallas_src>

<mosaic_0001>
module attributes {stable_mosaic.version = 11 : i64} {
  func.func @_down_block_kernel(%arg0: i32, %arg1: memref<1x16x16x128xf32, #tpu.memory_space<vmem>>, %arg2: memref<1152x128xf32, #tpu.memory_space<vmem>>, %arg3: memref<1x128xf32, #tpu.memory_space<vmem>>, %arg4: memref<1152x128xf32, #tpu.memory_space<vmem>>, %arg5: memref<1x128xf32, #tpu.memory_space<vmem>>, %arg6: memref<1x16x16x128xf32, #tpu.memory_space<vmem>>, %arg7: memref<1x8x8x128xf32, #tpu.memory_space<vmem>>, %arg8: memref<20x20x128xf32, #tpu.memory_space<vmem>>, %arg9: memref<18x18x128xf32, #tpu.memory_space<vmem>>) attributes {dimension_semantics = [#tpu.dimension_semantics<parallel>], iteration_bounds = array<i64: 2>, scalar_prefetch = 0 : i64, scratch_operands = 2 : i64, tpu.core_type = #tpu.core_type<tc>, window_params = [{transform_indices = @transform_0, window_bounds = array<i64: 1, 16, 16, 128>}, {pipeline_mode = #tpu.pipeline_mode<synchronous>, transform_indices = @transform_1, window_bounds = array<i64: 1152, 128>}, {pipeline_mode = #tpu.pipeline_mode<synchronous>, transform_indices = @transform_2, window_bounds = array<i64: 1, 128>}, {pipeline_mode = #tpu.pipeline_mode<synchronous>, transform_indices = @transform_3, window_bounds = array<i64: 1152, 128>}, {pipeline_mode = #tpu.pipeline_mode<synchronous>, transform_indices = @transform_4, window_bounds = array<i64: 1, 128>}, {transform_indices = @transform_5, window_bounds = array<i64: 1, 16, 16, 128>}, {transform_indices = @transform_6, window_bounds = array<i64: 1, 8, 8, 128>}]} {
    %cst = arith.constant 0.000000e+00 : f32
    %0 = vector.broadcast %cst : f32 to vector<20x20x128xf32>
    %c0 = arith.constant 0 : index
    %c0_0 = arith.constant 0 : index
    %c0_1 = arith.constant 0 : index
    %1 = vector.load %arg8[%c0, %c0_0, %c0_1] : memref<20x20x128xf32, #tpu.memory_space<vmem>>, vector<20x20x128xf32>
    tpu.vector_store %arg8[%c0, %c0_0, %c0_1], %0 {strides = array<i32>} : memref<20x20x128xf32, #tpu.memory_space<vmem>>, vector<20x20x128xf32>,
    %c0_2 = arith.constant 0 : index
    %c0_3 = arith.constant 0 : index
    %c0_4 = arith.constant 0 : index
    %c0_5 = arith.constant 0 : index
    %2 = vector.load %arg1[%c0_2, %c0_3, %c0_4, %c0_5] : memref<1x16x16x128xf32, #tpu.memory_space<vmem>>, vector<1x16x16x128xf32>
    %3 = vector.shape_cast %2 : vector<1x16x16x128xf32> to vector<16x16x128xf32>
    %c2 = arith.constant 2 : index
    %c2_6 = arith.constant 2 : index
    %c0_7 = arith.constant 0 : index
    %4 = vector.load %arg8[%c2, %c2_6, %c0_7] : memref<20x20x128xf32, #tpu.memory_space<vmem>>, vector<16x16x128xf32>
    tpu.vector_store %arg8[%c2, %c2_6, %c0_7], %3 {strides = array<i32>} : memref<20x20x128xf32, #tpu.memory_space<vmem>>, vector<16x16x128xf32>,
    %c0_8 = arith.constant 0 : index
    %c0_9 = arith.constant 0 : index
    %c0_10 = arith.constant 0 : index
    %5 = vector.load %arg8[%c0_8, %c0_9, %c0_10] : memref<20x20x128xf32, #tpu.memory_space<vmem>>, vector<20x20x128xf32>
    %6 = vector.extract_strided_slice %5 {offsets = [0, 0, 0], sizes = [16, 16, 128], strides = [1, 1, 1]} : vector<20x20x128xf32> to vector<16x16x128xf32>
    %7 = vector.extract_strided_slice %5 {offsets = [0, 2, 0], sizes = [16, 16, 128], strides = [1, 1, 1]} : vector<20x20x128xf32> to vector<16x16x128xf32>
    %8 = vector.extract_strided_slice %5 {offsets = [0, 4, 0], sizes = [16, 16, 128], strides = [1, 1, 1]} : vector<20x20x128xf32> to vector<16x16x128xf32>
    %9 = vector.extract_strided_slice %5 {offsets = [2, 0, 0], sizes = [16, 16, 128], strides = [1, 1, 1]} : vector<20x20x128xf32> to vector<16x16x128xf32>
    %10 = vector.extract_strided_slice %5 {offsets = [2, 2, 0], sizes = [16, 16, 128], strides = [1, 1, 1]} : vector<20x20x128xf32> to vector<16x16x128xf32>
    %11 = vector.extract_strided_slice %5 {offsets = [2, 4, 0], sizes = [16, 16, 128], strides = [1, 1, 1]} : vector<20x20x128xf32> to vector<16x16x128xf32>
    %12 = vector.extract_strided_slice %5 {offsets = [4, 0, 0], sizes = [16, 16, 128], strides = [1, 1, 1]} : vector<20x20x128xf32> to vector<16x16x128xf32>
    %13 = vector.extract_strided_slice %5 {offsets = [4, 2, 0], sizes = [16, 16, 128], strides = [1, 1, 1]} : vector<20x20x128xf32> to vector<16x16x128xf32>
    %14 = vector.extract_strided_slice %5 {offsets = [4, 4, 0], sizes = [16, 16, 128], strides = [1, 1, 1]} : vector<20x20x128xf32> to vector<16x16x128xf32>
    %15 = tpu.concatenate %6, %7, %8, %9, %10, %11, %12, %13, %14 in 2 : vector<16x16x128xf32>, vector<16x16x128xf32>, vector<16x16x128xf32>, vector<16x16x128xf32>, vector<16x16x128xf32>, vector<16x16x128xf32>, vector<16x16x128xf32>, vector<16x16x128xf32>, vector<16x16x128xf32> -> vector<16x16x1152xf32>
    %16 = vector.shape_cast %15 : vector<16x16x1152xf32> to vector<256x1152xf32>
    %c0_11 = arith.constant 0 : index
    %c0_12 = arith.constant 0 : index
    %17 = vector.load %arg2[%c0_11, %c0_12] : memref<1152x128xf32, #tpu.memory_space<vmem>>, vector<1152x128xf32>
    %cst_13 = arith.constant dense<0.000000e+00> : vector<256x128xf32>
    %18 = tpu.matmul %16, %17, %cst_13 {dimension_numbers = #tpu.dot_dimension_numbers<[1], [0], [0], [1], [0, 0, 1, 1], [], []>} : vector<256x1152xf32>, vector<1152x128xf32>, vector<256x128xf32> -> vector<256x128xf32>
    %c0_14 = arith.constant 0 : index
    %c0_15 = arith.constant 0 : index
    %19 = vector.load %arg3[%c0_14, %c0_15] : memref<1x128xf32, #tpu.memory_space<vmem>>, vector<1x128xf32>
    %20 = vector.broadcast %19 : vector<1x128xf32> to vector<256x128xf32>
    %21 = arith.addf %18, %20 : vector<256x128xf32>
    %cst_16 = arith.constant 0.000000e+00 : f32
    %22 = vector.broadcast %cst_16 : f32 to vector<256x128xf32>
    %23 = arith.maximumf %21, %22 : vector<256x128xf32>
    %cst_17 = arith.constant 0.000000e+00 : f32
    %24 = vector.broadcast %cst_17 : f32 to vector<18x18x128xf32>
    %c0_18 = arith.constant 0 : index
    %c0_19 = arith.constant 0 : index
    %c0_20 = arith.constant 0 : index
    %25 = vector.load %arg9[%c0_18, %c0_19, %c0_20] : memref<18x18x128xf32, #tpu.memory_space<vmem>>, vector<18x18x128xf32>
    tpu.vector_store %arg9[%c0_18, %c0_19, %c0_20], %24 {strides = array<i32>} : memref<18x18x128xf32, #tpu.memory_space<vmem>>, vector<18x18x128xf32>,
    %26 = vector.shape_cast %23 : vector<256x128xf32> to vector<16x16x128xf32>
    %c1 = arith.constant 1 : index
    %c1_21 = arith.constant 1 : index
    %c0_22 = arith.constant 0 : index
    %27 = vector.load %arg9[%c1, %c1_21, %c0_22] : memref<18x18x128xf32, #tpu.memory_space<vmem>>, vector<16x16x128xf32>
    tpu.vector_store %arg9[%c1, %c1_21, %c0_22], %26 {strides = array<i32>} : memref<18x18x128xf32, #tpu.memory_space<vmem>>, vector<16x16x128xf32>,
    %c0_23 = arith.constant 0 : index
    %c0_24 = arith.constant 0 : index
    %c0_25 = arith.constant 0 : index
    %28 = vector.load %arg9[%c0_23, %c0_24, %c0_25] : memref<18x18x128xf32, #tpu.memory_space<vmem>>, vector<18x18x128xf32>
    %29 = vector.extract_strided_slice %28 {offsets = [0, 0, 0], sizes = [16, 16, 128], strides = [1, 1, 1]} : vector<18x18x128xf32> to vector<16x16x128xf32>
    %30 = vector.extract_strided_slice %28 {offsets = [0, 1, 0], sizes = [16, 16, 128], strides = [1, 1, 1]} : vector<18x18x128xf32> to vector<16x16x128xf32>
    %31 = vector.extract_strided_slice %28 {offsets = [0, 2, 0], sizes = [16, 16, 128], strides = [1, 1, 1]} : vector<18x18x128xf32> to vector<16x16x128xf32>
    %32 = vector.extract_strided_slice %28 {offsets = [1, 0, 0], sizes = [16, 16, 128], strides = [1, 1, 1]} : vector<18x18x128xf32> to vector<16x16x128xf32>
    %33 = vector.extract_strided_slice %28 {offsets = [1, 1, 0], sizes = [16, 16, 128], strides = [1, 1, 1]} : vector<18x18x128xf32> to vector<16x16x128xf32>
    %34 = vector.extract_strided_slice %28 {offsets = [1, 2, 0], sizes = [16, 16, 128], strides = [1, 1, 1]} : vector<18x18x128xf32> to vector<16x16x128xf32>
    %35 = vector.extract_strided_slice %28 {offsets = [2, 0, 0], sizes = [16, 16, 128], strides = [1, 1, 1]} : vector<18x18x128xf32> to vector<16x16x128xf32>
    %36 = vector.extract_strided_slice %28 {offsets = [2, 1, 0], sizes = [16, 16, 128], strides = [1, 1, 1]} : vector<18x18x128xf32> to vector<16x16x128xf32>
    %37 = vector.extract_strided_slice %28 {offsets = [2, 2, 0], sizes = [16, 16, 128], strides = [1, 1, 1]} : vector<18x18x128xf32> to vector<16x16x128xf32>
    %38 = tpu.concatenate %29, %30, %31, %32, %33, %34, %35, %36, %37 in 2 : vector<16x16x128xf32>, vector<16x16x128xf32>, vector<16x16x128xf32>, vector<16x16x128xf32>, vector<16x16x128xf32>, vector<16x16x128xf32>, vector<16x16x128xf32>, vector<16x16x128xf32>, vector<16x16x128xf32> -> vector<16x16x1152xf32>
    %39 = vector.shape_cast %38 : vector<16x16x1152xf32> to vector<256x1152xf32>
    %c0_26 = arith.constant 0 : index
    %c0_27 = arith.constant 0 : index
    %40 = vector.load %arg4[%c0_26, %c0_27] : memref<1152x128xf32, #tpu.memory_space<vmem>>, vector<1152x128xf32>
    %cst_28 = arith.constant dense<0.000000e+00> : vector<256x128xf32>
    %41 = tpu.matmul %39, %40, %cst_28 {dimension_numbers = #tpu.dot_dimension_numbers<[1], [0], [0], [1], [0, 0, 1, 1], [], []>} : vector<256x1152xf32>, vector<1152x128xf32>, vector<256x128xf32> -> vector<256x128xf32>
    %c0_29 = arith.constant 0 : index
    %c0_30 = arith.constant 0 : index
    %42 = vector.load %arg5[%c0_29, %c0_30] : memref<1x128xf32, #tpu.memory_space<vmem>>, vector<1x128xf32>
    %43 = vector.broadcast %42 : vector<1x128xf32> to vector<256x128xf32>
    %44 = arith.addf %41, %43 : vector<256x128xf32>
    %cst_31 = arith.constant 0.000000e+00 : f32
    %45 = vector.broadcast %cst_31 : f32 to vector<256x128xf32>
    %46 = arith.maximumf %44, %45 : vector<256x128xf32>
    %47 = vector.shape_cast %46 : vector<256x128xf32> to vector<16x16x128xf32>
    %c0_32 = arith.constant 0 : index
    %c0_33 = arith.constant 0 : index
    %c0_34 = arith.constant 0 : index
    %c0_35 = arith.constant 0 : index
    %48 = vector.load %arg6[%c0_32, %c0_33, %c0_34, %c0_35] : memref<1x16x16x128xf32, #tpu.memory_space<vmem>>, vector<1x16x16x128xf32>
    %49 = vector.shape_cast %48 : vector<1x16x16x128xf32> to vector<16x16x128xf32>
    %50 = vector.shape_cast %47 : vector<16x16x128xf32> to vector<1x16x16x128xf32>
    tpu.vector_store %arg6[%c0_32, %c0_33, %c0_34, %c0_35], %50 {strides = array<i32>} : memref<1x16x16x128xf32, #tpu.memory_space<vmem>>, vector<1x16x16x128xf32>,
    %c0_36 = arith.constant 0 : index
    %c0_37 = arith.constant 0 : index
    %c0_38 = arith.constant 0 : index
    %c0_39 = arith.constant 0 : index
    %51 = tpu.strided_load %arg6[%c0_36, %c0_37, %c0_38, %c0_39] {strides = array<i32: 1, 2, 2, 1>} : memref<1x16x16x128xf32, #tpu.memory_space<vmem>>, vector<1x8x8x128xf32>
    %c0_40 = arith.constant 0 : index
    %c0_41 = arith.constant 0 : index
    %c1_42 = arith.constant 1 : index
    %c0_43 = arith.constant 0 : index
    %52 = tpu.strided_load %arg6[%c0_40, %c0_41, %c1_42, %c0_43] {strides = array<i32: 1, 2, 2, 1>} : memref<1x16x16x128xf32, #tpu.memory_space<vmem>>, vector<1x8x8x128xf32>
    %c0_44 = arith.constant 0 : index
    %c1_45 = arith.constant 1 : index
    %c0_46 = arith.constant 0 : index
    %c0_47 = arith.constant 0 : index
    %53 = tpu.strided_load %arg6[%c0_44, %c1_45, %c0_46, %c0_47] {strides = array<i32: 1, 2, 2, 1>} : memref<1x16x16x128xf32, #tpu.memory_space<vmem>>, vector<1x8x8x128xf32>
    %c0_48 = arith.constant 0 : index
    %c1_49 = arith.constant 1 : index
    %c1_50 = arith.constant 1 : index
    %c0_51 = arith.constant 0 : index
    %54 = tpu.strided_load %arg6[%c0_48, %c1_49, %c1_50, %c0_51] {strides = array<i32: 1, 2, 2, 1>} : memref<1x16x16x128xf32, #tpu.memory_space<vmem>>, vector<1x8x8x128xf32>
    %55 = arith.maximumf %51, %52 : vector<1x8x8x128xf32>
    %56 = arith.maximumf %53, %54 : vector<1x8x8x128xf32>
    %57 = arith.maximumf %55, %56 : vector<1x8x8x128xf32>
    %c0_52 = arith.constant 0 : index
    %c0_53 = arith.constant 0 : index
    %c0_54 = arith.constant 0 : index
    %c0_55 = arith.constant 0 : index
    %58 = vector.load %arg7[%c0_52, %c0_53, %c0_54, %c0_55] : memref<1x8x8x128xf32, #tpu.memory_space<vmem>>, vector<1x8x8x128xf32>
    tpu.vector_store %arg7[%c0_52, %c0_53, %c0_54, %c0_55], %57 {strides = array<i32>} : memref<1x8x8x128xf32, #tpu.memory_space<vmem>>, vector<1x8x8x128xf32>,
    return
  }
  func.func @transform_0(%arg0: i32) -> (i32, i32, i32, i32) {
    %c0_i32 = arith.constant 0 : i32
    %c0_i32_0 = arith.constant 0 : i32
    %c0_i32_1 = arith.constant 0 : i32
    %c0_i32_2 = arith.constant 0 : i32
    return %arg0, %c0_i32, %c0_i32_0, %c0_i32_1 : i32, i32, i32, i32
  }
  func.func @transform_1(%arg0: i32) -> (i32, i32) {
    %c0_i32 = arith.constant 0 : i32
    %c0_i32_0 = arith.constant 0 : i32
    %c0_i32_1 = arith.constant 0 : i32
    return %c0_i32, %c0_i32_0 : i32, i32
  }
  func.func @transform_2(%arg0: i32) -> (i32, i32) {
    %c0_i32 = arith.constant 0 : i32
    %c0_i32_0 = arith.constant 0 : i32
    %c0_i32_1 = arith.constant 0 : i32
    return %c0_i32, %c0_i32_0 : i32, i32
  }
  func.func @transform_3(%arg0: i32) -> (i32, i32) {
    %c0_i32 = arith.constant 0 : i32
    %c0_i32_0 = arith.constant 0 : i32
    %c0_i32_1 = arith.constant 0 : i32
    return %c0_i32, %c0_i32_0 : i32, i32
  }
  func.func @transform_4(%arg0: i32) -> (i32, i32) {
    %c0_i32 = arith.constant 0 : i32
    %c0_i32_0 = arith.constant 0 : i32
    %c0_i32_1 = arith.constant 0 : i32
    return %c0_i32, %c0_i32_0 : i32, i32
  }
  func.func @transform_5(%arg0: i32) -> (i32, i32, i32, i32) {
    %c0_i32 = arith.constant 0 : i32
    %c0_i32_0 = arith.constant 0 : i32
    %c0_i32_1 = arith.constant 0 : i32
    %c0_i32_2 = arith.constant 0 : i32
    return %arg0, %c0_i32, %c0_i32_0, %c0_i32_1 : i32, i32, i32, i32
  }
  func.func @transform_6(%arg0: i32) -> (i32, i32, i32, i32) {
    %c0_i32 = arith.constant 0 : i32
    %c0_i32_0 = arith.constant 0 : i32
    %c0_i32_1 = arith.constant 0 : i32
    %c0_i32_2 = arith.constant 0 : i32
    return %arg0, %c0_i32, %c0_i32_0, %c0_i32_1 : i32, i32, i32, i32
  }
}

</mosaic_0001>

<llo_original>
// kernel: tpu_custom_call.1
$region0: #{tpu_custom_call.1}
  #allocation0 [shape = 'u32[]', space=smem, size = 0x4, offset = 0x4, fixed_abs, tag = 'smem constant byte address 0x4 - core index']
  #allocation1 [shape = 'u32[144,128]{1,0:T(1,128)}', space=vmem, size = 0x12000, scoped, tag = 'internal scratch']
  #allocation2 [shape = 'f32[20,20,128]{2,1,0:T(8,128)}', space=vmem, size = 0x3c000, scoped, tag = 'scratch operand']
  #allocation3 [shape = 'f32[18,18,128]{2,1,0:T(8,128)}', space=vmem, size = 0x36000, scoped, tag = 'scratch operand']
  %s0 = inlined_call_operand.hbm [shape: f32[2,16,16,128], index: 0, kind: input, shape index: {}]
  %s1 = inlined_call_operand.hbm [shape: f32[1152,128], index: 1, kind: input, shape index: {}]
  %s2 = inlined_call_operand.vmem [shape: f32[1,128], index: 2, kind: input, shape index: {}]
  %s3 = inlined_call_operand.hbm [shape: f32[1152,128], index: 3, kind: input, shape index: {}]
  %s4 = inlined_call_operand.vmem [shape: f32[1,128], index: 4, kind: input, shape index: {}]
  %s5 = inlined_call_operand.hbm [shape: f32[2,16,16,128], index: 5, kind: output, shape index: {0}]
  %s6 = inlined_call_operand.hbm [shape: f32[2,8,8,128], index: 6, kind: output, shape index: {1}]
  %7 = xla_tuple %s5, %s6
  %s8 = sld [smem:[#allocation0]]
  $region73: #{tpu_custom_call.1} parent=0
    _
  %s10 = ssub.s32 1, %s8
  %s11 = scalar_select 0, %s10, %s8
  $region1: #{tpu_custom_call.1} parent=0
    #allocation4 [shape = 'u8[262144]{0}', space=vmem, size = 0x40000, scoped, tag = 'input window, operand 0']
    #allocation5 [shape = 's32[2]{0}', space=sflag, size = 0x8, scoped, tag = 'scoped memory for tpu_custom_call.1']
    #allocation6 [shape = 's32[2]{0}', space=sflag, size = 0x8, scoped, tag = 'scoped memory for tpu_custom_call.1']
    #allocation7 [shape = 'u8[589824]{0}', space=vmem, size = 0x90000, scoped, tag = 'input window, operand 1, single buffered']
    #allocation8 [shape = 's32[1]{0}', space=sflag, size = 0x4, scoped, tag = 'scoped memory for tpu_custom_call.1']
    #allocation9 [shape = 'u8[589824]{0}', space=vmem, size = 0x90000, scoped, tag = 'input window, operand 3, single buffered']
    #allocation10 [shape = 'u8[262144]{0}', space=vmem, size = 0x40000, scoped, tag = 'output window, operand 0']
    #allocation11 [shape = 'u8[65536]{0}', space=vmem, size = 0x10000, scoped, tag = 'output window, operand 1']
    #allocation12 [shape = 's32[2]{0}', space=sflag, size = 0x8, scoped, tag = 'scoped memory for tpu_custom_call.1']
    %12 = vsyncpa [#allocation5], 0
    %s13 = scalar_lea.sflag [#allocation5], 1
    %14 = vsyncpa %s13, 0
    %15 = vsyncpa [#allocation8], 0
    %16 = vsyncpa [#allocation6], 0
    %s17 = scalar_lea.sflag [#allocation6], 1
    %18 = vsyncpa %s17, 0
    %19 = vsyncpa [#allocation12], 0
    %s20 = scalar_lea.sflag [#allocation12], 1
    %21 = vsyncpa %s20, 0
    loop: start=0, step=1, limit=4
    $region2: #{tpu_custom_call.1} parent=1 // loop_pre_header
      _
    $region3: #{tpu_custom_call.1} parent=1 // loop_header
      %s23 = sphi 0, %s27
      %p24 = scmp.ge.s32.totalorder %s23, 4
      %s33 = sphi 0, %s35
      %s36 = sphi 0, %s33
      %s37 = sphi 0, %s36
      %s53 = sphi 0, %s37
      %s57 = sphi 0, %s57
      %s59 = sphi 0, %s57
      %s60 = sphi 0, %s59
      %s74 = sphi 0, %s60
      %s78 = sphi 0, %s78
      %s80 = sphi 0, %s78
      %s81 = sphi 0, %s80
      %s95 = sphi 0, %s81
      %s99 = sphi 0, %s99
      %s101 = sphi 0, %s99
      %s102 = sphi 0, %s101
      %s116 = sphi 0, %s102
      %s120 = sphi 0, %s120
      %s122 = sphi 0, %s120
      %s123 = sphi 0, %s122
      %s137 = sphi 0, %s123
      %s143 = sphi 0, %s145
      %s146 = sphi 0, %s143
      %s147 = sphi 0, %s146
      %s163 = sphi 0, %s147
      %s169 = sphi 0, %s171
      %s172 = sphi 0, %s169
      %s173 = sphi 0, %s172
      %s189 = sphi 0, %s173
    $region4: #{tpu_custom_call.1} parent=1 // loop_header_branch
      %26 = sbr.rel (%p24) target = $region8
    $region5: #{tpu_custom_call.1} parent=1 // loop_body
      %s28 = ssub.s32 %s23, 1
      %s29 = ssub.s32 %s23, 2
      %s30 = sadd.s32 %s23, 1
      %s31 = ssub.s32 %s23, %s30
      %p32 = scmp.eq.s32.totalorder %s31, 0
      %s34 = sadd.s32 %s33, 1
      %s35 = scalar_select %p32, %s33, %s34
      %p38 = pneg %p32
      %p39 = scmp.eq.s32.totalorder %s23, 1
      %p40 = por %p38, %p39
      %p41 = scmp.ne.s32.totalorder %s33, %s36
      %p42 = scmp.eq.s32.totalorder %s23, 0
      %p43 = por %p41, %p42
      %p44 = scmp.ne.s32.totalorder %s33, %s36
      %p45 = scmp.eq.s32.totalorder %s28, 1
      %p46 = por %p44, %p45
      %p47 = scmp.ne.s32.totalorder %s36, %s37
      %p48 = scmp.eq.s32.totalorder %s28, 0
      %p49 = por %p47, %p48
      %p50 = scmp.ne.s32.totalorder %s36, %s37
      %p51 = scmp.eq.s32.totalorder %s29, 1
      %p52 = por %p50, %p51
      %p54 = scmp.ne.s32.totalorder %s37, %s53
      %p55 = scmp.eq.s32.totalorder %s29, 0
      %p56 = por %p54, %p55
      %s58 = sadd.s32 %s57, 1
      %p61 = scmp.eq.s32.totalorder %s23, 1
      %p62 = scmp.ne.s32.totalorder %s57, %s59
      %p63 = scmp.eq.s32.totalorder %s23, 0
      %p64 = por %p62, %p63
      %p65 = scmp.ne.s32.totalorder %s57, %s59
      %p66 = scmp.eq.s32.totalorder %s28, 1
      %p67 = por %p65, %p66
      %p68 = scmp.ne.s32.totalorder %s59, %s60
      %p69 = scmp.eq.s32.totalorder %s28, 0
      %p70 = por %p68, %p69
      %p71 = scmp.ne.s32.totalorder %s59, %s60
      %p72 = scmp.eq.s32.totalorder %s29, 1
      %p73 = por %p71, %p72
      %p75 = scmp.ne.s32.totalorder %s60, %s74
      %p76 = scmp.eq.s32.totalorder %s29, 0
      %p77 = por %p75, %p76
      %s79 = sadd.s32 %s78, 1
      %p82 = scmp.eq.s32.totalorder %s23, 1
      %p83 = scmp.ne.s32.totalorder %s78, %s80
      %p84 = scmp.eq.s32.totalorder %s23, 0
      %p85 = por %p83, %p84
      %p86 = scmp.ne.s32.totalorder %s78, %s80
      %p87 = scmp.eq.s32.totalorder %s28, 1
      %p88 = por %p86, %p87
      %p89 = scmp.ne.s32.totalorder %s80, %s81
      %p90 = scmp.eq.s32.totalorder %s28, 0
      %p91 = por %p89, %p90
      %p92 = scmp.ne.s32.totalorder %s80, %s81
      %p93 = scmp.eq.s32.totalorder %s29, 1
      %p94 = por %p92, %p93
      %p96 = scmp.ne.s32.totalorder %s81, %s95
      %p97 = scmp.eq.s32.totalorder %s29, 0
      %p98 = por %p96, %p97
      %s100 = sadd.s32 %s99, 1
      %p103 = scmp.eq.s32.totalorder %s23, 1
      %p104 = scmp.ne.s32.totalorder %s99, %s101
      %p105 = scmp.eq.s32.totalorder %s23, 0
      %p106 = por %p104, %p105
      %p107 = scmp.ne.s32.totalorder %s99, %s101
      %p108 = scmp.eq.s32.totalorder %s28, 1
      %p109 = por %p107, %p108
      %p110 = scmp.ne.s32.totalorder %s101, %s102
      %p111 = scmp.eq.s32.totalorder %s28, 0
      %p112 = por %p110, %p111
      %p113 = scmp.ne.s32.totalorder %s101, %s102
      %p114 = scmp.eq.s32.totalorder %s29, 1
      %p115 = por %p113, %p114
      %p117 = scmp.ne.s32.totalorder %s102, %s116
      %p118 = scmp.eq.s32.totalorder %s29, 0
      %p119 = por %p117, %p118
      %s121 = sadd.s32 %s120, 1
      %p124 = scmp.eq.s32.totalorder %s23, 1
      %p125 = scmp.ne.s32.totalorder %s120, %s122
      %p126 = scmp.eq.s32.totalorder %s23, 0
      %p127 = por %p125, %p126
      %p128 = scmp.ne.s32.totalorder %s120, %s122
      %p129 = scmp.eq.s32.totalorder %s28, 1
      %p130 = por %p128, %p129
      %p131 = scmp.ne.s32.totalorder %s122, %s123
      %p132 = scmp.eq.s32.totalorder %s28, 0
      %p133 = por %p131, %p132
      %p134 = scmp.ne.s32.totalorder %s122, %s123
      %p135 = scmp.eq.s32.totalorder %s29, 1
      %p136 = por %p134, %p135
      %p138 = scmp.ne.s32.totalorder %s123, %s137
      %p139 = scmp.eq.s32.totalorder %s29, 0
      %p140 = por %p138, %p139
      %s141 = ssub.s32 %s23, %s30
      %p142 = scmp.eq.s32.totalorder %s141, 0
      %s144 = sadd.s32 %s143, 1
      %s145 = scalar_select %p142, %s143, %s144
      %p148 = pneg %p142
      %p149 = scmp.eq.s32.totalorder %s23, 1
      %p150 = por %p148, %p149
      %p151 = scmp.ne.s32.totalorder %s143, %s146
      %p152 = scmp.eq.s32.totalorder %s23, 0
      %p153 = por %p151, %p152
      %p154 = scmp.ne.s32.totalorder %s143, %s146
      %p155 = scmp.eq.s32.totalorder %s28, 1
      %p156 = por %p154, %p155
      %p157 = scmp.ne.s32.totalorder %s146, %s147
      %p158 = scmp.eq.s32.totalorder %s28, 0
      %p159 = por %p157, %p158
      %p160 = scmp.ne.s32.totalorder %s146, %s147
      %p161 = scmp.eq.s32.totalorder %s29, 1
      %p162 = por %p160, %p161
      %p164 = scmp.ne.s32.totalorder %s147, %s163
      %p165 = scmp.eq.s32.totalorder %s29, 0
      %p166 = por %p164, %p165
      %s167 = ssub.s32 %s23, %s30
      %p168 = scmp.eq.s32.totalorder %s167, 0
      %s170 = sadd.s32 %s169, 1
      %s171 = scalar_select %p168, %s169, %s170
      %p174 = pneg %p168
      %p175 = scmp.eq.s32.totalorder %s23, 1
      %p176 = por %p174, %p175
      %p177 = scmp.ne.s32.totalorder %s169, %s172
      %p178 = scmp.eq.s32.totalorder %s23, 0
      %p179 = por %p177, %p178
      %p180 = scmp.ne.s32.totalorder %s169, %s172
      %p181 = scmp.eq.s32.totalorder %s28, 1
      %p182 = por %p180, %p181
      %p183 = scmp.ne.s32.totalorder %s172, %s173
      %p184 = scmp.eq.s32.totalorder %s28, 0
      %p185 = por %p183, %p184
      %p186 = scmp.ne.s32.totalorder %s172, %s173
      %p187 = scmp.eq.s32.totalorder %s29, 1
      %p188 = por %p186, %p187
      %p190 = scmp.ne.s32.totalorder %s173, %s189
      %p191 = scmp.eq.s32.totalorder %s29, 0
      %p192 = por %p190, %p191
      %p193 = scmp.le.s32.totalorder 1, %s23
      %p194 = scmp.lt.s32.totalorder %s23, 3
      %p195 = pnand %p193, %p194
      %p196 = pneg %p195
      // Predicated region
      $region9: #{tpu_custom_call.1} parent=5 // pred_check
        _
      $region10: #{tpu_custom_call.1} parent=5 // pred_check_branch
        %198 = sbr.rel (%p195) target = $region12
      $region11: #{tpu_custom_call.1} parent=5 // pred_region
        %s199 = ssub.s32 %s23, 1
        // Predicated region
        $region13: #{tpu_custom_call.1} parent=11 // pred_check
          %p200 = pneg %p70
        $region14: #{tpu_custom_call.1} parent=11 // pred_check_branch
          %202 = sbr.rel (%p200) target = $region16
        $region15: #{tpu_custom_call.1} parent=11 // pred_region
          %s204 = ssub.s32 18432, 18432
          %205 = vsyncadd [#allocation8], %s204
          %s206 = sshll.u32 [#allocation7], 4
          %s207 = int_to_ptr.vmem [resolvable:$true] %s206
          %212 = dma.hbm_to_vmem [thread:$0]  %s1, 18432, %s207, [#allocation8], 128, 128, 8
        $region16: #{tpu_custom_call.1} parent=11 // pred_fallthru
          _
        // Predicated region
        $region17: #{tpu_custom_call.1} parent=11 // pred_check
          %p213 = pneg %p91
        $region18: #{tpu_custom_call.1} parent=11 // pred_check_branch
          %215 = sbr.rel (%p213) target = $region20
        $region19: #{tpu_custom_call.1} parent=11 // pred_region
          _
        $region20: #{tpu_custom_call.1} parent=11 // pred_fallthru
          _
        // Predicated region
        $region21: #{tpu_custom_call.1} parent=11 // pred_check
          %p216 = pneg %p112
        $region22: #{tpu_custom_call.1} parent=11 // pred_check_branch
          %218 = sbr.rel (%p216) target = $region24
        $region23: #{tpu_custom_call.1} parent=11 // pred_region
          %s220 = ssub.s32 18432, 18432
          %221 = vsyncadd [#allocation8], %s220
          %s222 = sshll.u32 [#allocation9], 4
          %s223 = int_to_ptr.vmem [resolvable:$true] %s222
          %228 = dma.hbm_to_vmem [thread:$0]  %s3, 18432, %s223, [#allocation8], 128, 128, 8
        $region24: #{tpu_custom_call.1} parent=11 // pred_fallthru
          _
        // Predicated region
        $region25: #{tpu_custom_call.1} parent=11 // pred_check
          %p229 = pneg %p133
        $region26: #{tpu_custom_call.1} parent=11 // pred_check_branch
          %231 = sbr.rel (%p229) target = $region28
        $region27: #{tpu_custom_call.1} parent=11 // pred_region
          _
        $region28: #{tpu_custom_call.1} parent=11 // pred_fallthru
          _
      $region12: #{tpu_custom_call.1} parent=5 // pred_fallthru
        _
      %p232 = scmp.lt.s32.totalorder %s23, 2
      // Predicated region
      $region29: #{tpu_custom_call.1} parent=5 // pred_check
        %p233 = pneg %p232
      $region30: #{tpu_custom_call.1} parent=5 // pred_check_branch
        %235 = sbr.rel (%p233) target = $region32
      $region31: #{tpu_custom_call.1} parent=5 // pred_region
        // Predicated region
        $region33: #{tpu_custom_call.1} parent=31 // pred_check
          %p236 = pneg %p43
        $region34: #{tpu_custom_call.1} parent=31 // pred_check_branch
          %238 = sbr.rel (%p236) target = $region36
        $region35: #{tpu_custom_call.1} parent=31 // pred_region
          %s239 = sand.u32 %s33, 1
          %s240 = scalar_lea.sflag [#allocation5], %s239
          %s241 = sand.u32 %s33, 1
          %s242 = smul.addr %s241, 256
          %s243 = scalar_lea.vmem [#allocation4], %s242
          %s245 = ssub.s32 4096, 4096
          %246 = vsyncadd %s240, %s245
          %s247 = smul.addr %s23, 32
          %s248 = smul.addr %s247, 128
          %s249 = scalar_lea.hbm %s0, %s248
          %s250 = sshll.u32 %s243, 4
          %s251 = int_to_ptr.vmem [resolvable:$true] %s250
          %256 = dma.hbm_to_vmem [thread:$0]  %s249, 4096, %s251, %s240, 128, 128, 8
        $region36: #{tpu_custom_call.1} parent=31 // pred_fallthru
          _
      $region32: #{tpu_custom_call.1} parent=5 // pred_fallthru
        _
      %p257 = scmp.le.s32.totalorder 1, %s23
      %p258 = scmp.lt.s32.totalorder %s23, 3
      %p259 = pnand %p257, %p258
      %p260 = pneg %p259
      // Predicated region
      $region37: #{tpu_custom_call.1} parent=5 // pred_check
        _
      $region38: #{tpu_custom_call.1} parent=5 // pred_check_branch
        %262 = sbr.rel (%p259) target = $region40
      $region39: #{tpu_custom_call.1} parent=5 // pred_region
        %s263 = ssub.s32 %s23, 1
        %s264 = sand.u32 %s36, 1
        %s265 = scalar_lea.sflag [#allocation5], %s264
        %s266 = sand.u32 %s36, 1
        %s267 = smul.addr %s266, 256
        %s268 = scalar_lea.vmem [#allocation4], %s267
        // Predicated region
        $region41: #{tpu_custom_call.1} parent=39 // pred_check
          %p269 = pneg %p49
        $region42: #{tpu_custom_call.1} parent=39 // pred_check_branch
          %271 = sbr.rel (%p269) target = $region44
        $region43: #{tpu_custom_call.1} parent=39 // pred_region
          %272 = dma.done %s265, 4096
        $region44: #{tpu_custom_call.1} parent=39 // pred_fallthru
          _
        // Predicated region
        $region45: #{tpu_custom_call.1} parent=39 // pred_check
          %p273 = pneg %p70
        $region46: #{tpu_custom_call.1} parent=39 // pred_check_branch
          %275 = sbr.rel (%p273) target = $region48
        $region47: #{tpu_custom_call.1} parent=39 // pred_region
          %276 = dma.done [#allocation8], 18432
        $region48: #{tpu_custom_call.1} parent=39 // pred_fallthru
          _
        // Predicated region
        $region49: #{tpu_custom_call.1} parent=39 // pred_check
          %p277 = pneg %p112
        $region50: #{tpu_custom_call.1} parent=39 // pred_check_branch
          %279 = sbr.rel (%p277) target = $region52
        $region51: #{tpu_custom_call.1} parent=39 // pred_region
          %280 = dma.done [#allocation8], 18432
        $region52: #{tpu_custom_call.1} parent=39 // pred_fallthru
          _
        %s281 = sand.u32 %s36, 1
        %s282 = scalar_lea.sflag [#allocation5], %s281
        %s283 = sand.u32 %s36, 1
        %s284 = smul.addr %s283, 256
        %s285 = scalar_lea.vmem [#allocation4], %s284
        %p286 = pneg %p49
        %p287 = pneg %p46
        %p288 = pneg %p70
        %p289 = pneg %p67
        %p290 = pneg %p91
        %p291 = pneg %p88
        %p292 = pneg %p112
        %p293 = pneg %p109
        %p294 = pneg %p133
        %p295 = pneg %p130
        %p296 = pneg %p159
        %p297 = pneg %p156
        %s298 = sand.u32 %s146, 1
        %s299 = scalar_lea.sflag [#allocation6], %s298
        %s300 = sand.u32 %s146, 1
        %s301 = smul.addr %s300, 256
        %s302 = scalar_lea.vmem [#allocation10], %s301
        %p303 = pneg %p185
        %p304 = pneg %p182
        %s305 = sand.u32 %s172, 1
        %s306 = scalar_lea.sflag [#allocation12], %s305
        %s307 = sand.u32 %s172, 1
        %s308 = smul.addr %s307, 64
        %s309 = scalar_lea.vmem [#allocation11], %s308
        %310 = vst [vmem:[#allocation2] sm:$0xff] 0.0
        %311 = vst [vmem:[#allocation2 + $0x8] sm:$0xff] 0.0
        %312 = vst [vmem:[#allocation2 + $0x10] sm:$0xf] 0.0
        %313 = vst [vmem:[#allocation2 + $0x18] sm:$0xff] 0.0
        %314 = vst [vmem:[#allocation2 + $0x20] sm:$0xff] 0.0
        %315 = vst [vmem:[#allocation2 + $0x28] sm:$0xf] 0.0
        %316 = vst [vmem:[#allocation2 + $0x30] sm:$0xff] 0.0
        %317 = vst [vmem:[#allocation2 + $0x38] sm:$0xff] 0.0
        %318 = vst [vmem:[#allocation2 + $0x40] sm:$0xf] 0.0
        %319 = vst [vmem:[#allocation2 + $0x48] sm:$0xff] 0.0
        %320 = vst [vmem:[#allocation2 + $0x50] sm:$0xff] 0.0
        %321 = vst [vmem:[#allocation2 + $0x58] sm:$0xf] 0.0
        %322 = vst [vmem:[#allocation2 + $0x60] sm:$0xff] 0.0
        %323 = vst [vmem:[#allocation2 + $0x68] sm:$0xff] 0.0
        %324 = vst [vmem:[#allocation2 + $0x70] sm:$0xf] 0.0
        %325 = vst [vmem:[#allocation2 + $0x78] sm:$0xff] 0.0
        %326 = vst [vmem:[#allocation2 + $0x80] sm:$0xff] 0.0
        %327 = vst [vmem:[#allocation2 + $0x88] sm:$0xf] 0.0
        %328 = vst [vmem:[#allocation2 + $0x90] sm:$0xff] 0.0
        %329 = vst [vmem:[#allocation2 + $0x98] sm:$0xff] 0.0
        %330 = vst [vmem:[#allocation2 + $0xa0] sm:$0xf] 0.0
        %331 = vst [vmem:[#allocation2 + $0xa8] sm:$0xff] 0.0
        %332 = vst [vmem:[#allocation2 + $0xb0] sm:$0xff] 0.0
        %333 = vst [vmem:[#allocation2 + $0xb8] sm:$0xf] 0.0
        %334 = vst [vmem:[#allocation2 + $0xc0] sm:$0xff] 0.0
        %335 = vst [vmem:[#allocation2 + $0xc8] sm:$0xff] 0.0
        %336 = vst [vmem:[#allocation2 + $0xd0] sm:$0xf] 0.0
        %337 = vst [vmem:[#allocation2 + $0xd8] sm:$0xff] 0.0
        %338 = vst [vmem:[#allocation2 + $0xe0] sm:$0xff] 0.0
        %339 = vst [vmem:[#allocation2 + $0xe8] sm:$0xf] 0.0
        %340 = vst [vmem:[#allocation2 + $0xf0] sm:$0xff] 0.0
        %341 = vst [vmem:[#allocation2 + $0xf8] sm:$0xff] 0.0
        %342 = vst [vmem:[#allocation2 + $0x100] sm:$0xf] 0.0
        %343 = vst [vmem:[#allocation2 + $0x108] sm:$0xff] 0.0
        %344 = vst [vmem:[#allocation2 + $0x110] sm:$0xff] 0.0
        %345 = vst [vmem:[#allocation2 + $0x118] sm:$0xf] 0.0
        %346 = vst [vmem:[#allocation2 + $0x120] sm:$0xff] 0.0
        %347 = vst [vmem:[#allocation2 + $0x128] sm:$0xff] 0.0
        %348 = vst [vmem:[#allocation2 + $0x130] sm:$0xf] 0.0
        %349 = vst [vmem:[#allocation2 + $0x138] sm:$0xff] 0.0
        %350 = vst [vmem:[#allocation2 + $0x140] sm:$0xff] 0.0
        %351 = vst [vmem:[#allocation2 + $0x148] sm:$0xf] 0.0
        %352 = vst [vmem:[#allocation2 + $0x150] sm:$0xff] 0.0
        %353 = vst [vmem:[#allocation2 + $0x158] sm:$0xff] 0.0
        %354 = vst [vmem:[#allocation2 + $0x160] sm:$0xf] 0.0
        %355 = vst [vmem:[#allocation2 + $0x168] sm:$0xff] 0.0
        %356 = vst [vmem:[#allocation2 + $0x170] sm:$0xff] 0.0
        %357 = vst [vmem:[#allocation2 + $0x178] sm:$0xf] 0.0
        %358 = vst [vmem:[#allocation2 + $0x180] sm:$0xff] 0.0
        %359 = vst [vmem:[#allocation2 + $0x188] sm:$0xff] 0.0
        %360 = vst [vmem:[#allocation2 + $0x190] sm:$0xf] 0.0
        %361 = vst [vmem:[#allocation2 + $0x198] sm:$0xff] 0.0
        %362 = vst [vmem:[#allocation2 + $0x1a0] sm:$0xff] 0.0
        %363 = vst [vmem:[#allocation2 + $0x1a8] sm:$0xf] 0.0
        %364 = vst [vmem:[#allocation2 + $0x1b0] sm:$0xff] 0.0
        %365 = vst [vmem:[#allocation2 + $0x1b8] sm:$0xff] 0.0
        %366 = vst [vmem:[#allocation2 + $0x1c0] sm:$0xf] 0.0
        %367 = vst [vmem:[#allocation2 + $0x1c8] sm:$0xff] 0.0
        %368 = vst [vmem:[#allocation2 + $0x1d0] sm:$0xff] 0.0
        %369 = vst [vmem:[#allocation2 + $0x1d8] sm:$0xf] 0.0
        %v370 = vld [vmem:[%s268] sm:$0xff]
        %v371 = vld [vmem:[%s268 + $0x8] sm:$0xff]
        %v372 = vld [vmem:[%s268 + $0x10] sm:$0xff]
        %v373 = vld [vmem:[%s268 + $0x18] sm:$0xff]
        %v374 = vld [vmem:[%s268 + $0x20] sm:$0xff]
        %v375 = vld [vmem:[%s268 + $0x28] sm:$0xff]
        %v376 = vld [vmem:[%s268 + $0x30] sm:$0xff]
        %v377 = vld [vmem:[%s268 + $0x38] sm:$0xff]
        %v378 = vld [vmem:[%s268 + $0x40] sm:$0xff]
        %v379 = vld [vmem:[%s268 + $0x48] sm:$0xff]
        %v380 = vld [vmem:[%s268 + $0x50] sm:$0xff]
        %v381 = vld [vmem:[%s268 + $0x58] sm:$0xff]
        %v382 = vld [vmem:[%s268 + $0x60] sm:$0xff]
        %v383 = vld [vmem:[%s268 + $0x68] sm:$0xff]
        %v384 = vld [vmem:[%s268 + $0x70] sm:$0xff]
        %v385 = vld [vmem:[%s268 + $0x78] sm:$0xff]
        %v386 = vld [vmem:[%s268 + $0x80] sm:$0xff]
        %v387 = vld [vmem:[%s268 + $0x88] sm:$0xff]
        %v388 = vld [vmem:[%s268 + $0x90] sm:$0xff]
        %v389 = vld [vmem:[%s268 + $0x98] sm:$0xff]
        %v390 = vld [vmem:[%s268 + $0xa0] sm:$0xff]
        %v391 = vld [vmem:[%s268 + $0xa8] sm:$0xff]
        %v392 = vld [vmem:[%s268 + $0xb0] sm:$0xff]
        %v393 = vld [vmem:[%s268 + $0xb8] sm:$0xff]
        %v394 = vld [vmem:[%s268 + $0xc0] sm:$0xff]
        %v395 = vld [vmem:[%s268 + $0xc8] sm:$0xff]
        %v396 = vld [vmem:[%s268 + $0xd0] sm:$0xff]
        %v397 = vld [vmem:[%s268 + $0xd8] sm:$0xff]
        %v398 = vld [vmem:[%s268 + $0xe0] sm:$0xff]
        %v399 = vld [vmem:[%s268 + $0xe8] sm:$0xff]
        %v400 = vld [vmem:[%s268 + $0xf0] sm:$0xff]
        %v401 = vld [vmem:[%s268 + $0xf8] sm:$0xff]
        %s402 = scalar_lea.vmem [#allocation2], 48
        %403 = vst [vmem:[%s402 + $0x2] sm:$0xff] %v370
        %404 = vst [vmem:[%s402 + $0xa] sm:$0xff] %v371
        %405 = vst [vmem:[%s402 + $0x1a] sm:$0xff] %v372
        %406 = vst [vmem:[%s402 + $0x22] sm:$0xff] %v373
        %407 = vst [vmem:[%s402 + $0x32] sm:$0xff] %v374
        %408 = vst [vmem:[%s402 + $0x3a] sm:$0xff] %v375
        %409 = vst [vmem:[%s402 + $0x4a] sm:$0xff] %v376
        %410 = vst [vmem:[%s402 + $0x52] sm:$0xff] %v377
        %411 = vst [vmem:[%s402 + $0x62] sm:$0xff] %v378
        %412 = vst [vmem:[%s402 + $0x6a] sm:$0xff] %v379
        %413 = vst [vmem:[%s402 + $0x7a] sm:$0xff] %v380
        %414 = vst [vmem:[%s402 + $0x82] sm:$0xff] %v381
        %415 = vst [vmem:[%s402 + $0x92] sm:$0xff] %v382
        %416 = vst [vmem:[%s402 + $0x9a] sm:$0xff] %v383
        %417 = vst [vmem:[%s402 + $0xaa] sm:$0xff] %v384
        %418 = vst [vmem:[%s402 + $0xb2] sm:$0xff] %v385
        %419 = vst [vmem:[%s402 + $0xc2] sm:$0xff] %v386
        %420 = vst [vmem:[%s402 + $0xca] sm:$0xff] %v387
        %421 = vst [vmem:[%s402 + $0xda] sm:$0xff] %v388
        %422 = vst [vmem:[%s402 + $0xe2] sm:$0xff] %v389
        %423 = vst [vmem:[%s402 + $0xf2] sm:$0xff] %v390
        %424 = vst [vmem:[%s402 + $0xfa] sm:$0xff] %v391
        %425 = vst [vmem:[%s402 + $0x10a] sm:$0xff] %v392
        %426 = vst [vmem:[%s402 + $0x112] sm:$0xff] %v393
        %427 = vst [vmem:[%s402 + $0x122] sm:$0xff] %v394
        %428 = vst [vmem:[%s402 + $0x12a] sm:$0xff] %v395
        %429 = vst [vmem:[%s402 + $0x13a] sm:$0xff] %v396
        %430 = vst [vmem:[%s402 + $0x142] sm:$0xff] %v397
        %431 = vst [vmem:[%s402 + $0x152] sm:$0xff] %v398
        %432 = vst [vmem:[%s402 + $0x15a] sm:$0xff] %v399
        %433 = vst [vmem:[%s402 + $0x16a] sm:$0xff] %v400
        %434 = vst [vmem:[%s402 + $0x172] sm:$0xff] %v401
        %v435 = vld [vmem:[#allocation2] sm:$0xff]
        %v436 = vld [vmem:[#allocation2 + $0x8] sm:$0xff]
        %v437 = vld [vmem:[#allocation2 + $0x10] sm:$0xf]
        %v438 = vld [vmem:[#allocation2 + $0x18] sm:$0xff]
        %v439 = vld [vmem:[#allocation2 + $0x20] sm:$0xff]
        %v440 = vld [vmem:[#allocation2 + $0x28] sm:$0xf]
        %v441 = vld [vmem:[#allocation2 + $0x30] sm:$0xff]
        %v442 = vld [vmem:[#allocation2 + $0x38] sm:$0xff]
        %v443 = vld [vmem:[#allocation2 + $0x40] sm:$0xf]
        %v444 = vld [vmem:[#allocation2 + $0x48] sm:$0xff]
        %v445 = vld [vmem:[#allocation2 + $0x50] sm:$0xff]
        %v446 = vld [vmem:[#allocation2 + $0x58] sm:$0xf]
        %v447 = vld [vmem:[#allocation2 + $0x60] sm:$0xff]
        %v448 = vld [vmem:[#allocation2 + $0x68] sm:$0xff]
        %v449 = vld [vmem:[#allocation2 + $0x70] sm:$0xf]
        %v450 = vld [vmem:[#allocation2 + $0x78] sm:$0xff]
        %v451 = vld [vmem:[#allocation2 + $0x80] sm:$0xff]
        %v452 = vld [vmem:[#allocation2 + $0x88] sm:$0xf]
        %v453 = vld [vmem:[#allocation2 + $0x90] sm:$0xff]
        %v454 = vld [vmem:[#allocation2 + $0x98] sm:$0xff]
        %v455 = vld [vmem:[#allocation2 + $0xa0] sm:$0xf]
        %v456 = vld [vmem:[#allocation2 + $0xa8] sm:$0xff]
        %v457 = vld [vmem:[#allocation2 + $0xb0] sm:$0xff]
        %v458 = vld [vmem:[#allocation2 + $0xb8] sm:$0xf]
        %v459 = vld [vmem:[#allocation2 + $0xc0] sm:$0xff]
        %v460 = vld [vmem:[#allocation2 + $0xc8] sm:$0xff]
        %v461 = vld [vmem:[#allocation2 + $0xd0] sm:$0xf]
        %v462 = vld [vmem:[#allocation2 + $0xd8] sm:$0xff]
        %v463 = vld [vmem:[#allocation2 + $0xe0] sm:$0xff]
        %v464 = vld [vmem:[#allocation2 + $0xe8] sm:$0xf]
        %v465 = vld [vmem:[#allocation2 + $0xf0] sm:$0xff]
        %v466 = vld [vmem:[#allocation2 + $0xf8] sm:$0xff]
        %v467 = vld [vmem:[#allocation2 + $0x100] sm:$0xf]
        %v468 = vld [vmem:[#allocation2 + $0x108] sm:$0xff]
        %v469 = vld [vmem:[#allocation2 + $0x110] sm:$0xff]
        %v470 = vld [vmem:[#allocation2 + $0x118] sm:$0xf]
        %v471 = vld [vmem:[#allocation2 + $0x120] sm:$0xff]
        %v472 = vld [vmem:[#allocation2 + $0x128] sm:$0xff]
        %v473 = vld [vmem:[#allocation2 + $0x130] sm:$0xf]
        %v474 = vld [vmem:[#allocation2 + $0x138] sm:$0xff]
        %v475 = vld [vmem:[#allocation2 + $0x140] sm:$0xff]
        %v476 = vld [vmem:[#allocation2 + $0x148] sm:$0xf]
        %v477 = vld [vmem:[#allocation2 + $0x150] sm:$0xff]
        %v478 = vld [vmem:[#allocation2 + $0x158] sm:$0xff]
        %v479 = vld [vmem:[#allocation2 + $0x160] sm:$0xf]
        %v480 = vld [vmem:[#allocation2 + $0x168] sm:$0xff]
        %v481 = vld [vmem:[#allocation2 + $0x170] sm:$0xff]
        %v482 = vld [vmem:[#allocation2 + $0x178] sm:$0xf]
        %v483 = vld [vmem:[#allocation2 + $0x180] sm:$0xff]
        %v484 = vld [vmem:[#allocation2 + $0x188] sm:$0xff]
        %v485 = vld [vmem:[#allocation2 + $0x190] sm:$0xf]
        %v486 = vld [vmem:[#allocation2 + $0x198] sm:$0xff]
        %v487 = vld [vmem:[#allocation2 + $0x1a0] sm:$0xff]
        %v488 = vld [vmem:[#allocation2 + $0x1a8] sm:$0xf]
        %v489 = vld [vmem:[#allocation2 + $0x1b0] sm:$0xff]
        %v490 = vld [vmem:[#allocation2 + $0x1b8] sm:$0xff]
        %v491 = vld [vmem:[#allocation2 + $0x1c0] sm:$0xf]
        %v492 = vld [vmem:[#allocation2 + $0x1c8] sm:$0xff]
        %v493 = vld [vmem:[#allocation2 + $0x1d0] sm:$0xff]
        %v494 = vld [vmem:[#allocation2 + $0x1d8] sm:$0xf]
        %vm543 = vcmask 1045504
        %v544 = vrot.slane %v435, 2
        %v545 = vrot.slane %v436, 2
        %v546 = vsel %vm543, %v544, %v545
        %v547 = vrot.slane %v437, 2
        %v548 = vsel %vm543, %v545, %v547
        %v549 = vrot.slane %v438, 2
        %v550 = vrot.slane %v439, 2
        %v551 = vsel %vm543, %v549, %v550
        %v552 = vrot.slane %v440, 2
        %v553 = vsel %vm543, %v550, %v552
        %v554 = vrot.slane %v441, 2
        %v555 = vrot.slane %v442, 2
        %v556 = vsel %vm543, %v554, %v555
        %v557 = vrot.slane %v443, 2
        %v558 = vsel %vm543, %v555, %v557
        %v559 = vrot.slane %v444, 2
        %v560 = vrot.slane %v445, 2
        %v561 = vsel %vm543, %v559, %v560
        %v562 = vrot.slane %v446, 2
        %v563 = vsel %vm543, %v560, %v562
        %v564 = vrot.slane %v447, 2
        %v565 = vrot.slane %v448, 2
        %v566 = vsel %vm543, %v564, %v565
        %v567 = vrot.slane %v449, 2
        %v568 = vsel %vm543, %v565, %v567
        %v569 = vrot.slane %v450, 2
        %v570 = vrot.slane %v451, 2
        %v571 = vsel %vm543, %v569, %v570
        %v572 = vrot.slane %v452, 2
        %v573 = vsel %vm543, %v570, %v572
        %v574 = vrot.slane %v453, 2
        %v575 = vrot.slane %v454, 2
        %v576 = vsel %vm543, %v574, %v575
        %v577 = vrot.slane %v455, 2
        %v578 = vsel %vm543, %v575, %v577
        %v579 = vrot.slane %v456, 2
        %v580 = vrot.slane %v457, 2
        %v581 = vsel %vm543, %v579, %v580
        %v582 = vrot.slane %v458, 2
        %v583 = vsel %vm543, %v580, %v582
        %v584 = vrot.slane %v459, 2
        %v585 = vrot.slane %v460, 2
        %v586 = vsel %vm543, %v584, %v585
        %v587 = vrot.slane %v461, 2
        %v588 = vsel %vm543, %v585, %v587
        %v589 = vrot.slane %v462, 2
        %v590 = vrot.slane %v463, 2
        %v591 = vsel %vm543, %v589, %v590
        %v592 = vrot.slane %v464, 2
        %v593 = vsel %vm543, %v590, %v592
        %v594 = vrot.slane %v465, 2
        %v595 = vrot.slane %v466, 2
        %v596 = vsel %vm543, %v594, %v595
        %v597 = vrot.slane %v467, 2
        %v598 = vsel %vm543, %v595, %v597
        %v599 = vrot.slane %v468, 2
        %v600 = vrot.slane %v469, 2
        %v601 = vsel %vm543, %v599, %v600
        %v602 = vrot.slane %v470, 2
        %v603 = vsel %vm543, %v600, %v602
        %v604 = vrot.slane %v471, 2
        %v605 = vrot.slane %v472, 2
        %v606 = vsel %vm543, %v604, %v605
        %v607 = vrot.slane %v473, 2
        %v608 = vsel %vm543, %v605, %v607
        %v609 = vrot.slane %v474, 2
        %v610 = vrot.slane %v475, 2
        %v611 = vsel %vm543, %v609, %v610
        %v612 = vrot.slane %v476, 2
        %v613 = vsel %vm543, %v610, %v612
        %v614 = vrot.slane %v477, 2
        %v615 = vrot.slane %v478, 2
        %v616 = vsel %vm543, %v614, %v615
        %v617 = vrot.slane %v479, 2
        %v618 = vsel %vm543, %v615, %v617
        %v619 = vrot.slane %v480, 2
        %v620 = vrot.slane %v481, 2
        %v621 = vsel %vm543, %v619, %v620
        %v622 = vrot.slane %v482, 2
        %v623 = vsel %vm543, %v620, %v622
        %vm656 = vcmask 1043456
        %v657 = vrot.slane %v435, 4
        %v658 = vrot.slane %v436, 4
        %v659 = vsel %vm656, %v657, %v658
        %v660 = vrot.slane %v437, 4
        %v661 = vsel %vm656, %v658, %v660
        %v662 = vrot.slane %v438, 4
        %v663 = vrot.slane %v439, 4
        %v664 = vsel %vm656, %v662, %v663
        %v665 = vrot.slane %v440, 4
        %v666 = vsel %vm656, %v663, %v665
        %v667 = vrot.slane %v441, 4
        %v668 = vrot.slane %v442, 4
        %v669 = vsel %vm656, %v667, %v668
        %v670 = vrot.slane %v443, 4
        %v671 = vsel %vm656, %v668, %v670
        %v672 = vrot.slane %v444, 4
        %v673 = vrot.slane %v445, 4
        %v674 = vsel %vm656, %v672, %v673
        %v675 = vrot.slane %v446, 4
        %v676 = vsel %vm656, %v673, %v675
        %v677 = vrot.slane %v447, 4
        %v678 = vrot.slane %v448, 4
        %v679 = vsel %vm656, %v677, %v678
        %v680 = vrot.slane %v449, 4
        %v681 = vsel %vm656, %v678, %v680
        %v682 = vrot.slane %v450, 4
        %v683 = vrot.slane %v451, 4
        %v684 = vsel %vm656, %v682, %v683
        %v685 = vrot.slane %v452, 4
        %v686 = vsel %vm656, %v683, %v685
        %v687 = vrot.slane %v453, 4
        %v688 = vrot.slane %v454, 4
        %v689 = vsel %vm656, %v687, %v688
        %v690 = vrot.slane %v455, 4
        %v691 = vsel %vm656, %v688, %v690
        %v692 = vrot.slane %v456, 4
        %v693 = vrot.slane %v457, 4
        %v694 = vsel %vm656, %v692, %v693
        %v695 = vrot.slane %v458, 4
        %v696 = vsel %vm656, %v693, %v695
        %v697 = vrot.slane %v459, 4
        %v698 = vrot.slane %v460, 4
        %v699 = vsel %vm656, %v697, %v698
        %v700 = vrot.slane %v461, 4
        %v701 = vsel %vm656, %v698, %v700
        %v702 = vrot.slane %v462, 4
        %v703 = vrot.slane %v463, 4
        %v704 = vsel %vm656, %v702, %v703
        %v705 = vrot.slane %v464, 4
        %v706 = vsel %vm656, %v703, %v705
        %v707 = vrot.slane %v465, 4
        %v708 = vrot.slane %v466, 4
        %v709 = vsel %vm656, %v707, %v708
        %v710 = vrot.slane %v467, 4
        %v711 = vsel %vm656, %v708, %v710
        %v712 = vrot.slane %v468, 4
        %v713 = vrot.slane %v469, 4
        %v714 = vsel %vm656, %v712, %v713
        %v715 = vrot.slane %v470, 4
        %v716 = vsel %vm656, %v713, %v715
        %v717 = vrot.slane %v471, 4
        %v718 = vrot.slane %v472, 4
        %v719 = vsel %vm656, %v717, %v718
        %v720 = vrot.slane %v473, 4
        %v721 = vsel %vm656, %v718, %v720
        %v722 = vrot.slane %v474, 4
        %v723 = vrot.slane %v475, 4
        %v724 = vsel %vm656, %v722, %v723
        %v725 = vrot.slane %v476, 4
        %v726 = vsel %vm656, %v723, %v725
        %v727 = vrot.slane %v477, 4
        %v728 = vrot.slane %v478, 4
        %v729 = vsel %vm656, %v727, %v728
        %v730 = vrot.slane %v479, 4
        %v731 = vsel %vm656, %v728, %v730
        %v732 = vrot.slane %v480, 4
        %v733 = vrot.slane %v481, 4
        %v734 = vsel %vm656, %v732, %v733
        %v735 = vrot.slane %v482, 4
        %v736 = vsel %vm656, %v733, %v735
        %v775 = vrot.slane %v483, 2
        %v776 = vrot.slane %v484, 2
        %v777 = vsel %vm543, %v775, %v776
        %v778 = vrot.slane %v485, 2
        %v779 = vsel %vm543, %v776, %v778
        %v780 = vrot.slane %v486, 2
        %v781 = vrot.slane %v487, 2
        %v782 = vsel %vm543, %v780, %v781
        %v783 = vrot.slane %v488, 2
        %v784 = vsel %vm543, %v781, %v783
        %v789 = vrot.slane %v483, 4
        %v790 = vrot.slane %v484, 4
        %v791 = vsel %vm656, %v789, %v790
        %v792 = vrot.slane %v485, 4
        %v793 = vsel %vm656, %v790, %v792
        %v794 = vrot.slane %v486, 4
        %v795 = vrot.slane %v487, 4
        %v796 = vsel %vm656, %v794, %v795
        %v797 = vrot.slane %v488, 4
        %v798 = vsel %vm656, %v795, %v797
        %v809 = vrot.slane %v489, 2
        %v810 = vrot.slane %v490, 2
        %v811 = vsel %vm543, %v809, %v810
        %v812 = vrot.slane %v491, 2
        %v813 = vsel %vm543, %v810, %v812
        %v814 = vrot.slane %v492, 2
        %v815 = vrot.slane %v493, 2
        %v816 = vsel %vm543, %v814, %v815
        %v817 = vrot.slane %v494, 2
        %v818 = vsel %vm543, %v815, %v817
        %v823 = vrot.slane %v489, 4
        %v824 = vrot.slane %v490, 4
        %v825 = vsel %vm656, %v823, %v824
        %v826 = vrot.slane %v491, 4
        %v827 = vsel %vm656, %v824, %v826
        %v828 = vrot.slane %v492, 4
        %v829 = vrot.slane %v493, 4
        %v830 = vsel %vm656, %v828, %v829
        %v831 = vrot.slane %v494, 4
        %v832 = vsel %vm656, %v829, %v831
        %v837 = vld [vmem:[#allocation7] sm:$0xff]
        %v838 = vld [vmem:[#allocation7 + $0x8] sm:$0xff]
        %v839 = vld [vmem:[#allocation7 + $0x10] sm:$0xff]
        %v840 = vld [vmem:[#allocation7 + $0x18] sm:$0xff]
        %v841 = vld [vmem:[#allocation7 + $0x20] sm:$0xff]
        %v842 = vld [vmem:[#allocation7 + $0x28] sm:$0xff]
        %v843 = vld [vmem:[#allocation7 + $0x30] sm:$0xff]
        %v844 = vld [vmem:[#allocation7 + $0x38] sm:$0xff]
        %v845 = vld [vmem:[#allocation7 + $0x40] sm:$0xff]
        %v846 = vld [vmem:[#allocation7 + $0x48] sm:$0xff]
        %v847 = vld [vmem:[#allocation7 + $0x50] sm:$0xff]
        %v848 = vld [vmem:[#allocation7 + $0x58] sm:$0xff]
        %v849 = vld [vmem:[#allocation7 + $0x60] sm:$0xff]
        %v850 = vld [vmem:[#allocation7 + $0x68] sm:$0xff]
        %v851 = vld [vmem:[#allocation7 + $0x70] sm:$0xff]
        %v852 = vld [vmem:[#allocation7 + $0x78] sm:$0xff]
        %v853 = vld [vmem:[#allocation7 + $0x80] sm:$0xff]
        %v854 = vld [vmem:[#allocation7 + $0x88] sm:$0xff]
        %v855 = vld [vmem:[#allocation7 + $0x90] sm:$0xff]
        %v856 = vld [vmem:[#allocation7 + $0x98] sm:$0xff]
        %v857 = vld [vmem:[#allocation7 + $0xa0] sm:$0xff]
        %v858 = vld [vmem:[#allocation7 + $0xa8] sm:$0xff]
        %v859 = vld [vmem:[#allocation7 + $0xb0] sm:$0xff]
        %v860 = vld [vmem:[#allocation7 + $0xb8] sm:$0xff]
        %v861 = vld [vmem:[#allocation7 + $0xc0] sm:$0xff]
        %v862 = vld [vmem:[#allocation7 + $0xc8] sm:$0xff]
        %v863 = vld [vmem:[#allocation7 + $0xd0] sm:$0xff]
        %v864 = vld [vmem:[#allocation7 + $0xd8] sm:$0xff]
        %v865 = vld [vmem:[#allocation7 + $0xe0] sm:$0xff]
        %v866 = vld [vmem:[#allocation7 + $0xe8] sm:$0xff]
        %v867 = vld [vmem:[#allocation7 + $0xf0] sm:$0xff]
        %v868 = vld [vmem:[#allocation7 + $0xf8] sm:$0xff]
        %v869 = vld [vmem:[#allocation7 + $0x100] sm:$0xff]
        %v870 = vld [vmem:[#allocation7 + $0x108] sm:$0xff]
        %v871 = vld [vmem:[#allocation7 + $0x110] sm:$0xff]
        %v872 = vld [vmem:[#allocation7 + $0x118] sm:$0xff]
        %v873 = vld [vmem:[#allocation7 + $0x120] sm:$0xff]
        %v874 = vld [vmem:[#allocation7 + $0x128] sm:$0xff]
        %v875 = vld [vmem:[#allocation7 + $0x130] sm:$0xff]
        %v876 = vld [vmem:[#allocation7 + $0x138] sm:$0xff]
        %v877 = vld [vmem:[#allocation7 + $0x140] sm:$0xff]
        %v878 = vld [vmem:[#allocation7 + $0x148] sm:$0xff]
        %v879 = vld [vmem:[#allocation7 + $0x150] sm:$0xff]
        %v880 = vld [vmem:[#allocation7 + $0x158] sm:$0xff]
        %v881 = vld [vmem:[#allocation7 + $0x160] sm:$0xff]
        %v882 = vld [vmem:[#allocation7 + $0x168] sm:$0xff]
        %v883 = vld [vmem:[#allocation7 + $0x170] sm:$0xff]
        %v884 = vld [vmem:[#allocation7 + $0x178] sm:$0xff]
        %v885 = vld [vmem:[#allocation7 + $0x180] sm:$0xff]
        %v886 = vld [vmem:[#allocation7 + $0x188] sm:$0xff]
        %v887 = vld [vmem:[#allocation7 + $0x190] sm:$0xff]
        %v888 = vld [vmem:[#allocation7 + $0x198] sm:$0xff]
        %v889 = vld [vmem:[#allocation7 + $0x1a0] sm:$0xff]
        %v890 = vld [vmem:[#allocation7 + $0x1a8] sm:$0xff]
        %v891 = vld [vmem:[#allocation7 + $0x1b0] sm:$0xff]
        %v892 = vld [vmem:[#allocation7 + $0x1b8] sm:$0xff]
        %v893 = vld [vmem:[#allocation7 + $0x1c0] sm:$0xff]
        %v894 = vld [vmem:[#allocation7 + $0x1c8] sm:$0xff]
        %v895 = vld [vmem:[#allocation7 + $0x1d0] sm:$0xff]
        %v896 = vld [vmem:[#allocation7 + $0x1d8] sm:$0xff]
        %v897 = vld [vmem:[#allocation7 + $0x1e0] sm:$0xff]
        %v898 = vld [vmem:[#allocation7 + $0x1e8] sm:$0xff]
        %v899 = vld [vmem:[#allocation7 + $0x1f0] sm:$0xff]
        %v900 = vld [vmem:[#allocation7 + $0x1f8] sm:$0xff]
        %v901 = vld [vmem:[#allocation7 + $0x200] sm:$0xff]
        %v902 = vld [vmem:[#allocation7 + $0x208] sm:$0xff]
        %v903 = vld [vmem:[#allocation7 + $0x210] sm:$0xff]
        %v904 = vld [vmem:[#allocation7 + $0x218] sm:$0xff]
        %v905 = vld [vmem:[#allocation7 + $0x220] sm:$0xff]
        %v906 = vld [vmem:[#allocation7 + $0x228] sm:$0xff]
        %v907 = vld [vmem:[#allocation7 + $0x230] sm:$0xff]
        %v908 = vld [vmem:[#allocation7 + $0x238] sm:$0xff]
        %v909 = vld [vmem:[#allocation7 + $0x240] sm:$0xff]
        %v910 = vld [vmem:[#allocation7 + $0x248] sm:$0xff]
        %v911 = vld [vmem:[#allocation7 + $0x250] sm:$0xff]
        %v912 = vld [vmem:[#allocation7 + $0x258] sm:$0xff]
        %v913 = vld [vmem:[#allocation7 + $0x260] sm:$0xff]
        %v914 = vld [vmem:[#allocation7 + $0x268] sm:$0xff]
        %v915 = vld [vmem:[#allocation7 + $0x270] sm:$0xff]
        %v916 = vld [vmem:[#allocation7 + $0x278] sm:$0xff]
        %v917 = vld [vmem:[#allocation7 + $0x280] sm:$0xff]
        %v918 = vld [vmem:[#allocation7 + $0x288] sm:$0xff]
        %v919 = vld [vmem:[#allocation7 + $0x290] sm:$0xff]
        %v920 = vld [vmem:[#allocation7 + $0x298] sm:$0xff]
        %v921 = vld [vmem:[#allocation7 + $0x2a0] sm:$0xff]
        %v922 = vld [vmem:[#allocation7 + $0x2a8] sm:$0xff]
        %v923 = vld [vmem:[#allocation7 + $0x2b0] sm:$0xff]
        %v924 = vld [vmem:[#allocation7 + $0x2b8] sm:$0xff]
        %v925 = vld [vmem:[#allocation7 + $0x2c0] sm:$0xff]
        %v926 = vld [vmem:[#allocation7 + $0x2c8] sm:$0xff]
        %v927 = vld [vmem:[#allocation7 + $0x2d0] sm:$0xff]
        %v928 = vld [vmem:[#allocation7 + $0x2d8] sm:$0xff]
        %v929 = vld [vmem:[#allocation7 + $0x2e0] sm:$0xff]
        %v930 = vld [vmem:[#allocation7 + $0x2e8] sm:$0xff]
        %v931 = vld [vmem:[#allocation7 + $0x2f0] sm:$0xff]
        %v932 = vld [vmem:[#allocation7 + $0x2f8] sm:$0xff]
        %v933 = vld [vmem:[#allocation7 + $0x300] sm:$0xff]
        %v934 = vld [vmem:[#allocation7 + $0x308] sm:$0xff]
        %v935 = vld [vmem:[#allocation7 + $0x310] sm:$0xff]
        %v936 = vld [vmem:[#allocation7 + $0x318] sm:$0xff]
        %v937 = vld [vmem:[#allocation7 + $0x320] sm:$0xff]
        %v938 = vld [vmem:[#allocation7 + $0x328] sm:$0xff]
        %v939 = vld [vmem:[#allocation7 + $0x330] sm:$0xff]
        %v940 = vld [vmem:[#allocation7 + $0x338] sm:$0xff]
        %v941 = vld [vmem:[#allocation7 + $0x340] sm:$0xff]
        %v942 = vld [vmem:[#allocation7 + $0x348] sm:$0xff]
        %v943 = vld [vmem:[#allocation7 + $0x350] sm:$0xff]
        %v944 = vld [vmem:[#allocation7 + $0x358] sm:$0xff]
        %v945 = vld [vmem:[#allocation7 + $0x360] sm:$0xff]
        %v946 = vld [vmem:[#allocation7 + $0x368] sm:$0xff]
        %v947 = vld [vmem:[#allocation7 + $0x370] sm:$0xff]
        %v948 = vld [vmem:[#allocation7 + $0x378] sm:$0xff]
        %v949 = vld [vmem:[#allocation7 + $0x380] sm:$0xff]
        %v950 = vld [vmem:[#allocation7 + $0x388] sm:$0xff]
        %v951 = vld [vmem:[#allocation7 + $0x390] sm:$0xff]
        %v952 = vld [vmem:[#allocation7 + $0x398] sm:$0xff]
        %v953 = vld [vmem:[#allocation7 + $0x3a0] sm:$0xff]
        %v954 = vld [vmem:[#allocation7 + $0x3a8] sm:$0xff]
        %v955 = vld [vmem:[#allocation7 + $0x3b0] sm:$0xff]
        %v956 = vld [vmem:[#allocation7 + $0x3b8] sm:$0xff]
        %v957 = vld [vmem:[#allocation7 + $0x3c0] sm:$0xff]
        %v958 = vld [vmem:[#allocation7 + $0x3c8] sm:$0xff]
        %v959 = vld [vmem:[#allocation7 + $0x3d0] sm:$0xff]
        %v960 = vld [vmem:[#allocation7 + $0x3d8] sm:$0xff]
        %v961 = vld [vmem:[#allocation7 + $0x3e0] sm:$0xff]
        %v962 = vld [vmem:[#allocation7 + $0x3e8] sm:$0xff]
        %v963 = vld [vmem:[#allocation7 + $0x3f0] sm:$0xff]
        %v964 = vld [vmem:[#allocation7 + $0x3f8] sm:$0xff]
        %v965 = vld [vmem:[#allocation7 + $0x400] sm:$0xff]
        %v966 = vld [vmem:[#allocation7 + $0x408] sm:$0xff]
        %v967 = vld [vmem:[#allocation7 + $0x410] sm:$0xff]
        %v968 = vld [vmem:[#allocation7 + $0x418] sm:$0xff]
        %v969 = vld [vmem:[#allocation7 + $0x420] sm:$0xff]
        %v970 = vld [vmem:[#allocation7 + $0x428] sm:$0xff]
        %v971 = vld [vmem:[#allocation7 + $0x430] sm:$0xff]
        %v972 = vld [vmem:[#allocation7 + $0x438] sm:$0xff]
        %v973 = vld [vmem:[#allocation7 + $0x440] sm:$0xff]
        %v974 = vld [vmem:[#allocation7 + $0x448] sm:$0xff]
        %v975 = vld [vmem:[#allocation7 + $0x450] sm:$0xff]
        %v976 = vld [vmem:[#allocation7 + $0x458] sm:$0xff]
        %v977 = vld [vmem:[#allocation7 + $0x460] sm:$0xff]
        %v978 = vld [vmem:[#allocation7 + $0x468] sm:$0xff]
        %v979 = vld [vmem:[#allocation7 + $0x470] sm:$0xff]
        %v980 = vld [vmem:[#allocation7 + $0x478] sm:$0xff]
        %v981 = vld [vmem:[%s2] sm:$0x1]
        %v983 = vlaneseq
        %v984 = vshrl.u32 %v983, 7
        %v985 = vsub.s32 0, %v984
        %v986 = vrot.slane %v981, %v985
        %988 = vmatprep.subr.mxu0 0.0
        %989 = vmatpush1.msra.mxu0 %v837
        %990 = vmatprep.subr.mxu0 0.0
        %991 = vmatpush1.msra.mxu0 %v838
        %992 = vmatprep.subr.mxu0 0.0
        %993 = vmatpush1.msra.mxu0 %v839
        %994 = vmatprep.subr.mxu0 0.0
        %995 = vmatpush1.msra.mxu0 %v840
        %996 = vmatprep.subr.mxu0 0.0
        %997 = vmatpush1.msra.mxu0 %v841
        %998 = vmatprep.subr.mxu0 0.0
        %999 = vmatpush1.msra.mxu0 %v842
        %1000 = vmatprep.subr.mxu0 0.0
        %1001 = vmatpush1.msra.mxu0 %v843
        %1002 = vmatprep.subr.mxu0 0.0
        %1003 = vmatpush1.msra.mxu0 %v844
        %1004 = vmatprep.subr.mxu0 0.0
        %1005 = vmatpush1.msra.mxu0 %v845
        %1006 = vmatprep.subr.mxu0 0.0
        %1007 = vmatpush1.msra.mxu0 %v846
        %1008 = vmatprep.subr.mxu0 0.0
        %1009 = vmatpush1.msra.mxu0 %v847
        %1010 = vmatprep.subr.mxu0 0.0
        %1011 = vmatpush1.msra.mxu0 %v848
        %1012 = vmatprep.subr.mxu0 0.0
        %1013 = vmatpush1.msra.mxu0 %v849
        %1014 = vmatprep.subr.mxu0 0.0
        %1015 = vmatpush1.msra.mxu0 %v850
        %1016 = vmatprep.subr.mxu0 0.0
        %1017 = vmatpush1.msra.mxu0 %v851
        %1018 = vmatprep.subr.mxu0 0.0
        %1019 = vmatpush1.msra.mxu0 %v852
        %1020 = vmatprep.subr.mxu0 0.0
        %1021 = vmatpush1.msra.mxu0 %v853
        %1022 = vmatprep.subr.mxu0 0.0
        %1023 = vmatpush1.msra.mxu0 %v854
        %1024 = vmatprep.subr.mxu0 0.0
        %1025 = vmatpush1.msra.mxu0 %v855
        %1026 = vmatprep.subr.mxu0 0.0
        %1027 = vmatpush1.msra.mxu0 %v856
        %1028 = vmatprep.subr.mxu0 0.0
        %1029 = vmatpush1.msra.mxu0 %v857
        %1030 = vmatprep.subr.mxu0 0.0
        %1031 = vmatpush1.msra.mxu0 %v858
        %1032 = vmatprep.subr.mxu0 0.0
        %1033 = vmatpush1.msra.mxu0 %v859
        %1034 = vmatprep.subr.mxu0 0.0
        %1035 = vmatpush1.msra.mxu0 %v860
        %1036 = vmatprep.subr.mxu0 0.0
        %1037 = vmatpush1.msra.mxu0 %v861
        %1038 = vmatprep.subr.mxu0 0.0
        %1039 = vmatpush1.msra.mxu0 %v862
        %1040 = vmatprep.subr.mxu0 0.0
        %1041 = vmatpush1.msra.mxu0 %v863
        %1042 = vmatprep.subr.mxu0 0.0
        %1043 = vmatpush1.msra.mxu0 %v864
        %1044 = vmatprep.subr.mxu0 0.0
        %1045 = vmatpush1.msra.mxu0 %v865
        %1046 = vmatprep.subr.mxu0 0.0
        %1047 = vmatpush1.msra.mxu0 %v866
        %1048 = vmatprep.subr.mxu0 0.0
        %1049 = vmatpush1.msra.mxu0 %v867
        %1050 = vmatprep.subr.mxu0 0.0
        %1051 = vmatpush1.msra.mxu0 %v868
        %1052 = vmatprep.mubr.f32.mxu0 %v546
        %1053 = vmatmul.mubr.f32.gmra.mrb[0].mxu0 %v435
        %v1054 = vpop.f32.mrb[0].mxu0
        %v1055 = vadd.f32 %v986, %v1054
        %v1056 = vpop.f32.mrb[0].mxu0
        %1057 = vmatprep.mubr.f32.mxu0 %v548
        %1058 = vmatmul.mubr.f32.gmra.mrb[0].mxu0 %v436
        %v1059 = vpop.f32.mrb[0].mxu0
        %v1060 = vadd.f32 %v986, %v1059
        %v1061 = vpop.f32.mrb[0].mxu0
        %1062 = vmatprep.mubr.f32.mxu0 %v551
        %1063 = vmatmul.mubr.f32.gmra.mrb[0].mxu0 %v438
        %v1064 = vpop.f32.mrb[0].mxu0
        %v1065 = vadd.f32 %v986, %v1064
        %v1066 = vpop.f32.mrb[0].mxu0
        %1067 = vmatprep.mubr.f32.mxu0 %v553
        %1068 = vmatmul.mubr.f32.gmra.mrb[0].mxu0 %v439
        %v1069 = vpop.f32.mrb[0].mxu0
        %v1070 = vadd.f32 %v986, %v1069
        %v1071 = vpop.f32.mrb[0].mxu0
        %1072 = vmatprep.mubr.f32.mxu0 %v556
        %1073 = vmatmul.mubr.f32.gmra.mrb[0].mxu0 %v441
        %v1074 = vpop.f32.mrb[0].mxu0
        %v1075 = vadd.f32 %v986, %v1074
        %v1076 = vpop.f32.mrb[0].mxu0
        %1077 = vmatprep.mubr.f32.mxu0 %v558
        %1078 = vmatmul.mubr.f32.gmra.mrb[0].mxu0 %v442
        %v1079 = vpop.f32.mrb[0].mxu0
        %v1080 = vadd.f32 %v986, %v1079
        %v1081 = vpop.f32.mrb[0].mxu0
        %1082 = vmatprep.mubr.f32.mxu0 %v561
        %1083 = vmatmul.mubr.f32.gmra.mrb[0].mxu0 %v444
        %v1084 = vpop.f32.mrb[0].mxu0
        %v1085 = vadd.f32 %v986, %v1084
        %v1086 = vpop.f32.mrb[0].mxu0
        %1087 = vmatprep.mubr.f32.mxu0 %v563
        %1088 = vmatmul.mubr.f32.gmra.mrb[0].mxu0 %v445
        %v1089 = vpop.f32.mrb[0].mxu0
        %v1090 = vadd.f32 %v986, %v1089
        %v1091 = vpop.f32.mrb[0].mxu0
        %1092 = vmatprep.mubr.f32.mxu0 %v566
        %1093 = vmatmul.mubr.f32.gmra.mrb[0].mxu0 %v447
        %v1094 = vpop.f32.mrb[0].mxu0
        %v1095 = vadd.f32 %v986, %v1094
        %v1096 = vpop.f32.mrb[0].mxu0
        %1097 = vmatprep.mubr.f32.mxu0 %v568
        %1098 = vmatmul.mubr.f32.gmra.mrb[0].mxu0 %v448
        %v1099 = vpop.f32.mrb[0].mxu0
        %v1100 = vadd.f32 %v986, %v1099
        %v1101 = vpop.f32.mrb[0].mxu0
        %1102 = vmatprep.mubr.f32.mxu0 %v571
        %1103 = vmatmul.mubr.f32.gmra.mrb[0].mxu0 %v450
        %v1104 = vpop.f32.mrb[0].mxu0
        %v1105 = vadd.f32 %v986, %v1104
        %v1106 = vpop.f32.mrb[0].mxu0
        %1107 = vmatprep.mubr.f32.mxu0 %v573
        %1108 = vmatmul.mubr.f32.gmra.mrb[0].mxu0 %v451
        %v1109 = vpop.f32.mrb[0].mxu0
        %v1110 = vadd.f32 %v986, %v1109
        %v1111 = vpop.f32.mrb[0].mxu0
        %1112 = vmatprep.mubr.f32.mxu0 %v576
        %1113 = vmatmul.mubr.f32.gmra.mrb[0].mxu0 %v453
        %v1114 = vpop.f32.mrb[0].mxu0
        %v1115 = vadd.f32 %v986, %v1114
        %v1116 = vpop.f32.mrb[0].mxu0
        %1117 = vmatprep.mubr.f32.mxu0 %v578
        %1118 = vmatmul.mubr.f32.gmra.mrb[0].mxu0 %v454
        %v1119 = vpop.f32.mrb[0].mxu0
        %v1120 = vadd.f32 %v986, %v1119
        %v1121 = vpop.f32.mrb[0].mxu0
        %1122 = vmatprep.mubr.f32.mxu0 %v581
        %1123 = vmatmul.mubr.f32.gmra.mrb[0].mxu0 %v456
        %v1124 = vpop.f32.mrb[0].mxu0
        %v1125 = vadd.f32 %v986, %v1124
        %v1126 = vpop.f32.mrb[0].mxu0
        %1127 = vmatprep.mubr.f32.mxu0 %v583
        %1128 = vmatmul.mubr.f32.gmra.mrb[0].mxu0 %v457
        %v1129 = vpop.f32.mrb[0].mxu0
        %v1130 = vadd.f32 %v986, %v1129
        %v1131 = vpop.f32.mrb[0].mxu0
        %1132 = vmatprep.mubr.f32.mxu0 %v586
        %1133 = vmatmul.mubr.f32.gmra.mrb[0].mxu0 %v459
        %v1134 = vpop.f32.mrb[0].mxu0
        %v1135 = vadd.f32 %v986, %v1134
        %v1136 = vpop.f32.mrb[0].mxu0
        %1137 = vmatprep.mubr.f32.mxu0 %v588
        %1138 = vmatmul.mubr.f32.gmra.mrb[0].mxu0 %v460
        %v1139 = vpop.f32.mrb[0].mxu0
        %v1140 = vadd.f32 %v986, %v1139
        %v1141 = vpop.f32.mrb[0].mxu0
        %1142 = vmatprep.mubr.f32.mxu0 %v591
        %1143 = vmatmul.mubr.f32.gmra.mrb[0].mxu0 %v462
        %v1144 = vpop.f32.mrb[0].mxu0
        %v1145 = vadd.f32 %v986, %v1144
        %v1146 = vpop.f32.mrb[0].mxu0
        %1147 = vmatprep.mubr.f32.mxu0 %v593
        %1148 = vmatmul.mubr.f32.gmra.mrb[0].mxu0 %v463
        %v1149 = vpop.f32.mrb[0].mxu0
        %v1150 = vadd.f32 %v986, %v1149
        %v1151 = vpop.f32.mrb[0].mxu0
        %1152 = vmatprep.mubr.f32.mxu0 %v596
        %1153 = vmatmul.mubr.f32.gmra.mrb[0].mxu0 %v465
        %v1154 = vpop.f32.mrb[0].mxu0
        %v1155 = vadd.f32 %v986, %v1154
        %v1156 = vpop.f32.mrb[0].mxu0
        %1157 = vmatprep.mubr.f32.mxu0 %v598
        %1158 = vmatmul.mubr.f32.gmra.mrb[0].mxu0 %v466
        %v1159 = vpop.f32.mrb[0].mxu0
        %v1160 = vadd.f32 %v986, %v1159
        %v1161 = vpop.f32.mrb[0].mxu0
        %1162 = vmatprep.mubr.f32.mxu0 %v601
        %1163 = vmatmul.mubr.f32.gmra.mrb[0].mxu0 %v468
        %v1164 = vpop.f32.mrb[0].mxu0
        %v1165 = vadd.f32 %v986, %v1164
        %v1166 = vpop.f32.mrb[0].mxu0
        %1167 = vmatprep.mubr.f32.mxu0 %v603
        %1168 = vmatmul.mubr.f32.gmra.mrb[0].mxu0 %v469
        %v1169 = vpop.f32.mrb[0].mxu0
        %v1170 = vadd.f32 %v986, %v1169
        %v1171 = vpop.f32.mrb[0].mxu0
        %1172 = vmatprep.mubr.f32.mxu0 %v606
        %1173 = vmatmul.mubr.f32.gmra.mrb[0].mxu0 %v471
        %v1174 = vpop.f32.mrb[0].mxu0
        %v1175 = vadd.f32 %v986, %v1174
        %v1176 = vpop.f32.mrb[0].mxu0
        %1177 = vmatprep.mubr.f32.mxu0 %v608
        %1178 = vmatmul.mubr.f32.gmra.mrb[0].mxu0 %v472
        %v1179 = vpop.f32.mrb[0].mxu0
        %v1180 = vadd.f32 %v986, %v1179
        %v1181 = vpop.f32.mrb[0].mxu0
        %1182 = vmatprep.mubr.f32.mxu0 %v611
        %1183 = vmatmul.mubr.f32.gmra.mrb[0].mxu0 %v474
        %v1184 = vpop.f32.mrb[0].mxu0
        %v1185 = vadd.f32 %v986, %v1184
        %v1186 = vpop.f32.mrb[0].mxu0
        %1187 = vmatprep.mubr.f32.mxu0 %v613
        %1188 = vmatmul.mubr.f32.gmra.mrb[0].mxu0 %v475
        %v1189 = vpop.f32.mrb[0].mxu0
        %v1190 = vadd.f32 %v986, %v1189
        %v1191 = vpop.f32.mrb[0].mxu0
        %1192 = vmatprep.mubr.f32.mxu0 %v616
        %1193 = vmatmul.mubr.f32.gmra.mrb[0].mxu0 %v477
        %v1194 = vpop.f32.mrb[0].mxu0
        %v1195 = vadd.f32 %v986, %v1194
        %v1196 = vpop.f32.mrb[0].mxu0
        %1197 = vmatprep.mubr.f32.mxu0 %v618
        %1198 = vmatmul.mubr.f32.gmra.mrb[0].mxu0 %v478
        %v1199 = vpop.f32.mrb[0].mxu0
        %v1200 = vadd.f32 %v986, %v1199
        %v1201 = vpop.f32.mrb[0].mxu0
        %1202 = vmatprep.mubr.f32.mxu0 %v621
        %1203 = vmatmul.mubr.f32.gmra.mrb[0].mxu0 %v480
        %v1204 = vpop.f32.mrb[0].mxu0
        %v1205 = vadd.f32 %v986, %v1204
        %v1206 = vpop.f32.mrb[0].mxu0
        %1207 = vmatprep.mubr.f32.mxu0 %v623
        %1208 = vmatmul.mubr.f32.gmra.mrb[0].mxu0 %v481
        %v1209 = vpop.f32.mrb[0].mxu0
        %v1210 = vadd.f32 %v986, %v1209
        %v1211 = vpop.f32.mrb[0].mxu0
        %1212 = vdwg.mxu0
        %1213 = vmatprep.subr.mxu0 0.0
        %1214 = vmatpush1.msra.mxu0 %v869
        %1215 = vmatprep.subr.mxu0 0.0
        %1216 = vmatpush1.msra.mxu0 %v870
        %1217 = vmatprep.subr.mxu0 0.0
        %1218 = vmatpush1.msra.mxu0 %v871
        %1219 = vmatprep.subr.mxu0 0.0
        %1220 = vmatpush1.msra.mxu0 %v872
        %1221 = vmatprep.subr.mxu0 0.0
        %1222 = vmatpush1.msra.mxu0 %v873
        %1223 = vmatprep.subr.mxu0 0.0
        %1224 = vmatpush1.msra.mxu0 %v874
        %1225 = vmatprep.subr.mxu0 0.0
        %1226 = vmatpush1.msra.mxu0 %v875
        %1227 = vmatprep.subr.mxu0 0.0
        %1228 = vmatpush1.msra.mxu0 %v876
        %1229 = vmatprep.subr.mxu0 0.0
        %1230 = vmatpush1.msra.mxu0 %v877
        %1231 = vmatprep.subr.mxu0 0.0
        %1232 = vmatpush1.msra.mxu0 %v878
        %1233 = vmatprep.subr.mxu0 0.0
        %1234 = vmatpush1.msra.mxu0 %v879
        %1235 = vmatprep.subr.mxu0 0.0
        %1236 = vmatpush1.msra.mxu0 %v880
        %1237 = vmatprep.subr.mxu0 0.0
        %1238 = vmatpush1.msra.mxu0 %v881
        %1239 = vmatprep.subr.mxu0 0.0
        %1240 = vmatpush1.msra.mxu0 %v882
        %1241 = vmatprep.subr.mxu0 0.0
        %1242 = vmatpush1.msra.mxu0 %v883
        %1243 = vmatprep.subr.mxu0 0.0
        %1244 = vmatpush1.msra.mxu0 %v884
        %1245 = vmatprep.subr.mxu0 0.0
        %1246 = vmatpush1.msra.mxu0 %v885
        %1247 = vmatprep.subr.mxu0 0.0
        %1248 = vmatpush1.msra.mxu0 %v886
        %1249 = vmatprep.subr.mxu0 0.0
        %1250 = vmatpush1.msra.mxu0 %v887
        %1251 = vmatprep.subr.mxu0 0.0
        %1252 = vmatpush1.msra.mxu0 %v888
        %1253 = vmatprep.subr.mxu0 0.0
        %1254 = vmatpush1.msra.mxu0 %v889
        %1255 = vmatprep.subr.mxu0 0.0
        %1256 = vmatpush1.msra.mxu0 %v890
        %1257 = vmatprep.subr.mxu0 0.0
        %1258 = vmatpush1.msra.mxu0 %v891
        %1259 = vmatprep.subr.mxu0 0.0
        %1260 = vmatpush1.msra.mxu0 %v892
        %1261 = vmatprep.subr.mxu0 0.0
        %1262 = vmatpush1.msra.mxu0 %v893
        %1263 = vmatprep.subr.mxu0 0.0
        %1264 = vmatpush1.msra.mxu0 %v894
        %1265 = vmatprep.subr.mxu0 0.0
        %1266 = vmatpush1.msra.mxu0 %v895
        %1267 = vmatprep.subr.mxu0 0.0
        %1268 = vmatpush1.msra.mxu0 %v896
        %1269 = vmatprep.subr.mxu0 0.0
        %1270 = vmatpush1.msra.mxu0 %v897
        %1271 = vmatprep.subr.mxu0 0.0
        %1272 = vmatpush1.msra.mxu0 %v898
        %1273 = vmatprep.subr.mxu0 0.0
        %1274 = vmatpush1.msra.mxu0 %v899
        %1275 = vmatprep.subr.mxu0 0.0
        %1276 = vmatpush1.msra.mxu0 %v900
        %1277 = vmatprep.mubr.f32.mxu0 %v441
        %1278 = vmatmul.mubr.f32.gmra.mrb[0].mxu0 %v659
        %v1279 = vpop.f32.mrb[0].mxu0
        %v1280 = vadd.f32 %v1055, %v1279
        %v1281 = vpop.f32.mrb[0].mxu0
        %1282 = vmatprep.mubr.f32.mxu0 %v442
        %1283 = vmatmul.mubr.f32.gmra.mrb[0].mxu0 %v661
        %v1284 = vpop.f32.mrb[0].mxu0
        %v1285 = vadd.f32 %v1060, %v1284
        %v1286 = vpop.f32.mrb[0].mxu0
        %1287 = vmatprep.mubr.f32.mxu0 %v444
        %1288 = vmatmul.mubr.f32.gmra.mrb[0].mxu0 %v664
        %v1289 = vpop.f32.mrb[0].mxu0
        %v1290 = vadd.f32 %v1065, %v1289
        %v1291 = vpop.f32.mrb[0].mxu0
        %1292 = vmatprep.mubr.f32.mxu0 %v445
        %1293 = vmatmul.mubr.f32.gmra.mrb[0].mxu0 %v666
        %v1294 = vpop.f32.mrb[0].mxu0
        %v1295 = vadd.f32 %v1070, %v1294
        %v1296 = vpop.f32.mrb[0].mxu0
        %1297 = vmatprep.mubr.f32.mxu0 %v447
        %1298 = vmatmul.mubr.f32.gmra.mrb[0].mxu0 %v669
        %v1299 = vpop.f32.mrb[0].mxu0
        %v1300 = vadd.f32 %v1075, %v1299
        %v1301 = vpop.f32.mrb[0].mxu0
        %1302 = vmatprep.mubr.f32.mxu0 %v448
        %1303 = vmatmul.mubr.f32.gmra.mrb[0].mxu0 %v671
        %v1304 = vpop.f32.mrb[0].mxu0
        %v1305 = vadd.f32 %v1080, %v1304
        %v1306 = vpop.f32.mrb[0].mxu0
        %1307 = vmatprep.mubr.f32.mxu0 %v450
        %1308 = vmatmul.mubr.f32.gmra.mrb[0].mxu0 %v674
        %v1309 = vpop.f32.mrb[0].mxu0
        %v1310 = vadd.f32 %v1085, %v1309
        %v1311 = vpop.f32.mrb[0].mxu0
        %1312 = vmatprep.mubr.f32.mxu0 %v451
        %1313 = vmatmul.mubr.f32.gmra.mrb[0].mxu0 %v676
        %v1314 = vpop.f32.mrb[0].mxu0
        %v1315 = vadd.f32 %v1090, %v1314
        %v1316 = vpop.f32.mrb[0].mxu0
        %1317 = vmatprep.mubr.f32.mxu0 %v453
        %1318 = vmatmul.mubr.f32.gmra.mrb[0].mxu0 %v679
        %v1319 = vpop.f32.mrb[0].mxu0
        %v1320 = vadd.f32 %v1095, %v1319
        %v1321 = vpop.f32.mrb[0].mxu0
        %1322 = vmatprep.mubr.f32.mxu0 %v454
        %1323 = vmatmul.mubr.f32.gmra.mrb[0].mxu0 %v681
        %v1324 = vpop.f32.mrb[0].mxu0
        %v1325 = vadd.f32 %v1100, %v1324
        %v1326 = vpop.f32.mrb[0].mxu0
        %1327 = vmatprep.mubr.f32.mxu0 %v456
        %1328 = vmatmul.mubr.f32.gmra.mrb[0].mxu0 %v684
        %v1329 = vpop.f32.mrb[0].mxu0
        %v1330 = vadd.f32 %v1105, %v1329
        %v1331 = vpop.f32.mrb[0].mxu0
        %1332 = vmatprep.mubr.f32.mxu0 %v457
        %1333 = vmatmul.mubr.f32.gmra.mrb[0].mxu0 %v686
        %v1334 = vpop.f32.mrb[0].mxu0
        %v1335 = vadd.f32 %v1110, %v1334
        %v1336 = vpop.f32.mrb[0].mxu0
        %1337 = vmatprep.mubr.f32.mxu0 %v459
        %1338 = vmatmul.mubr.f32.gmra.mrb[0].mxu0 %v689
        %v1339 = vpop.f32.mrb[0].mxu0
        %v1340 = vadd.f32 %v1115, %v1339
        %v1341 = vpop.f32.mrb[0].mxu0
        %1342 = vmatprep.mubr.f32.mxu0 %v460
        %1343 = vmatmul.mubr.f32.gmra.mrb[0].mxu0 %v691
        %v1344 = vpop.f32.mrb[0].mxu0
        %v1345 = vadd.f32 %v1120, %v1344
        %v1346 = vpop.f32.mrb[0].mxu0
        %1347 = vmatprep.mubr.f32.mxu0 %v462
        %1348 = vmatmul.mubr.f32.gmra.mrb[0].mxu0 %v694
        %v1349 = vpop.f32.mrb[0].mxu0
        %v1350 = vadd.f32 %v1125, %v1349
        %v1351 = vpop.f32.mrb[0].mxu0
        %1352 = vmatprep.mubr.f32.mxu0 %v463
        %1353 = vmatmul.mubr.f32.gmra.mrb[0].mxu0 %v696
        %v1354 = vpop.f32.mrb[0].mxu0
        %v1355 = vadd.f32 %v1130, %v1354
        %v1356 = vpop.f32.mrb[0].mxu0
        %1357 = vmatprep.mubr.f32.mxu0 %v465
        %1358 = vmatmul.mubr.f32.gmra.mrb[0].mxu0 %v699
        %v1359 = vpop.f32.mrb[0].mxu0
        %v1360 = vadd.f32 %v1135, %v1359
        %v1361 = vpop.f32.mrb[0].mxu0
        %1362 = vmatprep.mubr.f32.mxu0 %v466
        %1363 = vmatmul.mubr.f32.gmra.mrb[0].mxu0 %v701
        %v1364 = vpop.f32.mrb[0].mxu0
        %v1365 = vadd.f32 %v1140, %v1364
        %v1366 = vpop.f32.mrb[0].mxu0
        %1367 = vmatprep.mubr.f32.mxu0 %v468
        %1368 = vmatmul.mubr.f32.gmra.mrb[0].mxu0 %v704
        %v1369 = vpop.f32.mrb[0].mxu0
        %v1370 = vadd.f32 %v1145, %v1369
        %v1371 = vpop.f32.mrb[0].mxu0
        %1372 = vmatprep.mubr.f32.mxu0 %v469
        %1373 = vmatmul.mubr.f32.gmra.mrb[0].mxu0 %v706
        %v1374 = vpop.f32.mrb[0].mxu0
        %v1375 = vadd.f32 %v1150, %v1374
        %v1376 = vpop.f32.mrb[0].mxu0
        %1377 = vmatprep.mubr.f32.mxu0 %v471
        %1378 = vmatmul.mubr.f32.gmra.mrb[0].mxu0 %v709
        %v1379 = vpop.f32.mrb[0].mxu0
        %v1380 = vadd.f32 %v1155, %v1379
        %v1381 = vpop.f32.mrb[0].mxu0
        %1382 = vmatprep.mubr.f32.mxu0 %v472
        %1383 = vmatmul.mubr.f32.gmra.mrb[0].mxu0 %v711
        %v1384 = vpop.f32.mrb[0].mxu0
        %v1385 = vadd.f32 %v1160, %v1384
        %v1386 = vpop.f32.mrb[0].mxu0
        %1387 = vmatprep.mubr.f32.mxu0 %v474
        %1388 = vmatmul.mubr.f32.gmra.mrb[0].mxu0 %v714
        %v1389 = vpop.f32.mrb[0].mxu0
        %v1390 = vadd.f32 %v1165, %v1389
        %v1391 = vpop.f32.mrb[0].mxu0
        %1392 = vmatprep.mubr.f32.mxu0 %v475
        %1393 = vmatmul.mubr.f32.gmra.mrb[0].mxu0 %v716
        %v1394 = vpop.f32.mrb[0].mxu0
        %v1395 = vadd.f32 %v1170, %v1394
        %v1396 = vpop.f32.mrb[0].mxu0
        %1397 = vmatprep.mubr.f32.mxu0 %v477
        %1398 = vmatmul.mubr.f32.gmra.mrb[0].mxu0 %v719
        %v1399 = vpop.f32.mrb[0].mxu0
        %v1400 = vadd.f32 %v1175, %v1399
        %v1401 = vpop.f32.mrb[0].mxu0
        %1402 = vmatprep.mubr.f32.mxu0 %v478
        %1403 = vmatmul.mubr.f32.gmra.mrb[0].mxu0 %v721
        %v1404 = vpop.f32.mrb[0].mxu0
        %v1405 = vadd.f32 %v1180, %v1404
        %v1406 = vpop.f32.mrb[0].mxu0
        %1407 = vmatprep.mubr.f32.mxu0 %v480
        %1408 = vmatmul.mubr.f32.gmra.mrb[0].mxu0 %v724
        %v1409 = vpop.f32.mrb[0].mxu0
        %v1410 = vadd.f32 %v1185, %v1409
        %v1411 = vpop.f32.mrb[0].mxu0
        %1412 = vmatprep.mubr.f32.mxu0 %v481
        %1413 = vmatmul.mubr.f32.gmra.mrb[0].mxu0 %v726
        %v1414 = vpop.f32.mrb[0].mxu0
        %v1415 = vadd.f32 %v1190, %v1414
        %v1416 = vpop.f32.mrb[0].mxu0
        %1417 = vmatprep.mubr.f32.mxu0 %v483
        %1418 = vmatmul.mubr.f32.gmra.mrb[0].mxu0 %v729
        %v1419 = vpop.f32.mrb[0].mxu0
        %v1420 = vadd.f32 %v1195, %v1419
        %v1421 = vpop.f32.mrb[0].mxu0
        %1422 = vmatprep.mubr.f32.mxu0 %v484
        %1423 = vmatmul.mubr.f32.gmra.mrb[0].mxu0 %v731
        %v1424 = vpop.f32.mrb[0].mxu0
        %v1425 = vadd.f32 %v1200, %v1424
        %v1426 = vpop.f32.mrb[0].mxu0
        %1427 = vmatprep.mubr.f32.mxu0 %v486
        %1428 = vmatmul.mubr.f32.gmra.mrb[0].mxu0 %v734
        %v1429 = vpop.f32.mrb[0].mxu0
        %v1430 = vadd.f32 %v1205, %v1429
        %v1431 = vpop.f32.mrb[0].mxu0
        %1432 = vmatprep.mubr.f32.mxu0 %v487
        %1433 = vmatmul.mubr.f32.gmra.mrb[0].mxu0 %v736
        %v1434 = vpop.f32.mrb[0].mxu0
        %v1435 = vadd.f32 %v1210, %v1434
        %v1436 = vpop.f32.mrb[0].mxu0
        %1437 = vdwg.mxu0
        %1438 = vmatprep.subr.mxu0 0.0
        %1439 = vmatpush1.msra.mxu0 %v901
        %1440 = vmatprep.subr.mxu0 0.0
        %1441 = vmatpush1.msra.mxu0 %v902
        %1442 = vmatprep.subr.mxu0 0.0
        %1443 = vmatpush1.msra.mxu0 %v903
        %1444 = vmatprep.subr.mxu0 0.0
        %1445 = vmatpush1.msra.mxu0 %v904
        %1446 = vmatprep.subr.mxu0 0.0
        %1447 = vmatpush1.msra.mxu0 %v905
        %1448 = vmatprep.subr.mxu0 0.0
        %1449 = vmatpush1.msra.mxu0 %v906
        %1450 = vmatprep.subr.mxu0 0.0
        %1451 = vmatpush1.msra.mxu0 %v907
        %1452 = vmatprep.subr.mxu0 0.0
        %1453 = vmatpush1.msra.mxu0 %v908
        %1454 = vmatprep.subr.mxu0 0.0
        %1455 = vmatpush1.msra.mxu0 %v909
        %1456 = vmatprep.subr.mxu0 0.0
        %1457 = vmatpush1.msra.mxu0 %v910
        %1458 = vmatprep.subr.mxu0 0.0
        %1459 = vmatpush1.msra.mxu0 %v911
        %1460 = vmatprep.subr.mxu0 0.0
        %1461 = vmatpush1.msra.mxu0 %v912
        %1462 = vmatprep.subr.mxu0 0.0
        %1463 = vmatpush1.msra.mxu0 %v913
        %1464 = vmatprep.subr.mxu0 0.0
        %1465 = vmatpush1.msra.mxu0 %v914
        %1466 = vmatprep.subr.mxu0 0.0
        %1467 = vmatpush1.msra.mxu0 %v915
        %1468 = vmatprep.subr.mxu0 0.0
        %1469 = vmatpush1.msra.mxu0 %v916
        %1470 = vmatprep.subr.mxu0 0.0
        %1471 = vmatpush1.msra.mxu0 %v917
        %1472 = vmatprep.subr.mxu0 0.0
        %1473 = vmatpush1.msra.mxu0 %v918
        %1474 = vmatprep.subr.mxu0 0.0
        %1475 = vmatpush1.msra.mxu0 %v919
        %1476 = vmatprep.subr.mxu0 0.0
        %1477 = vmatpush1.msra.mxu0 %v920
        %1478 = vmatprep.subr.mxu0 0.0
        %1479 = vmatpush1.msra.mxu0 %v921
        %1480 = vmatprep.subr.mxu0 0.0
        %1481 = vmatpush1.msra.mxu0 %v922
        %1482 = vmatprep.subr.mxu0 0.0
        %1483 = vmatpush1.msra.mxu0 %v923
        %1484 = vmatprep.subr.mxu0 0.0
        %1485 = vmatpush1.msra.mxu0 %v924
        %1486 = vmatprep.subr.mxu0 0.0
        %1487 = vmatpush1.msra.mxu0 %v925
        %1488 = vmatprep.subr.mxu0 0.0
        %1489 = vmatpush1.msra.mxu0 %v926
        %1490 = vmatprep.subr.mxu0 0.0
        %1491 = vmatpush1.msra.mxu0 %v927
        %1492 = vmatprep.subr.mxu0 0.0
        %1493 = vmatpush1.msra.mxu0 %v928
        %1494 = vmatprep.subr.mxu0 0.0
        %1495 = vmatpush1.msra.mxu0 %v929
        %1496 = vmatprep.subr.mxu0 0.0
        %1497 = vmatpush1.msra.mxu0 %v930
        %1498 = vmatprep.subr.mxu0 0.0
        %1499 = vmatpush1.msra.mxu0 %v931
        %1500 = vmatprep.subr.mxu0 0.0
        %1501 = vmatpush1.msra.mxu0 %v932
        %1502 = vmatprep.mubr.f32.mxu0 %v669
        %1503 = vmatmul.mubr.f32.gmra.mrb[0].mxu0 %v556
        %v1504 = vpop.f32.mrb[0].mxu0
        %v1505 = vadd.f32 %v1280, %v1504
        %v1506 = vpop.f32.mrb[0].mxu0
        %1507 = vmatprep.mubr.f32.mxu0 %v671
        %1508 = vmatmul.mubr.f32.gmra.mrb[0].mxu0 %v558
        %v1509 = vpop.f32.mrb[0].mxu0
        %v1510 = vadd.f32 %v1285, %v1509
        %v1511 = vpop.f32.mrb[0].mxu0
        %1512 = vmatprep.mubr.f32.mxu0 %v674
        %1513 = vmatmul.mubr.f32.gmra.mrb[0].mxu0 %v561
        %v1514 = vpop.f32.mrb[0].mxu0
        %v1515 = vadd.f32 %v1290, %v1514
        %v1516 = vpop.f32.mrb[0].mxu0
        %1517 = vmatprep.mubr.f32.mxu0 %v676
        %1518 = vmatmul.mubr.f32.gmra.mrb[0].mxu0 %v563
        %v1519 = vpop.f32.mrb[0].mxu0
        %v1520 = vadd.f32 %v1295, %v1519
        %v1521 = vpop.f32.mrb[0].mxu0
        %1522 = vmatprep.mubr.f32.mxu0 %v679
        %1523 = vmatmul.mubr.f32.gmra.mrb[0].mxu0 %v566
        %v1524 = vpop.f32.mrb[0].mxu0
        %v1525 = vadd.f32 %v1300, %v1524
        %v1526 = vpop.f32.mrb[0].mxu0
        %1527 = vmatprep.mubr.f32.mxu0 %v681
        %1528 = vmatmul.mubr.f32.gmra.mrb[0].mxu0 %v568
        %v1529 = vpop.f32.mrb[0].mxu0
        %v1530 = vadd.f32 %v1305, %v1529
        %v1531 = vpop.f32.mrb[0].mxu0
        %1532 = vmatprep.mubr.f32.mxu0 %v684
        %1533 = vmatmul.mubr.f32.gmra.mrb[0].mxu0 %v571
        %v1534 = vpop.f32.mrb[0].mxu0
        %v1535 = vadd.f32 %v1310, %v1534
        %v1536 = vpop.f32.mrb[0].mxu0
        %1537 = vmatprep.mubr.f32.mxu0 %v686
        %1538 = vmatmul.mubr.f32.gmra.mrb[0].mxu0 %v573
        %v1539 = vpop.f32.mrb[0].mxu0
        %v1540 = vadd.f32 %v1315, %v1539
        %v1541 = vpop.f32.mrb[0].mxu0
        %1542 = vmatprep.mubr.f32.mxu0 %v689
        %1543 = vmatmul.mubr.f32.gmra.mrb[0].mxu0 %v576
        %v1544 = vpop.f32.mrb[0].mxu0
        %v1545 = vadd.f32 %v1320, %v1544
        %v1546 = vpop.f32.mrb[0].mxu0
        %1547 = vmatprep.mubr.f32.mxu0 %v691
        %1548 = vmatmul.mubr.f32.gmra.mrb[0].mxu0 %v578
        %v1549 = vpop.f32.mrb[0].mxu0
        %v1550 = vadd.f32 %v1325, %v1549
        %v1551 = vpop.f32.mrb[0].mxu0
        %1552 = vmatprep.mubr.f32.mxu0 %v694
        %1553 = vmatmul.mubr.f32.gmra.mrb[0].mxu0 %v581
        %v1554 = vpop.f32.mrb[0].mxu0
        %v1555 = vadd.f32 %v1330, %v1554
        %v1556 = vpop.f32.mrb[0].mxu0
        %1557 = vmatprep.mubr.f32.mxu0 %v696
        %1558 = vmatmul.mubr.f32.gmra.mrb[0].mxu0 %v583
        %v1559 = vpop.f32.mrb[0].mxu0
        %v1560 = vadd.f32 %v1335, %v1559
        %v1561 = vpop.f32.mrb[0].mxu0
        %1562 = vmatprep.mubr.f32.mxu0 %v699
        %1563 = vmatmul.mubr.f32.gmra.mrb[0].mxu0 %v586
        %v1564 = vpop.f32.mrb[0].mxu0
        %v1565 = vadd.f32 %v1340, %v1564
        %v1566 = vpop.f32.mrb[0].mxu0
        %1567 = vmatprep.mubr.f32.mxu0 %v701
        %1568 = vmatmul.mubr.f32.gmra.mrb[0].mxu0 %v588
        %v1569 = vpop.f32.mrb[0].mxu0
        %v1570 = vadd.f32 %v1345, %v1569
        %v1571 = vpop.f32.mrb[0].mxu0
        %1572 = vmatprep.mubr.f32.mxu0 %v704
        %1573 = vmatmul.mubr.f32.gmra.mrb[0].mxu0 %v591
        %v1574 = vpop.f32.mrb[0].mxu0
        %v1575 = vadd.f32 %v1350, %v1574
        %v1576 = vpop.f32.mrb[0].mxu0
        %1577 = vmatprep.mubr.f32.mxu0 %v706
        %1578 = vmatmul.mubr.f32.gmra.mrb[0].mxu0 %v593
        %v1579 = vpop.f32.mrb[0].mxu0
        %v1580 = vadd.f32 %v1355, %v1579
        %v1581 = vpop.f32.mrb[0].mxu0
        %1582 = vmatprep.mubr.f32.mxu0 %v709
        %1583 = vmatmul.mubr.f32.gmra.mrb[0].mxu0 %v596
        %v1584 = vpop.f32.mrb[0].mxu0
        %v1585 = vadd.f32 %v1360, %v1584
        %v1586 = vpop.f32.mrb[0].mxu0
        %1587 = vmatprep.mubr.f32.mxu0 %v711
        %1588 = vmatmul.mubr.f32.gmra.mrb[0].mxu0 %v598
        %v1589 = vpop.f32.mrb[0].mxu0
        %v1590 = vadd.f32 %v1365, %v1589
        %v1591 = vpop.f32.mrb[0].mxu0
        %1592 = vmatprep.mubr.f32.mxu0 %v714
        %1593 = vmatmul.mubr.f32.gmra.mrb[0].mxu0 %v601
        %v1594 = vpop.f32.mrb[0].mxu0
        %v1595 = vadd.f32 %v1370, %v1594
        %v1596 = vpop.f32.mrb[0].mxu0
        %1597 = vmatprep.mubr.f32.mxu0 %v716
        %1598 = vmatmul.mubr.f32.gmra.mrb[0].mxu0 %v603
        %v1599 = vpop.f32.mrb[0].mxu0
        %v1600 = vadd.f32 %v1375, %v1599
        %v1601 = vpop.f32.mrb[0].mxu0
        %1602 = vmatprep.mubr.f32.mxu0 %v719
        %1603 = vmatmul.mubr.f32.gmra.mrb[0].mxu0 %v606
        %v1604 = vpop.f32.mrb[0].mxu0
        %v1605 = vadd.f32 %v1380, %v1604
        %v1606 = vpop.f32.mrb[0].mxu0
        %1607 = vmatprep.mubr.f32.mxu0 %v721
        %1608 = vmatmul.mubr.f32.gmra.mrb[0].mxu0 %v608
        %v1609 = vpop.f32.mrb[0].mxu0
        %v1610 = vadd.f32 %v1385, %v1609
        %v1611 = vpop.f32.mrb[0].mxu0
        %1612 = vmatprep.mubr.f32.mxu0 %v724
        %1613 = vmatmul.mubr.f32.gmra.mrb[0].mxu0 %v611
        %v1614 = vpop.f32.mrb[0].mxu0
        %v1615 = vadd.f32 %v1390, %v1614
        %v1616 = vpop.f32.mrb[0].mxu0
        %1617 = vmatprep.mubr.f32.mxu0 %v726
        %1618 = vmatmul.mubr.f32.gmra.mrb[0].mxu0 %v613
        %v1619 = vpop.f32.mrb[0].mxu0
        %v1620 = vadd.f32 %v1395, %v1619
        %v1621 = vpop.f32.mrb[0].mxu0
        %1622 = vmatprep.mubr.f32.mxu0 %v729
        %1623 = vmatmul.mubr.f32.gmra.mrb[0].mxu0 %v616
        %v1624 = vpop.f32.mrb[0].mxu0
        %v1625 = vadd.f32 %v1400, %v1624
        %v1626 = vpop.f32.mrb[0].mxu0
        %1627 = vmatprep.mubr.f32.mxu0 %v731
        %1628 = vmatmul.mubr.f32.gmra.mrb[0].mxu0 %v618
        %v1629 = vpop.f32.mrb[0].mxu0
        %v1630 = vadd.f32 %v1405, %v1629
        %v1631 = vpop.f32.mrb[0].mxu0
        %1632 = vmatprep.mubr.f32.mxu0 %v734
        %1633 = vmatmul.mubr.f32.gmra.mrb[0].mxu0 %v621
        %v1634 = vpop.f32.mrb[0].mxu0
        %v1635 = vadd.f32 %v1410, %v1634
        %v1636 = vpop.f32.mrb[0].mxu0
        %1637 = vmatprep.mubr.f32.mxu0 %v736
        %1638 = vmatmul.mubr.f32.gmra.mrb[0].mxu0 %v623
        %v1639 = vpop.f32.mrb[0].mxu0
        %v1640 = vadd.f32 %v1415, %v1639
        %v1641 = vpop.f32.mrb[0].mxu0
        %1642 = vmatprep.mubr.f32.mxu0 %v791
        %1643 = vmatmul.mubr.f32.gmra.mrb[0].mxu0 %v777
        %v1644 = vpop.f32.mrb[0].mxu0
        %v1645 = vadd.f32 %v1420, %v1644
        %v1646 = vpop.f32.mrb[0].mxu0
        %1647 = vmatprep.mubr.f32.mxu0 %v793
        %1648 = vmatmul.mubr.f32.gmra.mrb[0].mxu0 %v779
        %v1649 = vpop.f32.mrb[0].mxu0
        %v1650 = vadd.f32 %v1425, %v1649
        %v1651 = vpop.f32.mrb[0].mxu0
        %1652 = vmatprep.mubr.f32.mxu0 %v796
        %1653 = vmatmul.mubr.f32.gmra.mrb[0].mxu0 %v782
        %v1654 = vpop.f32.mrb[0].mxu0
        %v1655 = vadd.f32 %v1430, %v1654
        %v1656 = vpop.f32.mrb[0].mxu0
        %1657 = vmatprep.mubr.f32.mxu0 %v798
        %1658 = vmatmul.mubr.f32.gmra.mrb[0].mxu0 %v784
        %v1659 = vpop.f32.mrb[0].mxu0
        %v1660 = vadd.f32 %v1435, %v1659
        %v1661 = vpop.f32.mrb[0].mxu0
        %1662 = vdwg.mxu0
        %1663 = vmatprep.subr.mxu0 0.0
        %1664 = vmatpush1.msra.mxu0 %v933
        %1665 = vmatprep.subr.mxu0 0.0
        %1666 = vmatpush1.msra.mxu0 %v934
        %1667 = vmatprep.subr.mxu0 0.0
        %1668 = vmatpush1.msra.mxu0 %v935
        %1669 = vmatprep.subr.mxu0 0.0
        %1670 = vmatpush1.msra.mxu0 %v936
        %1671 = vmatprep.subr.mxu0 0.0
        %1672 = vmatpush1.msra.mxu0 %v937
        %1673 = vmatprep.subr.mxu0 0.0
        %1674 = vmatpush1.msra.mxu0 %v938
        %1675 = vmatprep.subr.mxu0 0.0
        %1676 = vmatpush1.msra.mxu0 %v939
        %1677 = vmatprep.subr.mxu0 0.0
        %1678 = vmatpush1.msra.mxu0 %v940
        %1679 = vmatprep.subr.mxu0 0.0
        %1680 = vmatpush1.msra.mxu0 %v941
        %1681 = vmatprep.subr.mxu0 0.0
        %1682 = vmatpush1.msra.mxu0 %v942
        %1683 = vmatprep.subr.mxu0 0.0
        %1684 = vmatpush1.msra.mxu0 %v943
        %1685 = vmatprep.subr.mxu0 0.0
        %1686 = vmatpush1.msra.mxu0 %v944
        %1687 = vmatprep.subr.mxu0 0.0
        %1688 = vmatpush1.msra.mxu0 %v945
        %1689 = vmatprep.subr.mxu0 0.0
        %1690 = vmatpush1.msra.mxu0 %v946
        %1691 = vmatprep.subr.mxu0 0.0
        %1692 = vmatpush1.msra.mxu0 %v947
        %1693 = vmatprep.subr.mxu0 0.0
        %1694 = vmatpush1.msra.mxu0 %v948
        %1695 = vmatprep.subr.mxu0 0.0
        %1696 = vmatpush1.msra.mxu0 %v949
        %1697 = vmatprep.subr.mxu0 0.0
        %1698 = vmatpush1.msra.mxu0 %v950
        %1699 = vmatprep.subr.mxu0 0.0
        %1700 = vmatpush1.msra.mxu0 %v951
        %1701 = vmatprep.subr.mxu0 0.0
        %1702 = vmatpush1.msra.mxu0 %v952
        %1703 = vmatprep.subr.mxu0 0.0
        %1704 = vmatpush1.msra.mxu0 %v953
        %1705 = vmatprep.subr.mxu0 0.0
        %1706 = vmatpush1.msra.mxu0 %v954
        %1707 = vmatprep.subr.mxu0 0.0
        %1708 = vmatpush1.msra.mxu0 %v955
        %1709 = vmatprep.subr.mxu0 0.0
        %1710 = vmatpush1.msra.mxu0 %v956
        %1711 = vmatprep.subr.mxu0 0.0
        %1712 = vmatpush1.msra.mxu0 %v957
        %1713 = vmatprep.subr.mxu0 0.0
        %1714 = vmatpush1.msra.mxu0 %v958
        %1715 = vmatprep.subr.mxu0 0.0
        %1716 = vmatpush1.msra.mxu0 %v959
        %1717 = vmatprep.subr.mxu0 0.0
        %1718 = vmatpush1.msra.mxu0 %v960
        %1719 = vmatprep.subr.mxu0 0.0
        %1720 = vmatpush1.msra.mxu0 %v961
        %1721 = vmatprep.subr.mxu0 0.0
        %1722 = vmatpush1.msra.mxu0 %v962
        %1723 = vmatprep.subr.mxu0 0.0
        %1724 = vmatpush1.msra.mxu0 %v963
        %1725 = vmatprep.subr.mxu0 0.0
        %1726 = vmatpush1.msra.mxu0 %v964
        %1727 = vmatprep.mubr.f32.mxu0 %v566
        %1728 = vmatmul.mubr.f32.gmra.mrb[0].mxu0 %v447
        %v1729 = vpop.f32.mrb[0].mxu0
        %v1730 = vadd.f32 %v1505, %v1729
        %v1731 = vpop.f32.mrb[0].mxu0
        %1732 = vmatprep.mubr.f32.mxu0 %v568
        %1733 = vmatmul.mubr.f32.gmra.mrb[0].mxu0 %v448
        %v1734 = vpop.f32.mrb[0].mxu0
        %v1735 = vadd.f32 %v1510, %v1734
        %v1736 = vpop.f32.mrb[0].mxu0
        %1737 = vmatprep.mubr.f32.mxu0 %v571
        %1738 = vmatmul.mubr.f32.gmra.mrb[0].mxu0 %v450
        %v1739 = vpop.f32.mrb[0].mxu0
        %v1740 = vadd.f32 %v1515, %v1739
        %v1741 = vpop.f32.mrb[0].mxu0
        %1742 = vmatprep.mubr.f32.mxu0 %v573
        %1743 = vmatmul.mubr.f32.gmra.mrb[0].mxu0 %v451
        %v1744 = vpop.f32.mrb[0].mxu0
        %v1745 = vadd.f32 %v1520, %v1744
        %v1746 = vpop.f32.mrb[0].mxu0
        %1747 = vmatprep.mubr.f32.mxu0 %v576
        %1748 = vmatmul.mubr.f32.gmra.mrb[0].mxu0 %v453
        %v1749 = vpop.f32.mrb[0].mxu0
        %v1750 = vadd.f32 %v1525, %v1749
        %v1751 = vpop.f32.mrb[0].mxu0
        %1752 = vmatprep.mubr.f32.mxu0 %v578
        %1753 = vmatmul.mubr.f32.gmra.mrb[0].mxu0 %v454
        %v1754 = vpop.f32.mrb[0].mxu0
        %v1755 = vadd.f32 %v1530, %v1754
        %v1756 = vpop.f32.mrb[0].mxu0
        %1757 = vmatprep.mubr.f32.mxu0 %v581
        %1758 = vmatmul.mubr.f32.gmra.mrb[0].mxu0 %v456
        %v1759 = vpop.f32.mrb[0].mxu0
        %v1760 = vadd.f32 %v1535, %v1759
        %v1761 = vpop.f32.mrb[0].mxu0
        %1762 = vmatprep.mubr.f32.mxu0 %v583
        %1763 = vmatmul.mubr.f32.gmra.mrb[0].mxu0 %v457
        %v1764 = vpop.f32.mrb[0].mxu0
        %v1765 = vadd.f32 %v1540, %v1764
        %v1766 = vpop.f32.mrb[0].mxu0
        %1767 = vmatprep.mubr.f32.mxu0 %v586
        %1768 = vmatmul.mubr.f32.gmra.mrb[0].mxu0 %v459
        %v1769 = vpop.f32.mrb[0].mxu0
        %v1770 = vadd.f32 %v1545, %v1769
        %v1771 = vpop.f32.mrb[0].mxu0
        %1772 = vmatprep.mubr.f32.mxu0 %v588
        %1773 = vmatmul.mubr.f32.gmra.mrb[0].mxu0 %v460
        %v1774 = vpop.f32.mrb[0].mxu0
        %v1775 = vadd.f32 %v1550, %v1774
        %v1776 = vpop.f32.mrb[0].mxu0
        %1777 = vmatprep.mubr.f32.mxu0 %v591
        %1778 = vmatmul.mubr.f32.gmra.mrb[0].mxu0 %v462
        %v1779 = vpop.f32.mrb[0].mxu0
        %v1780 = vadd.f32 %v1555, %v1779
        %v1781 = vpop.f32.mrb[0].mxu0
        %1782 = vmatprep.mubr.f32.mxu0 %v593
        %1783 = vmatmul.mubr.f32.gmra.mrb[0].mxu0 %v463
        %v1784 = vpop.f32.mrb[0].mxu0
        %v1785 = vadd.f32 %v1560, %v1784
        %v1786 = vpop.f32.mrb[0].mxu0
        %1787 = vmatprep.mubr.f32.mxu0 %v596
        %1788 = vmatmul.mubr.f32.gmra.mrb[0].mxu0 %v465
        %v1789 = vpop.f32.mrb[0].mxu0
        %v1790 = vadd.f32 %v1565, %v1789
        %v1791 = vpop.f32.mrb[0].mxu0
        %1792 = vmatprep.mubr.f32.mxu0 %v598
        %1793 = vmatmul.mubr.f32.gmra.mrb[0].mxu0 %v466
        %v1794 = vpop.f32.mrb[0].mxu0
        %v1795 = vadd.f32 %v1570, %v1794
        %v1796 = vpop.f32.mrb[0].mxu0
        %1797 = vmatprep.mubr.f32.mxu0 %v601
        %1798 = vmatmul.mubr.f32.gmra.mrb[0].mxu0 %v468
        %v1799 = vpop.f32.mrb[0].mxu0
        %v1800 = vadd.f32 %v1575, %v1799
        %v1801 = vpop.f32.mrb[0].mxu0
        %1802 = vmatprep.mubr.f32.mxu0 %v603
        %1803 = vmatmul.mubr.f32.gmra.mrb[0].mxu0 %v469
        %v1804 = vpop.f32.mrb[0].mxu0
        %v1805 = vadd.f32 %v1580, %v1804
        %v1806 = vpop.f32.mrb[0].mxu0
        %1807 = vmatprep.mubr.f32.mxu0 %v606
        %1808 = vmatmul.mubr.f32.gmra.mrb[0].mxu0 %v471
        %v1809 = vpop.f32.mrb[0].mxu0
        %v1810 = vadd.f32 %v1585, %v1809
        %v1811 = vpop.f32.mrb[0].mxu0
        %1812 = vmatprep.mubr.f32.mxu0 %v608
        %1813 = vmatmul.mubr.f32.gmra.mrb[0].mxu0 %v472
        %v1814 = vpop.f32.mrb[0].mxu0
        %v1815 = vadd.f32 %v1590, %v1814
        %v1816 = vpop.f32.mrb[0].mxu0
        %1817 = vmatprep.mubr.f32.mxu0 %v611
        %1818 = vmatmul.mubr.f32.gmra.mrb[0].mxu0 %v474
        %v1819 = vpop.f32.mrb[0].mxu0
        %v1820 = vadd.f32 %v1595, %v1819
        %v1821 = vpop.f32.mrb[0].mxu0
        %1822 = vmatprep.mubr.f32.mxu0 %v613
        %1823 = vmatmul.mubr.f32.gmra.mrb[0].mxu0 %v475
        %v1824 = vpop.f32.mrb[0].mxu0
        %v1825 = vadd.f32 %v1600, %v1824
        %v1826 = vpop.f32.mrb[0].mxu0
        %1827 = vmatprep.mubr.f32.mxu0 %v616
        %1828 = vmatmul.mubr.f32.gmra.mrb[0].mxu0 %v477
        %v1829 = vpop.f32.mrb[0].mxu0
        %v1830 = vadd.f32 %v1605, %v1829
        %v1831 = vpop.f32.mrb[0].mxu0
        %1832 = vmatprep.mubr.f32.mxu0 %v618
        %1833 = vmatmul.mubr.f32.gmra.mrb[0].mxu0 %v478
        %v1834 = vpop.f32.mrb[0].mxu0
        %v1835 = vadd.f32 %v1610, %v1834
        %v1836 = vpop.f32.mrb[0].mxu0
        %1837 = vmatprep.mubr.f32.mxu0 %v621
        %1838 = vmatmul.mubr.f32.gmra.mrb[0].mxu0 %v480
        %v1839 = vpop.f32.mrb[0].mxu0
        %v1840 = vadd.f32 %v1615, %v1839
        %v1841 = vpop.f32.mrb[0].mxu0
        %1842 = vmatprep.mubr.f32.mxu0 %v623
        %1843 = vmatmul.mubr.f32.gmra.mrb[0].mxu0 %v481
        %v1844 = vpop.f32.mrb[0].mxu0
        %v1845 = vadd.f32 %v1620, %v1844
        %v1846 = vpop.f32.mrb[0].mxu0
        %1847 = vmatprep.mubr.f32.mxu0 %v777
        %1848 = vmatmul.mubr.f32.gmra.mrb[0].mxu0 %v483
        %v1849 = vpop.f32.mrb[0].mxu0
        %v1850 = vadd.f32 %v1625, %v1849
        %v1851 = vpop.f32.mrb[0].mxu0
        %1852 = vmatprep.mubr.f32.mxu0 %v779
        %1853 = vmatmul.mubr.f32.gmra.mrb[0].mxu0 %v484
        %v1854 = vpop.f32.mrb[0].mxu0
        %v1855 = vadd.f32 %v1630, %v1854
        %v1856 = vpop.f32.mrb[0].mxu0
        %1857 = vmatprep.mubr.f32.mxu0 %v782
        %1858 = vmatmul.mubr.f32.gmra.mrb[0].mxu0 %v486
        %v1859 = vpop.f32.mrb[0].mxu0
        %v1860 = vadd.f32 %v1635, %v1859
        %v1861 = vpop.f32.mrb[0].mxu0
        %1862 = vmatprep.mubr.f32.mxu0 %v784
        %1863 = vmatmul.mubr.f32.gmra.mrb[0].mxu0 %v487
        %v1864 = vpop.f32.mrb[0].mxu0
        %v1865 = vadd.f32 %v1640, %v1864
        %v1866 = vpop.f32.mrb[0].mxu0
        %1867 = vmatprep.mubr.f32.mxu0 %v811
        %1868 = vmatmul.mubr.f32.gmra.mrb[0].mxu0 %v489
        %v1869 = vpop.f32.mrb[0].mxu0
        %v1870 = vadd.f32 %v1645, %v1869
        %v1871 = vpop.f32.mrb[0].mxu0
        %1872 = vmatprep.mubr.f32.mxu0 %v813
        %1873 = vmatmul.mubr.f32.gmra.mrb[0].mxu0 %v490
        %v1874 = vpop.f32.mrb[0].mxu0
        %v1875 = vadd.f32 %v1650, %v1874
        %v1876 = vpop.f32.mrb[0].mxu0
        %1877 = vmatprep.mubr.f32.mxu0 %v816
        %1878 = vmatmul.mubr.f32.gmra.mrb[0].mxu0 %v492
        %v1879 = vpop.f32.mrb[0].mxu0
        %v1880 = vadd.f32 %v1655, %v1879
        %v1881 = vpop.f32.mrb[0].mxu0
        %1882 = vmatprep.mubr.f32.mxu0 %v818
        %1883 = vmatmul.mubr.f32.gmra.mrb[0].mxu0 %v493
        %v1884 = vpop.f32.mrb[0].mxu0
        %v1885 = vadd.f32 %v1660, %v1884
        %v1886 = vpop.f32.mrb[0].mxu0
        %1887 = vdwg.mxu0
        %1888 = vmatprep.subr.mxu0 0.0
        %1889 = vmatpush1.msra.mxu0 %v965
        %1890 = vmatprep.subr.mxu0 0.0
        %1891 = vmatpush1.msra.mxu0 %v966
        %1892 = vmatprep.subr.mxu0 0.0
        %1893 = vmatpush1.msra.mxu0 %v967
        %1894 = vmatprep.subr.mxu0 0.0
        %1895 = vmatpush1.msra.mxu0 %v968
        %1896 = vmatprep.subr.mxu0 0.0
        %1897 = vmatpush1.msra.mxu0 %v969
        %1898 = vmatprep.subr.mxu0 0.0
        %1899 = vmatpush1.msra.mxu0 %v970
        %1900 = vmatprep.subr.mxu0 0.0
        %1901 = vmatpush1.msra.mxu0 %v971
        %1902 = vmatprep.subr.mxu0 0.0
        %1903 = vmatpush1.msra.mxu0 %v972
        %1904 = vmatprep.subr.mxu0 0.0
        %1905 = vmatpush1.msra.mxu0 %v973
        %1906 = vmatprep.subr.mxu0 0.0
        %1907 = vmatpush1.msra.mxu0 %v974
        %1908 = vmatprep.subr.mxu0 0.0
        %1909 = vmatpush1.msra.mxu0 %v975
        %1910 = vmatprep.subr.mxu0 0.0
        %1911 = vmatpush1.msra.mxu0 %v976
        %1912 = vmatprep.subr.mxu0 0.0
        %1913 = vmatpush1.msra.mxu0 %v977
        %1914 = vmatprep.subr.mxu0 0.0
        %1915 = vmatpush1.msra.mxu0 %v978
        %1916 = vmatprep.subr.mxu0 0.0
        %1917 = vmatpush1.msra.mxu0 %v979
        %1918 = vmatprep.subr.mxu0 0.0
        %1919 = vmatpush1.msra.mxu0 %v980
        %1920 = vmatprep.subr.mxu0 0.0
        %1921 = vmatpush1.msra.mxu0 0.0
        %1922 = vmatprep.subr.mxu0 0.0
        %1923 = vmatpush1.msra.mxu0 0.0
        %1924 = vmatprep.subr.mxu0 0.0
        %1925 = vmatpush1.msra.mxu0 0.0
        %1926 = vmatprep.subr.mxu0 0.0
        %1927 = vmatpush1.msra.mxu0 0.0
        %1928 = vmatprep.subr.mxu0 0.0
        %1929 = vmatpush1.msra.mxu0 0.0
        %1930 = vmatprep.subr.mxu0 0.0
        %1931 = vmatpush1.msra.mxu0 0.0
        %1932 = vmatprep.subr.mxu0 0.0
        %1933 = vmatpush1.msra.mxu0 0.0
        %1934 = vmatprep.subr.mxu0 0.0
        %1935 = vmatpush1.msra.mxu0 0.0
        %1936 = vmatprep.subr.mxu0 0.0
        %1937 = vmatpush1.msra.mxu0 0.0
        %1938 = vmatprep.subr.mxu0 0.0
        %1939 = vmatpush1.msra.mxu0 0.0
        %1940 = vmatprep.subr.mxu0 0.0
        %1941 = vmatpush1.msra.mxu0 0.0
        %1942 = vmatprep.subr.mxu0 0.0
        %1943 = vmatpush1.msra.mxu0 0.0
        %1944 = vmatprep.subr.mxu0 0.0
        %1945 = vmatpush1.msra.mxu0 0.0
        %1946 = vmatprep.subr.mxu0 0.0
        %1947 = vmatpush1.msra.mxu0 0.0
        %1948 = vmatprep.subr.mxu0 0.0
        %1949 = vmatpush1.msra.mxu0 0.0
        %1950 = vmatprep.subr.mxu0 0.0
        %1951 = vmatpush1.msra.mxu0 0.0
        %1952 = vmatprep.mubr.f32.mxu0 0.0
        %1953 = vmatmul.mubr.f32.gmra.mrb[0].mxu0 %v679
        %v1954 = vpop.f32.mrb[0].mxu0
        %v1955 = vadd.f32 %v1730, %v1954
        %v1956 = vpop.f32.mrb[0].mxu0
        %1957 = vmatprep.mubr.f32.mxu0 0.0
        %1958 = vmatmul.mubr.f32.gmra.mrb[0].mxu0 %v681
        %v1959 = vpop.f32.mrb[0].mxu0
        %v1960 = vadd.f32 %v1735, %v1959
        %v1961 = vpop.f32.mrb[0].mxu0
        %1962 = vmatprep.mubr.f32.mxu0 0.0
        %1963 = vmatmul.mubr.f32.gmra.mrb[0].mxu0 %v684
        %v1964 = vpop.f32.mrb[0].mxu0
        %v1965 = vadd.f32 %v1740, %v1964
        %v1966 = vpop.f32.mrb[0].mxu0
        %1967 = vmatprep.mubr.f32.mxu0 0.0
        %1968 = vmatmul.mubr.f32.gmra.mrb[0].mxu0 %v686
        %v1969 = vpop.f32.mrb[0].mxu0
        %v1970 = vadd.f32 %v1745, %v1969
        %v1971 = vpop.f32.mrb[0].mxu0
        %1972 = vmatprep.mubr.f32.mxu0 0.0
        %1973 = vmatmul.mubr.f32.gmra.mrb[0].mxu0 %v689
        %v1974 = vpop.f32.mrb[0].mxu0
        %v1975 = vadd.f32 %v1750, %v1974
        %v1976 = vpop.f32.mrb[0].mxu0
        %1977 = vmatprep.mubr.f32.mxu0 0.0
        %1978 = vmatmul.mubr.f32.gmra.mrb[0].mxu0 %v691
        %v1979 = vpop.f32.mrb[0].mxu0
        %v1980 = vadd.f32 %v1755, %v1979
        %v1981 = vpop.f32.mrb[0].mxu0
        %1982 = vmatprep.mubr.f32.mxu0 0.0
        %1983 = vmatmul.mubr.f32.gmra.mrb[0].mxu0 %v694
        %v1984 = vpop.f32.mrb[0].mxu0
        %v1985 = vadd.f32 %v1760, %v1984
        %v1986 = vpop.f32.mrb[0].mxu0
        %1987 = vmatprep.mubr.f32.mxu0 0.0
        %1988 = vmatmul.mubr.f32.gmra.mrb[0].mxu0 %v696
        %v1989 = vpop.f32.mrb[0].mxu0
        %v1990 = vadd.f32 %v1765, %v1989
        %v1991 = vpop.f32.mrb[0].mxu0
        %1992 = vmatprep.mubr.f32.mxu0 0.0
        %1993 = vmatmul.mubr.f32.gmra.mrb[0].mxu0 %v699
        %v1994 = vpop.f32.mrb[0].mxu0
        %v1995 = vadd.f32 %v1770, %v1994
        %v1996 = vpop.f32.mrb[0].mxu0
        %1997 = vmatprep.mubr.f32.mxu0 0.0
        %1998 = vmatmul.mubr.f32.gmra.mrb[0].mxu0 %v701
        %v1999 = vpop.f32.mrb[0].mxu0
        %v2000 = vadd.f32 %v1775, %v1999
        %v2001 = vpop.f32.mrb[0].mxu0
        %2002 = vmatprep.mubr.f32.mxu0 0.0
        %2003 = vmatmul.mubr.f32.gmra.mrb[0].mxu0 %v704
        %v2004 = vpop.f32.mrb[0].mxu0
        %v2005 = vadd.f32 %v1780, %v2004
        %v2006 = vpop.f32.mrb[0].mxu0
        %2007 = vmatprep.mubr.f32.mxu0 0.0
        %2008 = vmatmul.mubr.f32.gmra.mrb[0].mxu0 %v706
        %v2009 = vpop.f32.mrb[0].mxu0
        %v2010 = vadd.f32 %v1785, %v2009
        %v2011 = vpop.f32.mrb[0].mxu0
        %2012 = vmatprep.mubr.f32.mxu0 0.0
        %2013 = vmatmul.mubr.f32.gmra.mrb[0].mxu0 %v709
        %v2014 = vpop.f32.mrb[0].mxu0
        %v2015 = vadd.f32 %v1790, %v2014
        %v2016 = vpop.f32.mrb[0].mxu0
        %2017 = vmatprep.mubr.f32.mxu0 0.0
        %2018 = vmatmul.mubr.f32.gmra.mrb[0].mxu0 %v711
        %v2019 = vpop.f32.mrb[0].mxu0
        %v2020 = vadd.f32 %v1795, %v2019
        %v2021 = vpop.f32.mrb[0].mxu0
        %2022 = vmatprep.mubr.f32.mxu0 0.0
        %2023 = vmatmul.mubr.f32.gmra.mrb[0].mxu0 %v714
        %v2024 = vpop.f32.mrb[0].mxu0
        %v2025 = vadd.f32 %v1800, %v2024
        %v2026 = vpop.f32.mrb[0].mxu0
        %2027 = vmatprep.mubr.f32.mxu0 0.0
        %2028 = vmatmul.mubr.f32.gmra.mrb[0].mxu0 %v716
        %v2029 = vpop.f32.mrb[0].mxu0
        %v2030 = vadd.f32 %v1805, %v2029
        %v2031 = vpop.f32.mrb[0].mxu0
        %2032 = vmatprep.mubr.f32.mxu0 0.0
        %2033 = vmatmul.mubr.f32.gmra.mrb[0].mxu0 %v719
        %v2034 = vpop.f32.mrb[0].mxu0
        %v2035 = vadd.f32 %v1810, %v2034
        %v2036 = vpop.f32.mrb[0].mxu0
        %2037 = vmatprep.mubr.f32.mxu0 0.0
        %2038 = vmatmul.mubr.f32.gmra.mrb[0].mxu0 %v721
        %v2039 = vpop.f32.mrb[0].mxu0
        %v2040 = vadd.f32 %v1815, %v2039
        %v2041 = vpop.f32.mrb[0].mxu0
        %2042 = vmatprep.mubr.f32.mxu0 0.0
        %2043 = vmatmul.mubr.f32.gmra.mrb[0].mxu0 %v724
        %v2044 = vpop.f32.mrb[0].mxu0
        %v2045 = vadd.f32 %v1820, %v2044
        %v2046 = vpop.f32.mrb[0].mxu0
        %2047 = vmatprep.mubr.f32.mxu0 0.0
        %2048 = vmatmul.mubr.f32.gmra.mrb[0].mxu0 %v726
        %v2049 = vpop.f32.mrb[0].mxu0
        %v2050 = vadd.f32 %v1825, %v2049
        %v2051 = vpop.f32.mrb[0].mxu0
        %2052 = vmatprep.mubr.f32.mxu0 0.0
        %2053 = vmatmul.mubr.f32.gmra.mrb[0].mxu0 %v729
        %v2054 = vpop.f32.mrb[0].mxu0
        %v2055 = vadd.f32 %v1830, %v2054
        %v2056 = vpop.f32.mrb[0].mxu0
        %2057 = vmatprep.mubr.f32.mxu0 0.0
        %2058 = vmatmul.mubr.f32.gmra.mrb[0].mxu0 %v731
        %v2059 = vpop.f32.mrb[0].mxu0
        %v2060 = vadd.f32 %v1835, %v2059
        %v2061 = vpop.f32.mrb[0].mxu0
        %2062 = vmatprep.mubr.f32.mxu0 0.0
        %2063 = vmatmul.mubr.f32.gmra.mrb[0].mxu0 %v734
        %v2064 = vpop.f32.mrb[0].mxu0
        %v2065 = vadd.f32 %v1840, %v2064
        %v2066 = vpop.f32.mrb[0].mxu0
        %2067 = vmatprep.mubr.f32.mxu0 0.0
        %2068 = vmatmul.mubr.f32.gmra.mrb[0].mxu0 %v736
        %v2069 = vpop.f32.mrb[0].mxu0
        %v2070 = vadd.f32 %v1845, %v2069
        %v2071 = vpop.f32.mrb[0].mxu0
        %2072 = vmatprep.mubr.f32.mxu0 0.0
        %2073 = vmatmul.mubr.f32.gmra.mrb[0].mxu0 %v791
        %v2074 = vpop.f32.mrb[0].mxu0
        %v2075 = vadd.f32 %v1850, %v2074
        %v2076 = vpop.f32.mrb[0].mxu0
        %2077 = vmatprep.mubr.f32.mxu0 0.0
        %2078 = vmatmul.mubr.f32.gmra.mrb[0].mxu0 %v793
        %v2079 = vpop.f32.mrb[0].mxu0
        %v2080 = vadd.f32 %v1855, %v2079
        %v2081 = vpop.f32.mrb[0].mxu0
        %2082 = vmatprep.mubr.f32.mxu0 0.0
        %2083 = vmatmul.mubr.f32.gmra.mrb[0].mxu0 %v796
        %v2084 = vpop.f32.mrb[0].mxu0
        %v2085 = vadd.f32 %v1860, %v2084
        %v2086 = vpop.f32.mrb[0].mxu0
        %2087 = vmatprep.mubr.f32.mxu0 0.0
        %2088 = vmatmul.mubr.f32.gmra.mrb[0].mxu0 %v798
        %v2089 = vpop.f32.mrb[0].mxu0
        %v2090 = vadd.f32 %v1865, %v2089
        %v2091 = vpop.f32.mrb[0].mxu0
        %2092 = vmatprep.mubr.f32.mxu0 0.0
        %2093 = vmatmul.mubr.f32.gmra.mrb[0].mxu0 %v825
        %v2094 = vpop.f32.mrb[0].mxu0
        %v2095 = vadd.f32 %v1870, %v2094
        %v2096 = vpop.f32.mrb[0].mxu0
        %2097 = vmatprep.mubr.f32.mxu0 0.0
        %2098 = vmatmul.mubr.f32.gmra.mrb[0].mxu0 %v827
        %v2099 = vpop.f32.mrb[0].mxu0
        %v2100 = vadd.f32 %v1875, %v2099
        %v2101 = vpop.f32.mrb[0].mxu0
        %2102 = vmatprep.mubr.f32.mxu0 0.0
        %2103 = vmatmul.mubr.f32.gmra.mrb[0].mxu0 %v830
        %v2104 = vpop.f32.mrb[0].mxu0
        %v2105 = vadd.f32 %v1880, %v2104
        %v2106 = vpop.f32.mrb[0].mxu0
        %2107 = vmatprep.mubr.f32.mxu0 0.0
        %2108 = vmatmul.mubr.f32.gmra.mrb[0].mxu0 %v832
        %v2109 = vpop.f32.mrb[0].mxu0
        %v2110 = vadd.f32 %v1885, %v2109
        %v2111 = vpop.f32.mrb[0].mxu0
        %2112 = vdwg.mxu0
        %v2113 = vmax.f32 %v1955, 0.0
        %v2114 = vmax.f32 %v1960, 0.0
        %v2115 = vmax.f32 %v1965, 0.0
        %v2116 = vmax.f32 %v1970, 0.0
        %v2117 = vmax.f32 %v1975, 0.0
        %v2118 = vmax.f32 %v1980, 0.0
        %v2119 = vmax.f32 %v1985, 0.0
        %v2120 = vmax.f32 %v1990, 0.0
        %v2121 = vmax.f32 %v1995, 0.0
        %v2122 = vmax.f32 %v2000, 0.0
        %v2123 = vmax.f32 %v2005, 0.0
        %v2124 = vmax.f32 %v2010, 0.0
        %v2125 = vmax.f32 %v2015, 0.0
        %v2126 = vmax.f32 %v2020, 0.0
        %v2127 = vmax.f32 %v2025, 0.0
        %v2128 = vmax.f32 %v2030, 0.0
        %v2129 = vmax.f32 %v2035, 0.0
        %v2130 = vmax.f32 %v2040, 0.0
        %v2131 = vmax.f32 %v2045, 0.0
        %v2132 = vmax.f32 %v2050, 0.0
        %v2133 = vmax.f32 %v2055, 0.0
        %v2134 = vmax.f32 %v2060, 0.0
        %v2135 = vmax.f32 %v2065, 0.0
        %v2136 = vmax.f32 %v2070, 0.0
        %v2137 = vmax.f32 %v2075, 0.0
        %v2138 = vmax.f32 %v2080, 0.0
        %v2139 = vmax.f32 %v2085, 0.0
        %v2140 = vmax.f32 %v2090, 0.0
        %v2141 = vmax.f32 %v2095, 0.0
        %v2142 = vmax.f32 %v2100, 0.0
        %v2143 = vmax.f32 %v2105, 0.0
        %v2144 = vmax.f32 %v2110, 0.0
        %2145 = vst [vmem:[#allocation3] sm:$0xff] 0.0
        %2146 = vst [vmem:[#allocation3 + $0x8] sm:$0xff] 0.0
        %2147 = vst [vmem:[#allocation3 + $0x10] sm:$0x3] 0.0
        %2148 = vst [vmem:[#allocation3 + $0x18] sm:$0xff] 0.0
        %2149 = vst [vmem:[#allocation3 + $0x20] sm:$0xff] 0.0
        %2150 = vst [vmem:[#allocation3 + $0x28] sm:$0x3] 0.0
        %2151 = vst [vmem:[#allocation3 + $0x30] sm:$0xff] 0.0
        %2152 = vst [vmem:[#allocation3 + $0x38] sm:$0xff] 0.0
        %2153 = vst [vmem:[#allocation3 + $0x40] sm:$0x3] 0.0
        %2154 = vst [vmem:[#allocation3 + $0x48] sm:$0xff] 0.0
        %2155 = vst [vmem:[#allocation3 + $0x50] sm:$0xff] 0.0
        %2156 = vst [vmem:[#allocation3 + $0x58] sm:$0x3] 0.0
        %2157 = vst [vmem:[#allocation3 + $0x60] sm:$0xff] 0.0
        %2158 = vst [vmem:[#allocation3 + $0x68] sm:$0xff] 0.0
        %2159 = vst [vmem:[#allocation3 + $0x70] sm:$0x3] 0.0
        %2160 = vst [vmem:[#allocation3 + $0x78] sm:$0xff] 0.0
        %2161 = vst [vmem:[#allocation3 + $0x80] sm:$0xff] 0.0
        %2162 = vst [vmem:[#allocation3 + $0x88] sm:$0x3] 0.0
        %2163 = vst [vmem:[#allocation3 + $0x90] sm:$0xff] 0.0
        %2164 = vst [vmem:[#allocation3 + $0x98] sm:$0xff] 0.0
        %2165 = vst [vmem:[#allocation3 + $0xa0] sm:$0x3] 0.0
        %2166 = vst [vmem:[#allocation3 + $0xa8] sm:$0xff] 0.0
        %2167 = vst [vmem:[#allocation3 + $0xb0] sm:$0xff] 0.0
        %2168 = vst [vmem:[#allocation3 + $0xb8] sm:$0x3] 0.0
        %2169 = vst [vmem:[#allocation3 + $0xc0] sm:$0xff] 0.0
        %2170 = vst [vmem:[#allocation3 + $0xc8] sm:$0xff] 0.0
        %2171 = vst [vmem:[#allocation3 + $0xd0] sm:$0x3] 0.0
        %2172 = vst [vmem:[#allocation3 + $0xd8] sm:$0xff] 0.0
        %2173 = vst [vmem:[#allocation3 + $0xe0] sm:$0xff] 0.0
        %2174 = vst [vmem:[#allocation3 + $0xe8] sm:$0x3] 0.0
        %2175 = vst [vmem:[#allocation3 + $0xf0] sm:$0xff] 0.0
        %2176 = vst [vmem:[#allocation3 + $0xf8] sm:$0xff] 0.0
        %2177 = vst [vmem:[#allocation3 + $0x100] sm:$0x3] 0.0
        %2178 = vst [vmem:[#allocation3 + $0x108] sm:$0xff] 0.0
        %2179 = vst [vmem:[#allocation3 + $0x110] sm:$0xff] 0.0
        %2180 = vst [vmem:[#allocation3 + $0x118] sm:$0x3] 0.0
        %2181 = vst [vmem:[#allocation3 + $0x120] sm:$0xff] 0.0
        %2182 = vst [vmem:[#allocation3 + $0x128] sm:$0xff] 0.0
        %2183 = vst [vmem:[#allocation3 + $0x130] sm:$0x3] 0.0
        %2184 = vst [vmem:[#allocation3 + $0x138] sm:$0xff] 0.0
        %2185 = vst [vmem:[#allocation3 + $0x140] sm:$0xff] 0.0
        %2186 = vst [vmem:[#allocation3 + $0x148] sm:$0x3] 0.0
        %2187 = vst [vmem:[#allocation3 + $0x150] sm:$0xff] 0.0
        %2188 = vst [vmem:[#allocation3 + $0x158] sm:$0xff] 0.0
        %2189 = vst [vmem:[#allocation3 + $0x160] sm:$0x3] 0.0
        %2190 = vst [vmem:[#allocation3 + $0x168] sm:$0xff] 0.0
        %2191 = vst [vmem:[#allocation3 + $0x170] sm:$0xff] 0.0
        %2192 = vst [vmem:[#allocation3 + $0x178] sm:$0x3] 0.0
        %2193 = vst [vmem:[#allocation3 + $0x180] sm:$0xff] 0.0
        %2194 = vst [vmem:[#allocation3 + $0x188] sm:$0xff] 0.0
        %2195 = vst [vmem:[#allocation3 + $0x190] sm:$0x3] 0.0
        %2196 = vst [vmem:[#allocation3 + $0x198] sm:$0xff] 0.0
        %2197 = vst [vmem:[#allocation3 + $0x1a0] sm:$0xff] 0.0
        %2198 = vst [vmem:[#allocation3 + $0x1a8] sm:$0x3] 0.0
        %s2199 = scalar_lea.vmem [#allocation3], 24
        %2200 = vst [vmem:[%s2199 + $0x1] sm:$0xff] %v2113
        %2201 = vst [vmem:[%s2199 + $0x9] sm:$0xff] %v2114
        %2202 = vst [vmem:[%s2199 + $0x19] sm:$0xff] %v2115
        %2203 = vst [vmem:[%s2199 + $0x21] sm:$0xff] %v2116
        %2204 = vst [vmem:[%s2199 + $0x31] sm:$0xff] %v2117
        %2205 = vst [vmem:[%s2199 + $0x39] sm:$0xff] %v2118
        %2206 = vst [vmem:[%s2199 + $0x49] sm:$0xff] %v2119
        %2207 = vst [vmem:[%s2199 + $0x51] sm:$0xff] %v2120
        %2208 = vst [vmem:[%s2199 + $0x61] sm:$0xff] %v2121
        %2209 = vst [vmem:[%s2199 + $0x69] sm:$0xff] %v2122
        %2210 = vst [vmem:[%s2199 + $0x79] sm:$0xff] %v2123
        %2211 = vst [vmem:[%s2199 + $0x81] sm:$0xff] %v2124
        %2212 = vst [vmem:[%s2199 + $0x91] sm:$0xff] %v2125
        %2213 = vst [vmem:[%s2199 + $0x99] sm:$0xff] %v2126
        %2214 = vst [vmem:[%s2199 + $0xa9] sm:$0xff] %v2127
        %2215 = vst [vmem:[%s2199 + $0xb1] sm:$0xff] %v2128
        %2216 = vst [vmem:[%s2199 + $0xc1] sm:$0xff] %v2129
        %2217 = vst [vmem:[%s2199 + $0xc9] sm:$0xff] %v2130
        %2218 = vst [vmem:[%s2199 + $0xd9] sm:$0xff] %v2131
        %2219 = vst [vmem:[%s2199 + $0xe1] sm:$0xff] %v2132
        %2220 = vst [vmem:[%s2199 + $0xf1] sm:$0xff] %v2133
        %2221 = vst [vmem:[%s2199 + $0xf9] sm:$0xff] %v2134
        %2222 = vst [vmem:[%s2199 + $0x109] sm:$0xff] %v2135
        %2223 = vst [vmem:[%s2199 + $0x111] sm:$0xff] %v2136
        %2224 = vst [vmem:[%s2199 + $0x121] sm:$0xff] %v2137
        %2225 = vst [vmem:[%s2199 + $0x129] sm:$0xff] %v2138
        %2226 = vst [vmem:[%s2199 + $0x139] sm:$0xff] %v2139
        %2227 = vst [vmem:[%s2199 + $0x141] sm:$0xff] %v2140
        %2228 = vst [vmem:[%s2199 + $0x151] sm:$0xff] %v2141
        %2229 = vst [vmem:[%s2199 + $0x159] sm:$0xff] %v2142
        %2230 = vst [vmem:[%s2199 + $0x169] sm:$0xff] %v2143
        %2231 = vst [vmem:[%s2199 + $0x171] sm:$0xff] %v2144
        %v2232 = vld [vmem:[#allocation3] sm:$0xff]
        %v2233 = vld [vmem:[#allocation3 + $0x8] sm:$0xff]
        %v2234 = vld [vmem:[#allocation3 + $0x10] sm:$0x3]
        %v2235 = vld [vmem:[#allocation3 + $0x18] sm:$0xff]
        %v2236 = vld [vmem:[#allocation3 + $0x20] sm:$0xff]
        %v2237 = vld [vmem:[#allocation3 + $0x28] sm:$0x3]
        %v2238 = vld [vmem:[#allocation3 + $0x30] sm:$0xff]
        %v2239 = vld [vmem:[#allocation3 + $0x38] sm:$0xff]
        %v2240 = vld [vmem:[#allocation3 + $0x40] sm:$0x3]
        %v2241 = vld [vmem:[#allocation3 + $0x48] sm:$0xff]
        %v2242 = vld [vmem:[#allocation3 + $0x50] sm:$0xff]
        %v2243 = vld [vmem:[#allocation3 + $0x58] sm:$0x3]
        %v2244 = vld [vmem:[#allocation3 + $0x60] sm:$0xff]
        %v2245 = vld [vmem:[#allocation3 + $0x68] sm:$0xff]
        %v2246 = vld [vmem:[#allocation3 + $0x70] sm:$0x3]
        %v2247 = vld [vmem:[#allocation3 + $0x78] sm:$0xff]
        %v2248 = vld [vmem:[#allocation3 + $0x80] sm:$0xff]
        %v2249 = vld [vmem:[#allocation3 + $0x88] sm:$0x3]
        %v2250 = vld [vmem:[#allocation3 + $0x90] sm:$0xff]
        %v2251 = vld [vmem:[#allocation3 + $0x98] sm:$0xff]
        %v2252 = vld [vmem:[#allocation3 + $0xa0] sm:$0x3]
        %v2253 = vld [vmem:[#allocation3 + $0xa8] sm:$0xff]
        %v2254 = vld [vmem:[#allocation3 + $0xb0] sm:$0xff]
        %v2255 = vld [vmem:[#allocation3 + $0xb8] sm:$0x3]
        %v2256 = vld [vmem:[#allocation3 + $0xc0] sm:$0xff]
        %v2257 = vld [vmem:[#allocation3 + $0xc8] sm:$0xff]
        %v2258 = vld [vmem:[#allocation3 + $0xd0] sm:$0x3]
        %v2259 = vld [vmem:[#allocation3 + $0xd8] sm:$0xff]
        %v2260 = vld [vmem:[#allocation3 + $0xe0] sm:$0xff]
        %v2261 = vld [vmem:[#allocation3 + $0xe8] sm:$0x3]
        %v2262 = vld [vmem:[#allocation3 + $0xf0] sm:$0xff]
        %v2263 = vld [vmem:[#allocation3 + $0xf8] sm:$0xff]
        %v2264 = vld [vmem:[#allocation3 + $0x100] sm:$0x3]
        %v2265 = vld [vmem:[#allocation3 + $0x108] sm:$0xff]
        %v2266 = vld [vmem:[#allocation3 + $0x110] sm:$0xff]
        %v2267 = vld [vmem:[#allocation3 + $0x118] sm:$0x3]
        %v2268 = vld [vmem:[#allocation3 + $0x120] sm:$0xff]
        %v2269 = vld [vmem:[#allocation3 + $0x128] sm:$0xff]
        %v2270 = vld [vmem:[#allocation3 + $0x130] sm:$0x3]
        %v2271 = vld [vmem:[#allocation3 + $0x138] sm:$0xff]
        %v2272 = vld [vmem:[#allocation3 + $0x140] sm:$0xff]
        %v2273 = vld [vmem:[#allocation3 + $0x148] sm:$0x3]
        %v2274 = vld [vmem:[#allocation3 + $0x150] sm:$0xff]
        %v2275 = vld [vmem:[#allocation3 + $0x158] sm:$0xff]
        %v2276 = vld [vmem:[#allocation3 + $0x160] sm:$0x3]
        %v2277 = vld [vmem:[#allocation3 + $0x168] sm:$0xff]
        %v2278 = vld [vmem:[#allocation3 + $0x170] sm:$0xff]
        %v2279 = vld [vmem:[#allocation3 + $0x178] sm:$0x3]
        %v2280 = vld [vmem:[#allocation3 + $0x180] sm:$0xff]
        %v2281 = vld [vmem:[#allocation3 + $0x188] sm:$0xff]
        %v2282 = vld [vmem:[#allocation3 + $0x190] sm:$0x3]
        %v2283 = vld [vmem:[#allocation3 + $0x198] sm:$0xff]
        %v2284 = vld [vmem:[#allocation3 + $0x1a0] sm:$0xff]
        %v2285 = vld [vmem:[#allocation3 + $0x1a8] sm:$0x3]
        %vm2334 = vcmask 1046528
        %v2335 = vrot.slane %v2232, 1
        %v2336 = vrot.slane %v2233, 1
        %v2337 = vsel %vm2334, %v2335, %v2336
        %v2338 = vrot.slane %v2234, 1
        %v2339 = vsel %vm2334, %v2336, %v2338
        %v2340 = vrot.slane %v2235, 1
        %v2341 = vrot.slane %v2236, 1
        %v2342 = vsel %vm2334, %v2340, %v2341
        %v2343 = vrot.slane %v2237, 1
        %v2344 = vsel %vm2334, %v2341, %v2343
        %v2345 = vrot.slane %v2238, 1
        %v2346 = vrot.slane %v2239, 1
        %v2347 = vsel %vm2334, %v2345, %v2346
        %v2348 = vrot.slane %v2240, 1
        %v2349 = vsel %vm2334, %v2346, %v2348
        %v2350 = vrot.slane %v2241, 1
        %v2351 = vrot.slane %v2242, 1
        %v2352 = vsel %vm2334, %v2350, %v2351
        %v2353 = vrot.slane %v2243, 1
        %v2354 = vsel %vm2334, %v2351, %v2353
        %v2355 = vrot.slane %v2244, 1
        %v2356 = vrot.slane %v2245, 1
        %v2357 = vsel %vm2334, %v2355, %v2356
        %v2358 = vrot.slane %v2246, 1
        %v2359 = vsel %vm2334, %v2356, %v2358
        %v2360 = vrot.slane %v2247, 1
        %v2361 = vrot.slane %v2248, 1
        %v2362 = vsel %vm2334, %v2360, %v2361
        %v2363 = vrot.slane %v2249, 1
        %v2364 = vsel %vm2334, %v2361, %v2363
        %v2365 = vrot.slane %v2250, 1
        %v2366 = vrot.slane %v2251, 1
        %v2367 = vsel %vm2334, %v2365, %v2366
        %v2368 = vrot.slane %v2252, 1
        %v2369 = vsel %vm2334, %v2366, %v2368
        %v2370 = vrot.slane %v2253, 1
        %v2371 = vrot.slane %v2254, 1
        %v2372 = vsel %vm2334, %v2370, %v2371
        %v2373 = vrot.slane %v2255, 1
        %v2374 = vsel %vm2334, %v2371, %v2373
        %v2375 = vrot.slane %v2256, 1
        %v2376 = vrot.slane %v2257, 1
        %v2377 = vsel %vm2334, %v2375, %v2376
        %v2378 = vrot.slane %v2258, 1
        %v2379 = vsel %vm2334, %v2376, %v2378
        %v2380 = vrot.slane %v2259, 1
        %v2381 = vrot.slane %v2260, 1
        %v2382 = vsel %vm2334, %v2380, %v2381
        %v2383 = vrot.slane %v2261, 1
        %v2384 = vsel %vm2334, %v2381, %v2383
        %v2385 = vrot.slane %v2262, 1
        %v2386 = vrot.slane %v2263, 1
        %v2387 = vsel %vm2334, %v2385, %v2386
        %v2388 = vrot.slane %v2264, 1
        %v2389 = vsel %vm2334, %v2386, %v2388
        %v2390 = vrot.slane %v2265, 1
        %v2391 = vrot.slane %v2266, 1
        %v2392 = vsel %vm2334, %v2390, %v2391
        %v2393 = vrot.slane %v2267, 1
        %v2394 = vsel %vm2334, %v2391, %v2393
        %v2395 = vrot.slane %v2268, 1
        %v2396 = vrot.slane %v2269, 1
        %v2397 = vsel %vm2334, %v2395, %v2396
        %v2398 = vrot.slane %v2270, 1
        %v2399 = vsel %vm2334, %v2396, %v2398
        %v2400 = vrot.slane %v2271, 1
        %v2401 = vrot.slane %v2272, 1
        %v2402 = vsel %vm2334, %v2400, %v2401
        %v2403 = vrot.slane %v2273, 1
        %v2404 = vsel %vm2334, %v2401, %v2403
        %v2405 = vrot.slane %v2274, 1
        %v2406 = vrot.slane %v2275, 1
        %v2407 = vsel %vm2334, %v2405, %v2406
        %v2408 = vrot.slane %v2276, 1
        %v2409 = vsel %vm2334, %v2406, %v2408
        %v2410 = vrot.slane %v2277, 1
        %v2411 = vrot.slane %v2278, 1
        %v2412 = vsel %vm2334, %v2410, %v2411
        %v2413 = vrot.slane %v2279, 1
        %v2414 = vsel %vm2334, %v2411, %v2413
        %v2447 = vrot.slane %v2232, 2
        %v2448 = vrot.slane %v2233, 2
        %v2449 = vsel %vm543, %v2447, %v2448
        %v2450 = vrot.slane %v2234, 2
        %v2451 = vsel %vm543, %v2448, %v2450
        %v2452 = vrot.slane %v2235, 2
        %v2453 = vrot.slane %v2236, 2
        %v2454 = vsel %vm543, %v2452, %v2453
        %v2455 = vrot.slane %v2237, 2
        %v2456 = vsel %vm543, %v2453, %v2455
        %v2457 = vrot.slane %v2238, 2
        %v2458 = vrot.slane %v2239, 2
        %v2459 = vsel %vm543, %v2457, %v2458
        %v2460 = vrot.slane %v2240, 2
        %v2461 = vsel %vm543, %v2458, %v2460
        %v2462 = vrot.slane %v2241, 2
        %v2463 = vrot.slane %v2242, 2
        %v2464 = vsel %vm543, %v2462, %v2463
        %v2465 = vrot.slane %v2243, 2
        %v2466 = vsel %vm543, %v2463, %v2465
        %v2467 = vrot.slane %v2244, 2
        %v2468 = vrot.slane %v2245, 2
        %v2469 = vsel %vm543, %v2467, %v2468
        %v2470 = vrot.slane %v2246, 2
        %v2471 = vsel %vm543, %v2468, %v2470
        %v2472 = vrot.slane %v2247, 2
        %v2473 = vrot.slane %v2248, 2
        %v2474 = vsel %vm543, %v2472, %v2473
        %v2475 = vrot.slane %v2249, 2
        %v2476 = vsel %vm543, %v2473, %v2475
        %v2477 = vrot.slane %v2250, 2
        %v2478 = vrot.slane %v2251, 2
        %v2479 = vsel %vm543, %v2477, %v2478
        %v2480 = vrot.slane %v2252, 2
        %v2481 = vsel %vm543, %v2478, %v2480
        %v2482 = vrot.slane %v2253, 2
        %v2483 = vrot.slane %v2254, 2
        %v2484 = vsel %vm543, %v2482, %v2483
        %v2485 = vrot.slane %v2255, 2
        %v2486 = vsel %vm543, %v2483, %v2485
        %v2487 = vrot.slane %v2256, 2
        %v2488 = vrot.slane %v2257, 2
        %v2489 = vsel %vm543, %v2487, %v2488
        %v2490 = vrot.slane %v2258, 2
        %v2491 = vsel %vm543, %v2488, %v2490
        %v2492 = vrot.slane %v2259, 2
        %v2493 = vrot.slane %v2260, 2
        %v2494 = vsel %vm543, %v2492, %v2493
        %v2495 = vrot.slane %v2261, 2
        %v2496 = vsel %vm543, %v2493, %v2495
        %v2497 = vrot.slane %v2262, 2
        %v2498 = vrot.slane %v2263, 2
        %v2499 = vsel %vm543, %v2497, %v2498
        %v2500 = vrot.slane %v2264, 2
        %v2501 = vsel %vm543, %v2498, %v2500
        %v2502 = vrot.slane %v2265, 2
        %v2503 = vrot.slane %v2266, 2
        %v2504 = vsel %vm543, %v2502, %v2503
        %v2505 = vrot.slane %v2267, 2
        %v2506 = vsel %vm543, %v2503, %v2505
        %v2507 = vrot.slane %v2268, 2
        %v2508 = vrot.slane %v2269, 2
        %v2509 = vsel %vm543, %v2507, %v2508
        %v2510 = vrot.slane %v2270, 2
        %v2511 = vsel %vm543, %v2508, %v2510
        %v2512 = vrot.slane %v2271, 2
        %v2513 = vrot.slane %v2272, 2
        %v2514 = vsel %vm543, %v2512, %v2513
        %v2515 = vrot.slane %v2273, 2
        %v2516 = vsel %vm543, %v2513, %v2515
        %v2517 = vrot.slane %v2274, 2
        %v2518 = vrot.slane %v2275, 2
        %v2519 = vsel %vm543, %v2517, %v2518
        %v2520 = vrot.slane %v2276, 2
        %v2521 = vsel %vm543, %v2518, %v2520
        %v2522 = vrot.slane %v2277, 2
        %v2523 = vrot.slane %v2278, 2
        %v2524 = vsel %vm543, %v2522, %v2523
        %v2525 = vrot.slane %v2279, 2
        %v2526 = vsel %vm543, %v2523, %v2525
        %v2562 = vrot.slane %v2280, 1
        %v2563 = vrot.slane %v2281, 1
        %v2564 = vsel %vm2334, %v2562, %v2563
        %v2565 = vrot.slane %v2282, 1
        %v2566 = vsel %vm2334, %v2563, %v2565
        %v2569 = vrot.slane %v2280, 2
        %v2570 = vrot.slane %v2281, 2
        %v2571 = vsel %vm543, %v2569, %v2570
        %v2572 = vrot.slane %v2282, 2
        %v2573 = vsel %vm543, %v2570, %v2572
        %v2579 = vrot.slane %v2283, 1
        %v2580 = vrot.slane %v2284, 1
        %v2581 = vsel %vm2334, %v2579, %v2580
        %v2582 = vrot.slane %v2285, 1
        %v2583 = vsel %vm2334, %v2580, %v2582
        %v2586 = vrot.slane %v2283, 2
        %v2587 = vrot.slane %v2284, 2
        %v2588 = vsel %vm543, %v2586, %v2587
        %v2589 = vrot.slane %v2285, 2
        %v2590 = vsel %vm543, %v2587, %v2589
        %v2593 = vld [vmem:[#allocation9] sm:$0xff]
        %v2594 = vld [vmem:[#allocation9 + $0x8] sm:$0xff]
        %v2595 = vld [vmem:[#allocation9 + $0x10] sm:$0xff]
        %v2596 = vld [vmem:[#allocation9 + $0x18] sm:$0xff]
        %v2597 = vld [vmem:[#allocation9 + $0x20] sm:$0xff]
        %v2598 = vld [vmem:[#allocation9 + $0x28] sm:$0xff]
        %v2599 = vld [vmem:[#allocation9 + $0x30] sm:$0xff]
        %v2600 = vld [vmem:[#allocation9 + $0x38] sm:$0xff]
        %v2601 = vld [vmem:[#allocation9 + $0x40] sm:$0xff]
        %v2602 = vld [vmem:[#allocation9 + $0x48] sm:$0xff]
        %v2603 = vld [vmem:[#allocation9 + $0x50] sm:$0xff]
        %v2604 = vld [vmem:[#allocation9 + $0x58] sm:$0xff]
        %v2605 = vld [vmem:[#allocation9 + $0x60] sm:$0xff]
        %v2606 = vld [vmem:[#allocation9 + $0x68] sm:$0xff]
        %v2607 = vld [vmem:[#allocation9 + $0x70] sm:$0xff]
        %v2608 = vld [vmem:[#allocation9 + $0x78] sm:$0xff]
        %v2609 = vld [vmem:[#allocation9 + $0x80] sm:$0xff]
        %v2610 = vld [vmem:[#allocation9 + $0x88] sm:$0xff]
        %v2611 = vld [vmem:[#allocation9 + $0x90] sm:$0xff]
        %v2612 = vld [vmem:[#allocation9 + $0x98] sm:$0xff]
        %v2613 = vld [vmem:[#allocation9 + $0xa0] sm:$0xff]
        %v2614 = vld [vmem:[#allocation9 + $0xa8] sm:$0xff]
        %v2615 = vld [vmem:[#allocation9 + $0xb0] sm:$0xff]
        %v2616 = vld [vmem:[#allocation9 + $0xb8] sm:$0xff]
        %v2617 = vld [vmem:[#allocation9 + $0xc0] sm:$0xff]
        %v2618 = vld [vmem:[#allocation9 + $0xc8] sm:$0xff]
        %v2619 = vld [vmem:[#allocation9 + $0xd0] sm:$0xff]
        %v2620 = vld [vmem:[#allocation9 + $0xd8] sm:$0xff]
        %v2621 = vld [vmem:[#allocation9 + $0xe0] sm:$0xff]
        %v2622 = vld [vmem:[#allocation9 + $0xe8] sm:$0xff]
        %v2623 = vld [vmem:[#allocation9 + $0xf0] sm:$0xff]
        %v2624 = vld [vmem:[#allocation9 + $0xf8] sm:$0xff]
        %v2625 = vld [vmem:[#allocation9 + $0x100] sm:$0xff]
        %v2626 = vld [vmem:[#allocation9 + $0x108] sm:$0xff]
        %v2627 = vld [vmem:[#allocation9 + $0x110] sm:$0xff]
        %v2628 = vld [vmem:[#allocation9 + $0x118] sm:$0xff]
        %v2629 = vld [vmem:[#allocation9 + $0x120] sm:$0xff]
        %v2630 = vld [vmem:[#allocation9 + $0x128] sm:$0xff]
        %v2631 = vld [vmem:[#allocation9 + $0x130] sm:$0xff]
        %v2632 = vld [vmem:[#allocation9 + $0x138] sm:$0xff]
        %v2633 = vld [vmem:[#allocation9 + $0x140] sm:$0xff]
        %v2634 = vld [vmem:[#allocation9 + $0x148] sm:$0xff]
        %v2635 = vld [vmem:[#allocation9 + $0x150] sm:$0xff]
        %v2636 = vld [vmem:[#allocation9 + $0x158] sm:$0xff]
        %v2637 = vld [vmem:[#allocation9 + $0x160] sm:$0xff]
        %v2638 = vld [vmem:[#allocation9 + $0x168] sm:$0xff]
        %v2639 = vld [vmem:[#allocation9 + $0x170] sm:$0xff]
        %v2640 = vld [vmem:[#allocation9 + $0x178] sm:$0xff]
        %v2641 = vld [vmem:[#allocation9 + $0x180] sm:$0xff]
        %v2642 = vld [vmem:[#allocation9 + $0x188] sm:$0xff]
        %v2643 = vld [vmem:[#allocation9 + $0x190] sm:$0xff]
        %v2644 = vld [vmem:[#allocation9 + $0x198] sm:$0xff]
        %v2645 = vld [vmem:[#allocation9 + $0x1a0] sm:$0xff]
        %v2646 = vld [vmem:[#allocation9 + $0x1a8] sm:$0xff]
        %v2647 = vld [vmem:[#allocation9 + $0x1b0] sm:$0xff]
        %v2648 = vld [vmem:[#allocation9 + $0x1b8] sm:$0xff]
        %v2649 = vld [vmem:[#allocation9 + $0x1c0] sm:$0xff]
        %v2650 = vld [vmem:[#allocation9 + $0x1c8] sm:$0xff]
        %v2651 = vld [vmem:[#allocation9 + $0x1d0] sm:$0xff]
        %v2652 = vld [vmem:[#allocation9 + $0x1d8] sm:$0xff]
        %v2653 = vld [vmem:[#allocation9 + $0x1e0] sm:$0xff]
        %v2654 = vld [vmem:[#allocation9 + $0x1e8] sm:$0xff]
        %v2655 = vld [vmem:[#allocation9 + $0x1f0] sm:$0xff]
        %v2656 = vld [vmem:[#allocation9 + $0x1f8] sm:$0xff]
        %v2657 = vld [vmem:[#allocation9 + $0x200] sm:$0xff]
        %v2658 = vld [vmem:[#allocation9 + $0x208] sm:$0xff]
        %v2659 = vld [vmem:[#allocation9 + $0x210] sm:$0xff]
        %v2660 = vld [vmem:[#allocation9 + $0x218] sm:$0xff]
        %v2661 = vld [vmem:[#allocation9 + $0x220] sm:$0xff]
        %v2662 = vld [vmem:[#allocation9 + $0x228] sm:$0xff]
        %v2663 = vld [vmem:[#allocation9 + $0x230] sm:$0xff]
        %v2664 = vld [vmem:[#allocation9 + $0x238] sm:$0xff]
        %v2665 = vld [vmem:[#allocation9 + $0x240] sm:$0xff]
        %v2666 = vld [vmem:[#allocation9 + $0x248] sm:$0xff]
        %v2667 = vld [vmem:[#allocation9 + $0x250] sm:$0xff]
        %v2668 = vld [vmem:[#allocation9 + $0x258] sm:$0xff]
        %v2669 = vld [vmem:[#allocation9 + $0x260] sm:$0xff]
        %v2670 = vld [vmem:[#allocation9 + $0x268] sm:$0xff]
        %v2671 = vld [vmem:[#allocation9 + $0x270] sm:$0xff]
        %v2672 = vld [vmem:[#allocation9 + $0x278] sm:$0xff]
        %v2673 = vld [vmem:[#allocation9 + $0x280] sm:$0xff]
        %v2674 = vld [vmem:[#allocation9 + $0x288] sm:$0xff]
        %v2675 = vld [vmem:[#allocation9 + $0x290] sm:$0xff]
        %v2676 = vld [vmem:[#allocation9 + $0x298] sm:$0xff]
        %v2677 = vld [vmem:[#allocation9 + $0x2a0] sm:$0xff]
        %v2678 = vld [vmem:[#allocation9 + $0x2a8] sm:$0xff]
        %v2679 = vld [vmem:[#allocation9 + $0x2b0] sm:$0xff]
        %v2680 = vld [vmem:[#allocation9 + $0x2b8] sm:$0xff]
        %v2681 = vld [vmem:[#allocation9 + $0x2c0] sm:$0xff]
        %v2682 = vld [vmem:[#allocation9 + $0x2c8] sm:$0xff]
        %v2683 = vld [vmem:[#allocation9 + $0x2d0] sm:$0xff]
        %v2684 = vld [vmem:[#allocation9 + $0x2d8] sm:$0xff]
        %v2685 = vld [vmem:[#allocation9 + $0x2e0] sm:$0xff]
        %v2686 = vld [vmem:[#allocation9 + $0x2e8] sm:$0xff]
        %v2687 = vld [vmem:[#allocation9 + $0x2f0] sm:$0xff]
        %v2688 = vld [vmem:[#allocation9 + $0x2f8] sm:$0xff]
        %v2689 = vld [vmem:[#allocation9 + $0x300] sm:$0xff]
        %v2690 = vld [vmem:[#allocation9 + $0x308] sm:$0xff]
        %v2691 = vld [vmem:[#allocation9 + $0x310] sm:$0xff]
        %v2692 = vld [vmem:[#allocation9 + $0x318] sm:$0xff]
        %v2693 = vld [vmem:[#allocation9 + $0x320] sm:$0xff]
        %v2694 = vld [vmem:[#allocation9 + $0x328] sm:$0xff]
        %v2695 = vld [vmem:[#allocation9 + $0x330] sm:$0xff]
        %v2696 = vld [vmem:[#allocation9 + $0x338] sm:$0xff]
        %v2697 = vld [vmem:[#allocation9 + $0x340] sm:$0xff]
        %v2698 = vld [vmem:[#allocation9 + $0x348] sm:$0xff]
        %v2699 = vld [vmem:[#allocation9 + $0x350] sm:$0xff]
        %v2700 = vld [vmem:[#allocation9 + $0x358] sm:$0xff]
        %v2701 = vld [vmem:[#allocation9 + $0x360] sm:$0xff]
        %v2702 = vld [vmem:[#allocation9 + $0x368] sm:$0xff]
        %v2703 = vld [vmem:[#allocation9 + $0x370] sm:$0xff]
        %v2704 = vld [vmem:[#allocation9 + $0x378] sm:$0xff]
        %v2705 = vld [vmem:[#allocation9 + $0x380] sm:$0xff]
        %v2706 = vld [vmem:[#allocation9 + $0x388] sm:$0xff]
        %v2707 = vld [vmem:[#allocation9 + $0x390] sm:$0xff]
        %v2708 = vld [vmem:[#allocation9 + $0x398] sm:$0xff]
        %v2709 = vld [vmem:[#allocation9 + $0x3a0] sm:$0xff]
        %v2710 = vld [vmem:[#allocation9 + $0x3a8] sm:$0xff]
        %v2711 = vld [vmem:[#allocation9 + $0x3b0] sm:$0xff]
        %v2712 = vld [vmem:[#allocation9 + $0x3b8] sm:$0xff]
        %v2713 = vld [vmem:[#allocation9 + $0x3c0] sm:$0xff]
        %v2714 = vld [vmem:[#allocation9 + $0x3c8] sm:$0xff]
        %v2715 = vld [vmem:[#allocation9 + $0x3d0] sm:$0xff]
        %v2716 = vld [vmem:[#allocation9 + $0x3d8] sm:$0xff]
        %v2717 = vld [vmem:[#allocation9 + $0x3e0] sm:$0xff]
        %v2718 = vld [vmem:[#allocation9 + $0x3e8] sm:$0xff]
        %v2719 = vld [vmem:[#allocation9 + $0x3f0] sm:$0xff]
        %v2720 = vld [vmem:[#allocation9 + $0x3f8] sm:$0xff]
        %v2721 = vld [vmem:[#allocation9 + $0x400] sm:$0xff]
        %v2722 = vld [vmem:[#allocation9 + $0x408] sm:$0xff]
        %v2723 = vld [vmem:[#allocation9 + $0x410] sm:$0xff]
        %v2724 = vld [vmem:[#allocation9 + $0x418] sm:$0xff]
        %v2725 = vld [vmem:[#allocation9 + $0x420] sm:$0xff]
        %v2726 = vld [vmem:[#allocation9 + $0x428] sm:$0xff]
        %v2727 = vld [vmem:[#allocation9 + $0x430] sm:$0xff]
        %v2728 = vld [vmem:[#allocation9 + $0x438] sm:$0xff]
        %v2729 = vld [vmem:[#allocation9 + $0x440] sm:$0xff]
        %v2730 = vld [vmem:[#allocation9 + $0x448] sm:$0xff]
        %v2731 = vld [vmem:[#allocation9 + $0x450] sm:$0xff]
        %v2732 = vld [vmem:[#allocation9 + $0x458] sm:$0xff]
        %v2733 = vld [vmem:[#allocation9 + $0x460] sm:$0xff]
        %v2734 = vld [vmem:[#allocation9 + $0x468] sm:$0xff]
        %v2735 = vld [vmem:[#allocation9 + $0x470] sm:$0xff]
        %v2736 = vld [vmem:[#allocation9 + $0x478] sm:$0xff]
        %v2737 = vld [vmem:[%s4] sm:$0x1]
        %v2739 = vlaneseq
        %v2740 = vshrl.u32 %v2739, 7
        %v2741 = vsub.s32 0, %v2740
        %v2742 = vrot.slane %v2737, %v2741
        %2744 = vmatprep.subr.mxu0 0.0
        %2745 = vmatpush1.msra.mxu0 %v2593
        %2746 = vmatprep.subr.mxu0 0.0
        %2747 = vmatpush1.msra.mxu0 %v2594
        %2748 = vmatprep.subr.mxu0 0.0
        %2749 = vmatpush1.msra.mxu0 %v2595
        %2750 = vmatprep.subr.mxu0 0.0
        %2751 = vmatpush1.msra.mxu0 %v2596
        %2752 = vmatprep.subr.mxu0 0.0
        %2753 = vmatpush1.msra.mxu0 %v2597
        %2754 = vmatprep.subr.mxu0 0.0
        %2755 = vmatpush1.msra.mxu0 %v2598
        %2756 = vmatprep.subr.mxu0 0.0
        %2757 = vmatpush1.msra.mxu0 %v2599
        %2758 = vmatprep.subr.mxu0 0.0
        %2759 = vmatpush1.msra.mxu0 %v2600
        %2760 = vmatprep.subr.mxu0 0.0
        %2761 = vmatpush1.msra.mxu0 %v2601
        %2762 = vmatprep.subr.mxu0 0.0
        %2763 = vmatpush1.msra.mxu0 %v2602
        %2764 = vmatprep.subr.mxu0 0.0
        %2765 = vmatpush1.msra.mxu0 %v2603
        %2766 = vmatprep.subr.mxu0 0.0
        %2767 = vmatpush1.msra.mxu0 %v2604
        %2768 = vmatprep.subr.mxu0 0.0
        %2769 = vmatpush1.msra.mxu0 %v2605
        %2770 = vmatprep.subr.mxu0 0.0
        %2771 = vmatpush1.msra.mxu0 %v2606
        %2772 = vmatprep.subr.mxu0 0.0
        %2773 = vmatpush1.msra.mxu0 %v2607
        %2774 = vmatprep.subr.mxu0 0.0
        %2775 = vmatpush1.msra.mxu0 %v2608
        %2776 = vmatprep.subr.mxu0 0.0
        %2777 = vmatpush1.msra.mxu0 %v2609
        %2778 = vmatprep.subr.mxu0 0.0
        %2779 = vmatpush1.msra.mxu0 %v2610
        %2780 = vmatprep.subr.mxu0 0.0
        %2781 = vmatpush1.msra.mxu0 %v2611
        %2782 = vmatprep.subr.mxu0 0.0
        %2783 = vmatpush1.msra.mxu0 %v2612
        %2784 = vmatprep.subr.mxu0 0.0
        %2785 = vmatpush1.msra.mxu0 %v2613
        %2786 = vmatprep.subr.mxu0 0.0
        %2787 = vmatpush1.msra.mxu0 %v2614
        %2788 = vmatprep.subr.mxu0 0.0
        %2789 = vmatpush1.msra.mxu0 %v2615
        %2790 = vmatprep.subr.mxu0 0.0
        %2791 = vmatpush1.msra.mxu0 %v2616
        %2792 = vmatprep.subr.mxu0 0.0
        %2793 = vmatpush1.msra.mxu0 %v2617
        %2794 = vmatprep.subr.mxu0 0.0
        %2795 = vmatpush1.msra.mxu0 %v2618
        %2796 = vmatprep.subr.mxu0 0.0
        %2797 = vmatpush1.msra.mxu0 %v2619
        %2798 = vmatprep.subr.mxu0 0.0
        %2799 = vmatpush1.msra.mxu0 %v2620
        %2800 = vmatprep.subr.mxu0 0.0
        %2801 = vmatpush1.msra.mxu0 %v2621
        %2802 = vmatprep.subr.mxu0 0.0
        %2803 = vmatpush1.msra.mxu0 %v2622
        %2804 = vmatprep.subr.mxu0 0.0
        %2805 = vmatpush1.msra.mxu0 %v2623
        %2806 = vmatprep.subr.mxu0 0.0
        %2807 = vmatpush1.msra.mxu0 %v2624
        %2808 = vmatprep.mubr.f32.mxu0 %v2337
        %2809 = vmatmul.mubr.f32.gmra.mrb[0].mxu0 %v2232
        %v2810 = vpop.f32.mrb[0].mxu0
        %v2811 = vadd.f32 %v2742, %v2810
        %v2812 = vpop.f32.mrb[0].mxu0
        %2813 = vmatprep.mubr.f32.mxu0 %v2339
        %2814 = vmatmul.mubr.f32.gmra.mrb[0].mxu0 %v2233
        %v2815 = vpop.f32.mrb[0].mxu0
        %v2816 = vadd.f32 %v2742, %v2815
        %v2817 = vpop.f32.mrb[0].mxu0
        %2818 = vmatprep.mubr.f32.mxu0 %v2342
        %2819 = vmatmul.mubr.f32.gmra.mrb[0].mxu0 %v2235
        %v2820 = vpop.f32.mrb[0].mxu0
        %v2821 = vadd.f32 %v2742, %v2820
        %v2822 = vpop.f32.mrb[0].mxu0
        %2823 = vmatprep.mubr.f32.mxu0 %v2344
        %2824 = vmatmul.mubr.f32.gmra.mrb[0].mxu0 %v2236
        %v2825 = vpop.f32.mrb[0].mxu0
        %v2826 = vadd.f32 %v2742, %v2825
        %v2827 = vpop.f32.mrb[0].mxu0
        %2828 = vmatprep.mubr.f32.mxu0 %v2347
        %2829 = vmatmul.mubr.f32.gmra.mrb[0].mxu0 %v2238
        %v2830 = vpop.f32.mrb[0].mxu0
        %v2831 = vadd.f32 %v2742, %v2830
        %v2832 = vpop.f32.mrb[0].mxu0
        %2833 = vmatprep.mubr.f32.mxu0 %v2349
        %2834 = vmatmul.mubr.f32.gmra.mrb[0].mxu0 %v2239
        %v2835 = vpop.f32.mrb[0].mxu0
        %v2836 = vadd.f32 %v2742, %v2835
        %v2837 = vpop.f32.mrb[0].mxu0
        %2838 = vmatprep.mubr.f32.mxu0 %v2352
        %2839 = vmatmul.mubr.f32.gmra.mrb[0].mxu0 %v2241
        %v2840 = vpop.f32.mrb[0].mxu0
        %v2841 = vadd.f32 %v2742, %v2840
        %v2842 = vpop.f32.mrb[0].mxu0
        %2843 = vmatprep.mubr.f32.mxu0 %v2354
        %2844 = vmatmul.mubr.f32.gmra.mrb[0].mxu0 %v2242
        %v2845 = vpop.f32.mrb[0].mxu0
        %v2846 = vadd.f32 %v2742, %v2845
        %v2847 = vpop.f32.mrb[0].mxu0
        %2848 = vmatprep.mubr.f32.mxu0 %v2357
        %2849 = vmatmul.mubr.f32.gmra.mrb[0].mxu0 %v2244
        %v2850 = vpop.f32.mrb[0].mxu0
        %v2851 = vadd.f32 %v2742, %v2850
        %v2852 = vpop.f32.mrb[0].mxu0
        %2853 = vmatprep.mubr.f32.mxu0 %v2359
        %2854 = vmatmul.mubr.f32.gmra.mrb[0].mxu0 %v2245
        %v2855 = vpop.f32.mrb[0].mxu0
        %v2856 = vadd.f32 %v2742, %v2855
        %v2857 = vpop.f32.mrb[0].mxu0
        %2858 = vmatprep.mubr.f32.mxu0 %v2362
        %2859 = vmatmul.mubr.f32.gmra.mrb[0].mxu0 %v2247
        %v2860 = vpop.f32.mrb[0].mxu0
        %v2861 = vadd.f32 %v2742, %v2860
        %v2862 = vpop.f32.mrb[0].mxu0
        %2863 = vmatprep.mubr.f32.mxu0 %v2364
        %2864 = vmatmul.mubr.f32.gmra.mrb[0].mxu0 %v2248
        %v2865 = vpop.f32.mrb[0].mxu0
        %v2866 = vadd.f32 %v2742, %v2865
        %v2867 = vpop.f32.mrb[0].mxu0
        %2868 = vmatprep.mubr.f32.mxu0 %v2367
        %2869 = vmatmul.mubr.f32.gmra.mrb[0].mxu0 %v2250
        %v2870 = vpop.f32.mrb[0].mxu0
        %v2871 = vadd.f32 %v2742, %v2870
        %v2872 = vpop.f32.mrb[0].mxu0
        %2873 = vmatprep.mubr.f32.mxu0 %v2369
        %2874 = vmatmul.mubr.f32.gmra.mrb[0].mxu0 %v2251
        %v2875 = vpop.f32.mrb[0].mxu0
        %v2876 = vadd.f32 %v2742, %v2875
        %v2877 = vpop.f32.mrb[0].mxu0
        %2878 = vmatprep.mubr.f32.mxu0 %v2372
        %2879 = vmatmul.mubr.f32.gmra.mrb[0].mxu0 %v2253
        %v2880 = vpop.f32.mrb[0].mxu0
        %v2881 = vadd.f32 %v2742, %v2880
        %v2882 = vpop.f32.mrb[0].mxu0
        %2883 = vmatprep.mubr.f32.mxu0 %v2374
        %2884 = vmatmul.mubr.f32.gmra.mrb[0].mxu0 %v2254
        %v2885 = vpop.f32.mrb[0].mxu0
        %v2886 = vadd.f32 %v2742, %v2885
        %v2887 = vpop.f32.mrb[0].mxu0
        %2888 = vmatprep.mubr.f32.mxu0 %v2377
        %2889 = vmatmul.mubr.f32.gmra.mrb[0].mxu0 %v2256
        %v2890 = vpop.f32.mrb[0].mxu0
        %v2891 = vadd.f32 %v2742, %v2890
        %v2892 = vpop.f32.mrb[0].mxu0
        %2893 = vmatprep.mubr.f32.mxu0 %v2379
        %2894 = vmatmul.mubr.f32.gmra.mrb[0].mxu0 %v2257
        %v2895 = vpop.f32.mrb[0].mxu0
        %v2896 = vadd.f32 %v2742, %v2895
        %v2897 = vpop.f32.mrb[0].mxu0
        %2898 = vmatprep.mubr.f32.mxu0 %v2382
        %2899 = vmatmul.mubr.f32.gmra.mrb[0].mxu0 %v2259
        %v2900 = vpop.f32.mrb[0].mxu0
        %v2901 = vadd.f32 %v2742, %v2900
        %v2902 = vpop.f32.mrb[0].mxu0
        %2903 = vmatprep.mubr.f32.mxu0 %v2384
        %2904 = vmatmul.mubr.f32.gmra.mrb[0].mxu0 %v2260
        %v2905 = vpop.f32.mrb[0].mxu0
        %v2906 = vadd.f32 %v2742, %v2905
        %v2907 = vpop.f32.mrb[0].mxu0
        %2908 = vmatprep.mubr.f32.mxu0 %v2387
        %2909 = vmatmul.mubr.f32.gmra.mrb[0].mxu0 %v2262
        %v2910 = vpop.f32.mrb[0].mxu0
        %v2911 = vadd.f32 %v2742, %v2910
        %v2912 = vpop.f32.mrb[0].mxu0
        %2913 = vmatprep.mubr.f32.mxu0 %v2389
        %2914 = vmatmul.mubr.f32.gmra.mrb[0].mxu0 %v2263
        %v2915 = vpop.f32.mrb[0].mxu0
        %v2916 = vadd.f32 %v2742, %v2915
        %v2917 = vpop.f32.mrb[0].mxu0
        %2918 = vmatprep.mubr.f32.mxu0 %v2392
        %2919 = vmatmul.mubr.f32.gmra.mrb[0].mxu0 %v2265
        %v2920 = vpop.f32.mrb[0].mxu0
        %v2921 = vadd.f32 %v2742, %v2920
        %v2922 = vpop.f32.mrb[0].mxu0
        %2923 = vmatprep.mubr.f32.mxu0 %v2394
        %2924 = vmatmul.mubr.f32.gmra.mrb[0].mxu0 %v2266
        %v2925 = vpop.f32.mrb[0].mxu0
        %v2926 = vadd.f32 %v2742, %v2925
        %v2927 = vpop.f32.mrb[0].mxu0
        %2928 = vmatprep.mubr.f32.mxu0 %v2397
        %2929 = vmatmul.mubr.f32.gmra.mrb[0].mxu0 %v2268
        %v2930 = vpop.f32.mrb[0].mxu0
        %v2931 = vadd.f32 %v2742, %v2930
        %v2932 = vpop.f32.mrb[0].mxu0
        %2933 = vmatprep.mubr.f32.mxu0 %v2399
        %2934 = vmatmul.mubr.f32.gmra.mrb[0].mxu0 %v2269
        %v2935 = vpop.f32.mrb[0].mxu0
        %v2936 = vadd.f32 %v2742, %v2935
        %v2937 = vpop.f32.mrb[0].mxu0
        %2938 = vmatprep.mubr.f32.mxu0 %v2402
        %2939 = vmatmul.mubr.f32.gmra.mrb[0].mxu0 %v2271
        %v2940 = vpop.f32.mrb[0].mxu0
        %v2941 = vadd.f32 %v2742, %v2940
        %v2942 = vpop.f32.mrb[0].mxu0
        %2943 = vmatprep.mubr.f32.mxu0 %v2404
        %2944 = vmatmul.mubr.f32.gmra.mrb[0].mxu0 %v2272
        %v2945 = vpop.f32.mrb[0].mxu0
        %v2946 = vadd.f32 %v2742, %v2945
        %v2947 = vpop.f32.mrb[0].mxu0
        %2948 = vmatprep.mubr.f32.mxu0 %v2407
        %2949 = vmatmul.mubr.f32.gmra.mrb[0].mxu0 %v2274
        %v2950 = vpop.f32.mrb[0].mxu0
        %v2951 = vadd.f32 %v2742, %v2950
        %v2952 = vpop.f32.mrb[0].mxu0
        %2953 = vmatprep.mubr.f32.mxu0 %v2409
        %2954 = vmatmul.mubr.f32.gmra.mrb[0].mxu0 %v2275
        %v2955 = vpop.f32.mrb[0].mxu0
        %v2956 = vadd.f32 %v2742, %v2955
        %v2957 = vpop.f32.mrb[0].mxu0
        %2958 = vmatprep.mubr.f32.mxu0 %v2412
        %2959 = vmatmul.mubr.f32.gmra.mrb[0].mxu0 %v2277
        %v2960 = vpop.f32.mrb[0].mxu0
        %v2961 = vadd.f32 %v2742, %v2960
        %v2962 = vpop.f32.mrb[0].mxu0
        %2963 = vmatprep.mubr.f32.mxu0 %v2414
        %2964 = vmatmul.mubr.f32.gmra.mrb[0].mxu0 %v2278
        %v2965 = vpop.f32.mrb[0].mxu0
        %v2966 = vadd.f32 %v2742, %v2965
        %v2967 = vpop.f32.mrb[0].mxu0
        %2968 = vdwg.mxu0
        %2969 = vmatprep.subr.mxu0 0.0
        %2970 = vmatpush1.msra.mxu0 %v2625
        %2971 = vmatprep.subr.mxu0 0.0
        %2972 = vmatpush1.msra.mxu0 %v2626
        %2973 = vmatprep.subr.mxu0 0.0
        %2974 = vmatpush1.msra.mxu0 %v2627
        %2975 = vmatprep.subr.mxu0 0.0
        %2976 = vmatpush1.msra.mxu0 %v2628
        %2977 = vmatprep.subr.mxu0 0.0
        %2978 = vmatpush1.msra.mxu0 %v2629
        %2979 = vmatprep.subr.mxu0 0.0
        %2980 = vmatpush1.msra.mxu0 %v2630
        %2981 = vmatprep.subr.mxu0 0.0
        %2982 = vmatpush1.msra.mxu0 %v2631
        %2983 = vmatprep.subr.mxu0 0.0
        %2984 = vmatpush1.msra.mxu0 %v2632
        %2985 = vmatprep.subr.mxu0 0.0
        %2986 = vmatpush1.msra.mxu0 %v2633
        %2987 = vmatprep.subr.mxu0 0.0
        %2988 = vmatpush1.msra.mxu0 %v2634
        %2989 = vmatprep.subr.mxu0 0.0
        %2990 = vmatpush1.msra.mxu0 %v2635
        %2991 = vmatprep.subr.mxu0 0.0
        %2992 = vmatpush1.msra.mxu0 %v2636
        %2993 = vmatprep.subr.mxu0 0.0
        %2994 = vmatpush1.msra.mxu0 %v2637
        %2995 = vmatprep.subr.mxu0 0.0
        %2996 = vmatpush1.msra.mxu0 %v2638
        %2997 = vmatprep.subr.mxu0 0.0
        %2998 = vmatpush1.msra.mxu0 %v2639
        %2999 = vmatprep.subr.mxu0 0.0
        %3000 = vmatpush1.msra.mxu0 %v2640
        %3001 = vmatprep.subr.mxu0 0.0
        %3002 = vmatpush1.msra.mxu0 %v2641
        %3003 = vmatprep.subr.mxu0 0.0
        %3004 = vmatpush1.msra.mxu0 %v2642
        %3005 = vmatprep.subr.mxu0 0.0
        %3006 = vmatpush1.msra.mxu0 %v2643
        %3007 = vmatprep.subr.mxu0 0.0
        %3008 = vmatpush1.msra.mxu0 %v2644
        %3009 = vmatprep.subr.mxu0 0.0
        %3010 = vmatpush1.msra.mxu0 %v2645
        %3011 = vmatprep.subr.mxu0 0.0
        %3012 = vmatpush1.msra.mxu0 %v2646
        %3013 = vmatprep.subr.mxu0 0.0
        %3014 = vmatpush1.msra.mxu0 %v2647
        %3015 = vmatprep.subr.mxu0 0.0
        %3016 = vmatpush1.msra.mxu0 %v2648
        %3017 = vmatprep.subr.mxu0 0.0
        %3018 = vmatpush1.msra.mxu0 %v2649
        %3019 = vmatprep.subr.mxu0 0.0
        %3020 = vmatpush1.msra.mxu0 %v2650
        %3021 = vmatprep.subr.mxu0 0.0
        %3022 = vmatpush1.msra.mxu0 %v2651
        %3023 = vmatprep.subr.mxu0 0.0
        %3024 = vmatpush1.msra.mxu0 %v2652
        %3025 = vmatprep.subr.mxu0 0.0
        %3026 = vmatpush1.msra.mxu0 %v2653
        %3027 = vmatprep.subr.mxu0 0.0
        %3028 = vmatpush1.msra.mxu0 %v2654
        %3029 = vmatprep.subr.mxu0 0.0
        %3030 = vmatpush1.msra.mxu0 %v2655
        %3031 = vmatprep.subr.mxu0 0.0
        %3032 = vmatpush1.msra.mxu0 %v2656
        %3033 = vmatprep.mubr.f32.mxu0 %v2235
        %3034 = vmatmul.mubr.f32.gmra.mrb[0].mxu0 %v2449
        %v3035 = vpop.f32.mrb[0].mxu0
        %v3036 = vadd.f32 %v2811, %v3035
        %v3037 = vpop.f32.mrb[0].mxu0
        %3038 = vmatprep.mubr.f32.mxu0 %v2236
        %3039 = vmatmul.mubr.f32.gmra.mrb[0].mxu0 %v2451
        %v3040 = vpop.f32.mrb[0].mxu0
        %v3041 = vadd.f32 %v2816, %v3040
        %v3042 = vpop.f32.mrb[0].mxu0
        %3043 = vmatprep.mubr.f32.mxu0 %v2238
        %3044 = vmatmul.mubr.f32.gmra.mrb[0].mxu0 %v2454
        %v3045 = vpop.f32.mrb[0].mxu0
        %v3046 = vadd.f32 %v2821, %v3045
        %v3047 = vpop.f32.mrb[0].mxu0
        %3048 = vmatprep.mubr.f32.mxu0 %v2239
        %3049 = vmatmul.mubr.f32.gmra.mrb[0].mxu0 %v2456
        %v3050 = vpop.f32.mrb[0].mxu0
        %v3051 = vadd.f32 %v2826, %v3050
        %v3052 = vpop.f32.mrb[0].mxu0
        %3053 = vmatprep.mubr.f32.mxu0 %v2241
        %3054 = vmatmul.mubr.f32.gmra.mrb[0].mxu0 %v2459
        %v3055 = vpop.f32.mrb[0].mxu0
        %v3056 = vadd.f32 %v2831, %v3055
        %v3057 = vpop.f32.mrb[0].mxu0
        %3058 = vmatprep.mubr.f32.mxu0 %v2242
        %3059 = vmatmul.mubr.f32.gmra.mrb[0].mxu0 %v2461
        %v3060 = vpop.f32.mrb[0].mxu0
        %v3061 = vadd.f32 %v2836, %v3060
        %v3062 = vpop.f32.mrb[0].mxu0
        %3063 = vmatprep.mubr.f32.mxu0 %v2244
        %3064 = vmatmul.mubr.f32.gmra.mrb[0].mxu0 %v2464
        %v3065 = vpop.f32.mrb[0].mxu0
        %v3066 = vadd.f32 %v2841, %v3065
        %v3067 = vpop.f32.mrb[0].mxu0
        %3068 = vmatprep.mubr.f32.mxu0 %v2245
        %3069 = vmatmul.mubr.f32.gmra.mrb[0].mxu0 %v2466
        %v3070 = vpop.f32.mrb[0].mxu0
        %v3071 = vadd.f32 %v2846, %v3070
        %v3072 = vpop.f32.mrb[0].mxu0
        %3073 = vmatprep.mubr.f32.mxu0 %v2247
        %3074 = vmatmul.mubr.f32.gmra.mrb[0].mxu0 %v2469
        %v3075 = vpop.f32.mrb[0].mxu0
        %v3076 = vadd.f32 %v2851, %v3075
        %v3077 = vpop.f32.mrb[0].mxu0
        %3078 = vmatprep.mubr.f32.mxu0 %v2248
        %3079 = vmatmul.mubr.f32.gmra.mrb[0].mxu0 %v2471
        %v3080 = vpop.f32.mrb[0].mxu0
        %v3081 = vadd.f32 %v2856, %v3080
        %v3082 = vpop.f32.mrb[0].mxu0
        %3083 = vmatprep.mubr.f32.mxu0 %v2250
        %3084 = vmatmul.mubr.f32.gmra.mrb[0].mxu0 %v2474
        %v3085 = vpop.f32.mrb[0].mxu0
        %v3086 = vadd.f32 %v2861, %v3085
        %v3087 = vpop.f32.mrb[0].mxu0
        %3088 = vmatprep.mubr.f32.mxu0 %v2251
        %3089 = vmatmul.mubr.f32.gmra.mrb[0].mxu0 %v2476
        %v3090 = vpop.f32.mrb[0].mxu0
        %v3091 = vadd.f32 %v2866, %v3090
        %v3092 = vpop.f32.mrb[0].mxu0
        %3093 = vmatprep.mubr.f32.mxu0 %v2253
        %3094 = vmatmul.mubr.f32.gmra.mrb[0].mxu0 %v2479
        %v3095 = vpop.f32.mrb[0].mxu0
        %v3096 = vadd.f32 %v2871, %v3095
        %v3097 = vpop.f32.mrb[0].mxu0
        %3098 = vmatprep.mubr.f32.mxu0 %v2254
        %3099 = vmatmul.mubr.f32.gmra.mrb[0].mxu0 %v2481
        %v3100 = vpop.f32.mrb[0].mxu0
        %v3101 = vadd.f32 %v2876, %v3100
        %v3102 = vpop.f32.mrb[0].mxu0
        %3103 = vmatprep.mubr.f32.mxu0 %v2256
        %3104 = vmatmul.mubr.f32.gmra.mrb[0].mxu0 %v2484
        %v3105 = vpop.f32.mrb[0].mxu0
        %v3106 = vadd.f32 %v2881, %v3105
        %v3107 = vpop.f32.mrb[0].mxu0
        %3108 = vmatprep.mubr.f32.mxu0 %v2257
        %3109 = vmatmul.mubr.f32.gmra.mrb[0].mxu0 %v2486
        %v3110 = vpop.f32.mrb[0].mxu0
        %v3111 = vadd.f32 %v2886, %v3110
        %v3112 = vpop.f32.mrb[0].mxu0
        %3113 = vmatprep.mubr.f32.mxu0 %v2259
        %3114 = vmatmul.mubr.f32.gmra.mrb[0].mxu0 %v2489
        %v3115 = vpop.f32.mrb[0].mxu0
        %v3116 = vadd.f32 %v2891, %v3115
        %v3117 = vpop.f32.mrb[0].mxu0
        %3118 = vmatprep.mubr.f32.mxu0 %v2260
        %3119 = vmatmul.mubr.f32.gmra.mrb[0].mxu0 %v2491
        %v3120 = vpop.f32.mrb[0].mxu0
        %v3121 = vadd.f32 %v2896, %v3120
        %v3122 = vpop.f32.mrb[0].mxu0
        %3123 = vmatprep.mubr.f32.mxu0 %v2262
        %3124 = vmatmul.mubr.f32.gmra.mrb[0].mxu0 %v2494
        %v3125 = vpop.f32.mrb[0].mxu0
        %v3126 = vadd.f32 %v2901, %v3125
        %v3127 = vpop.f32.mrb[0].mxu0
        %3128 = vmatprep.mubr.f32.mxu0 %v2263
        %3129 = vmatmul.mubr.f32.gmra.mrb[0].mxu0 %v2496
        %v3130 = vpop.f32.mrb[0].mxu0
        %v3131 = vadd.f32 %v2906, %v3130
        %v3132 = vpop.f32.mrb[0].mxu0
        %3133 = vmatprep.mubr.f32.mxu0 %v2265
        %3134 = vmatmul.mubr.f32.gmra.mrb[0].mxu0 %v2499
        %v3135 = vpop.f32.mrb[0].mxu0
        %v3136 = vadd.f32 %v2911, %v3135
        %v3137 = vpop.f32.mrb[0].mxu0
        %3138 = vmatprep.mubr.f32.mxu0 %v2266
        %3139 = vmatmul.mubr.f32.gmra.mrb[0].mxu0 %v2501
        %v3140 = vpop.f32.mrb[0].mxu0
        %v3141 = vadd.f32 %v2916, %v3140
        %v3142 = vpop.f32.mrb[0].mxu0
        %3143 = vmatprep.mubr.f32.mxu0 %v2268
        %3144 = vmatmul.mubr.f32.gmra.mrb[0].mxu0 %v2504
        %v3145 = vpop.f32.mrb[0].mxu0
        %v3146 = vadd.f32 %v2921, %v3145
        %v3147 = vpop.f32.mrb[0].mxu0
        %3148 = vmatprep.mubr.f32.mxu0 %v2269
        %3149 = vmatmul.mubr.f32.gmra.mrb[0].mxu0 %v2506
        %v3150 = vpop.f32.mrb[0].mxu0
        %v3151 = vadd.f32 %v2926, %v3150
        %v3152 = vpop.f32.mrb[0].mxu0
        %3153 = vmatprep.mubr.f32.mxu0 %v2271
        %3154 = vmatmul.mubr.f32.gmra.mrb[0].mxu0 %v2509
        %v3155 = vpop.f32.mrb[0].mxu0
        %v3156 = vadd.f32 %v2931, %v3155
        %v3157 = vpop.f32.mrb[0].mxu0
        %3158 = vmatprep.mubr.f32.mxu0 %v2272
        %3159 = vmatmul.mubr.f32.gmra.mrb[0].mxu0 %v2511
        %v3160 = vpop.f32.mrb[0].mxu0
        %v3161 = vadd.f32 %v2936, %v3160
        %v3162 = vpop.f32.mrb[0].mxu0
        %3163 = vmatprep.mubr.f32.mxu0 %v2274
        %3164 = vmatmul.mubr.f32.gmra.mrb[0].mxu0 %v2514
        %v3165 = vpop.f32.mrb[0].mxu0
        %v3166 = vadd.f32 %v2941, %v3165
        %v3167 = vpop.f32.mrb[0].mxu0
        %3168 = vmatprep.mubr.f32.mxu0 %v2275
        %3169 = vmatmul.mubr.f32.gmra.mrb[0].mxu0 %v2516
        %v3170 = vpop.f32.mrb[0].mxu0
        %v3171 = vadd.f32 %v2946, %v3170
        %v3172 = vpop.f32.mrb[0].mxu0
        %3173 = vmatprep.mubr.f32.mxu0 %v2277
        %3174 = vmatmul.mubr.f32.gmra.mrb[0].mxu0 %v2519
        %v3175 = vpop.f32.mrb[0].mxu0
        %v3176 = vadd.f32 %v2951, %v3175
        %v3177 = vpop.f32.mrb[0].mxu0
        %3178 = vmatprep.mubr.f32.mxu0 %v2278
        %3179 = vmatmul.mubr.f32.gmra.mrb[0].mxu0 %v2521
        %v3180 = vpop.f32.mrb[0].mxu0
        %v3181 = vadd.f32 %v2956, %v3180
        %v3182 = vpop.f32.mrb[0].mxu0
        %3183 = vmatprep.mubr.f32.mxu0 %v2280
        %3184 = vmatmul.mubr.f32.gmra.mrb[0].mxu0 %v2524
        %v3185 = vpop.f32.mrb[0].mxu0
        %v3186 = vadd.f32 %v2961, %v3185
        %v3187 = vpop.f32.mrb[0].mxu0
        %3188 = vmatprep.mubr.f32.mxu0 %v2281
        %3189 = vmatmul.mubr.f32.gmra.mrb[0].mxu0 %v2526
        %v3190 = vpop.f32.mrb[0].mxu0
        %v3191 = vadd.f32 %v2966, %v3190
        %v3192 = vpop.f32.mrb[0].mxu0
        %3193 = vdwg.mxu0
        %3194 = vmatprep.subr.mxu0 0.0
        %3195 = vmatpush1.msra.mxu0 %v2657
        %3196 = vmatprep.subr.mxu0 0.0
        %3197 = vmatpush1.msra.mxu0 %v2658
        %3198 = vmatprep.subr.mxu0 0.0
        %3199 = vmatpush1.msra.mxu0 %v2659
        %3200 = vmatprep.subr.mxu0 0.0
        %3201 = vmatpush1.msra.mxu0 %v2660
        %3202 = vmatprep.subr.mxu0 0.0
        %3203 = vmatpush1.msra.mxu0 %v2661
        %3204 = vmatprep.subr.mxu0 0.0
        %3205 = vmatpush1.msra.mxu0 %v2662
        %3206 = vmatprep.subr.mxu0 0.0
        %3207 = vmatpush1.msra.mxu0 %v2663
        %3208 = vmatprep.subr.mxu0 0.0
        %3209 = vmatpush1.msra.mxu0 %v2664
        %3210 = vmatprep.subr.mxu0 0.0
        %3211 = vmatpush1.msra.mxu0 %v2665
        %3212 = vmatprep.subr.mxu0 0.0
        %3213 = vmatpush1.msra.mxu0 %v2666
        %3214 = vmatprep.subr.mxu0 0.0
        %3215 = vmatpush1.msra.mxu0 %v2667
        %3216 = vmatprep.subr.mxu0 0.0
        %3217 = vmatpush1.msra.mxu0 %v2668
        %3218 = vmatprep.subr.mxu0 0.0
        %3219 = vmatpush1.msra.mxu0 %v2669
        %3220 = vmatprep.subr.mxu0 0.0
        %3221 = vmatpush1.msra.mxu0 %v2670
        %3222 = vmatprep.subr.mxu0 0.0
        %3223 = vmatpush1.msra.mxu0 %v2671
        %3224 = vmatprep.subr.mxu0 0.0
        %3225 = vmatpush1.msra.mxu0 %v2672
        %3226 = vmatprep.subr.mxu0 0.0
        %3227 = vmatpush1.msra.mxu0 %v2673
        %3228 = vmatprep.subr.mxu0 0.0
        %3229 = vmatpush1.msra.mxu0 %v2674
        %3230 = vmatprep.subr.mxu0 0.0
        %3231 = vmatpush1.msra.mxu0 %v2675
        %3232 = vmatprep.subr.mxu0 0.0
        %3233 = vmatpush1.msra.mxu0 %v2676
        %3234 = vmatprep.subr.mxu0 0.0
        %3235 = vmatpush1.msra.mxu0 %v2677
        %3236 = vmatprep.subr.mxu0 0.0
        %3237 = vmatpush1.msra.mxu0 %v2678
        %3238 = vmatprep.subr.mxu0 0.0
        %3239 = vmatpush1.msra.mxu0 %v2679
        %3240 = vmatprep.subr.mxu0 0.0
        %3241 = vmatpush1.msra.mxu0 %v2680
        %3242 = vmatprep.subr.mxu0 0.0
        %3243 = vmatpush1.msra.mxu0 %v2681
        %3244 = vmatprep.subr.mxu0 0.0
        %3245 = vmatpush1.msra.mxu0 %v2682
        %3246 = vmatprep.subr.mxu0 0.0
        %3247 = vmatpush1.msra.mxu0 %v2683
        %3248 = vmatprep.subr.mxu0 0.0
        %3249 = vmatpush1.msra.mxu0 %v2684
        %3250 = vmatprep.subr.mxu0 0.0
        %3251 = vmatpush1.msra.mxu0 %v2685
        %3252 = vmatprep.subr.mxu0 0.0
        %3253 = vmatpush1.msra.mxu0 %v2686
        %3254 = vmatprep.subr.mxu0 0.0
        %3255 = vmatpush1.msra.mxu0 %v2687
        %3256 = vmatprep.subr.mxu0 0.0
        %3257 = vmatpush1.msra.mxu0 %v2688
        %3258 = vmatprep.mubr.f32.mxu0 %v2454
        %3259 = vmatmul.mubr.f32.gmra.mrb[0].mxu0 %v2342
        %v3260 = vpop.f32.mrb[0].mxu0
        %v3261 = vadd.f32 %v3036, %v3260
        %v3262 = vpop.f32.mrb[0].mxu0
        %3263 = vmatprep.mubr.f32.mxu0 %v2456
        %3264 = vmatmul.mubr.f32.gmra.mrb[0].mxu0 %v2344
        %v3265 = vpop.f32.mrb[0].mxu0
        %v3266 = vadd.f32 %v3041, %v3265
        %v3267 = vpop.f32.mrb[0].mxu0
        %3268 = vmatprep.mubr.f32.mxu0 %v2459
        %3269 = vmatmul.mubr.f32.gmra.mrb[0].mxu0 %v2347
        %v3270 = vpop.f32.mrb[0].mxu0
        %v3271 = vadd.f32 %v3046, %v3270
        %v3272 = vpop.f32.mrb[0].mxu0
        %3273 = vmatprep.mubr.f32.mxu0 %v2461
        %3274 = vmatmul.mubr.f32.gmra.mrb[0].mxu0 %v2349
        %v3275 = vpop.f32.mrb[0].mxu0
        %v3276 = vadd.f32 %v3051, %v3275
        %v3277 = vpop.f32.mrb[0].mxu0
        %3278 = vmatprep.mubr.f32.mxu0 %v2464
        %3279 = vmatmul.mubr.f32.gmra.mrb[0].mxu0 %v2352
        %v3280 = vpop.f32.mrb[0].mxu0
        %v3281 = vadd.f32 %v3056, %v3280
        %v3282 = vpop.f32.mrb[0].mxu0
        %3283 = vmatprep.mubr.f32.mxu0 %v2466
        %3284 = vmatmul.mubr.f32.gmra.mrb[0].mxu0 %v2354
        %v3285 = vpop.f32.mrb[0].mxu0
        %v3286 = vadd.f32 %v3061, %v3285
        %v3287 = vpop.f32.mrb[0].mxu0
        %3288 = vmatprep.mubr.f32.mxu0 %v2469
        %3289 = vmatmul.mubr.f32.gmra.mrb[0].mxu0 %v2357
        %v3290 = vpop.f32.mrb[0].mxu0
        %v3291 = vadd.f32 %v3066, %v3290
        %v3292 = vpop.f32.mrb[0].mxu0
        %3293 = vmatprep.mubr.f32.mxu0 %v2471
        %3294 = vmatmul.mubr.f32.gmra.mrb[0].mxu0 %v2359
        %v3295 = vpop.f32.mrb[0].mxu0
        %v3296 = vadd.f32 %v3071, %v3295
        %v3297 = vpop.f32.mrb[0].mxu0
        %3298 = vmatprep.mubr.f32.mxu0 %v2474
        %3299 = vmatmul.mubr.f32.gmra.mrb[0].mxu0 %v2362
        %v3300 = vpop.f32.mrb[0].mxu0
        %v3301 = vadd.f32 %v3076, %v3300
        %v3302 = vpop.f32.mrb[0].mxu0
        %3303 = vmatprep.mubr.f32.mxu0 %v2476
        %3304 = vmatmul.mubr.f32.gmra.mrb[0].mxu0 %v2364
        %v3305 = vpop.f32.mrb[0].mxu0
        %v3306 = vadd.f32 %v3081, %v3305
        %v3307 = vpop.f32.mrb[0].mxu0
        %3308 = vmatprep.mubr.f32.mxu0 %v2479
        %3309 = vmatmul.mubr.f32.gmra.mrb[0].mxu0 %v2367
        %v3310 = vpop.f32.mrb[0].mxu0
        %v3311 = vadd.f32 %v3086, %v3310
        %v3312 = vpop.f32.mrb[0].mxu0
        %3313 = vmatprep.mubr.f32.mxu0 %v2481
        %3314 = vmatmul.mubr.f32.gmra.mrb[0].mxu0 %v2369
        %v3315 = vpop.f32.mrb[0].mxu0
        %v3316 = vadd.f32 %v3091, %v3315
        %v3317 = vpop.f32.mrb[0].mxu0
        %3318 = vmatprep.mubr.f32.mxu0 %v2484
        %3319 = vmatmul.mubr.f32.gmra.mrb[0].mxu0 %v2372
        %v3320 = vpop.f32.mrb[0].mxu0
        %v3321 = vadd.f32 %v3096, %v3320
        %v3322 = vpop.f32.mrb[0].mxu0
        %3323 = vmatprep.mubr.f32.mxu0 %v2486
        %3324 = vmatmul.mubr.f32.gmra.mrb[0].mxu0 %v2374
        %v3325 = vpop.f32.mrb[0].mxu0
        %v3326 = vadd.f32 %v3101, %v3325
        %v3327 = vpop.f32.mrb[0].mxu0
        %3328 = vmatprep.mubr.f32.mxu0 %v2489
        %3329 = vmatmul.mubr.f32.gmra.mrb[0].mxu0 %v2377
        %v3330 = vpop.f32.mrb[0].mxu0
        %v3331 = vadd.f32 %v3106, %v3330
        %v3332 = vpop.f32.mrb[0].mxu0
        %3333 = vmatprep.mubr.f32.mxu0 %v2491
        %3334 = vmatmul.mubr.f32.gmra.mrb[0].mxu0 %v2379
        %v3335 = vpop.f32.mrb[0].mxu0
        %v3336 = vadd.f32 %v3111, %v3335
        %v3337 = vpop.f32.mrb[0].mxu0
        %3338 = vmatprep.mubr.f32.mxu0 %v2494
        %3339 = vmatmul.mubr.f32.gmra.mrb[0].mxu0 %v2382
        %v3340 = vpop.f32.mrb[0].mxu0
        %v3341 = vadd.f32 %v3116, %v3340
        %v3342 = vpop.f32.mrb[0].mxu0
        %3343 = vmatprep.mubr.f32.mxu0 %v2496
        %3344 = vmatmul.mubr.f32.gmra.mrb[0].mxu0 %v2384
        %v3345 = vpop.f32.mrb[0].mxu0
        %v3346 = vadd.f32 %v3121, %v3345
        %v3347 = vpop.f32.mrb[0].mxu0
        %3348 = vmatprep.mubr.f32.mxu0 %v2499
        %3349 = vmatmul.mubr.f32.gmra.mrb[0].mxu0 %v2387
        %v3350 = vpop.f32.mrb[0].mxu0
        %v3351 = vadd.f32 %v3126, %v3350
        %v3352 = vpop.f32.mrb[0].mxu0
        %3353 = vmatprep.mubr.f32.mxu0 %v2501
        %3354 = vmatmul.mubr.f32.gmra.mrb[0].mxu0 %v2389
        %v3355 = vpop.f32.mrb[0].mxu0
        %v3356 = vadd.f32 %v3131, %v3355
        %v3357 = vpop.f32.mrb[0].mxu0
        %3358 = vmatprep.mubr.f32.mxu0 %v2504
        %3359 = vmatmul.mubr.f32.gmra.mrb[0].mxu0 %v2392
        %v3360 = vpop.f32.mrb[0].mxu0
        %v3361 = vadd.f32 %v3136, %v3360
        %v3362 = vpop.f32.mrb[0].mxu0
        %3363 = vmatprep.mubr.f32.mxu0 %v2506
        %3364 = vmatmul.mubr.f32.gmra.mrb[0].mxu0 %v2394
        %v3365 = vpop.f32.mrb[0].mxu0
        %v3366 = vadd.f32 %v3141, %v3365
        %v3367 = vpop.f32.mrb[0].mxu0
        %3368 = vmatprep.mubr.f32.mxu0 %v2509
        %3369 = vmatmul.mubr.f32.gmra.mrb[0].mxu0 %v2397
        %v3370 = vpop.f32.mrb[0].mxu0
        %v3371 = vadd.f32 %v3146, %v3370
        %v3372 = vpop.f32.mrb[0].mxu0
        %3373 = vmatprep.mubr.f32.mxu0 %v2511
        %3374 = vmatmul.mubr.f32.gmra.mrb[0].mxu0 %v2399
        %v3375 = vpop.f32.mrb[0].mxu0
        %v3376 = vadd.f32 %v3151, %v3375
        %v3377 = vpop.f32.mrb[0].mxu0
        %3378 = vmatprep.mubr.f32.mxu0 %v2514
        %3379 = vmatmul.mubr.f32.gmra.mrb[0].mxu0 %v2402
        %v3380 = vpop.f32.mrb[0].mxu0
        %v3381 = vadd.f32 %v3156, %v3380
        %v3382 = vpop.f32.mrb[0].mxu0
        %3383 = vmatprep.mubr.f32.mxu0 %v2516
        %3384 = vmatmul.mubr.f32.gmra.mrb[0].mxu0 %v2404
        %v3385 = vpop.f32.mrb[0].mxu0
        %v3386 = vadd.f32 %v3161, %v3385
        %v3387 = vpop.f32.mrb[0].mxu0
        %3388 = vmatprep.mubr.f32.mxu0 %v2519
        %3389 = vmatmul.mubr.f32.gmra.mrb[0].mxu0 %v2407
        %v3390 = vpop.f32.mrb[0].mxu0
        %v3391 = vadd.f32 %v3166, %v3390
        %v3392 = vpop.f32.mrb[0].mxu0
        %3393 = vmatprep.mubr.f32.mxu0 %v2521
        %3394 = vmatmul.mubr.f32.gmra.mrb[0].mxu0 %v2409
        %v3395 = vpop.f32.mrb[0].mxu0
        %v3396 = vadd.f32 %v3171, %v3395
        %v3397 = vpop.f32.mrb[0].mxu0
        %3398 = vmatprep.mubr.f32.mxu0 %v2524
        %3399 = vmatmul.mubr.f32.gmra.mrb[0].mxu0 %v2412
        %v3400 = vpop.f32.mrb[0].mxu0
        %v3401 = vadd.f32 %v3176, %v3400
        %v3402 = vpop.f32.mrb[0].mxu0
        %3403 = vmatprep.mubr.f32.mxu0 %v2526
        %3404 = vmatmul.mubr.f32.gmra.mrb[0].mxu0 %v2414
        %v3405 = vpop.f32.mrb[0].mxu0
        %v3406 = vadd.f32 %v3181, %v3405
        %v3407 = vpop.f32.mrb[0].mxu0
        %3408 = vmatprep.mubr.f32.mxu0 %v2571
        %3409 = vmatmul.mubr.f32.gmra.mrb[0].mxu0 %v2564
        %v3410 = vpop.f32.mrb[0].mxu0
        %v3411 = vadd.f32 %v3186, %v3410
        %v3412 = vpop.f32.mrb[0].mxu0
        %3413 = vmatprep.mubr.f32.mxu0 %v2573
        %3414 = vmatmul.mubr.f32.gmra.mrb[0].mxu0 %v2566
        %v3415 = vpop.f32.mrb[0].mxu0
        %v3416 = vadd.f32 %v3191, %v3415
        %v3417 = vpop.f32.mrb[0].mxu0
        %3418 = vdwg.mxu0
        %3419 = vmatprep.subr.mxu0 0.0
        %3420 = vmatpush1.msra.mxu0 %v2689
        %3421 = vmatprep.subr.mxu0 0.0
        %3422 = vmatpush1.msra.mxu0 %v2690
        %3423 = vmatprep.subr.mxu0 0.0
        %3424 = vmatpush1.msra.mxu0 %v2691
        %3425 = vmatprep.subr.mxu0 0.0
        %3426 = vmatpush1.msra.mxu0 %v2692
        %3427 = vmatprep.subr.mxu0 0.0
        %3428 = vmatpush1.msra.mxu0 %v2693
        %3429 = vmatprep.subr.mxu0 0.0
        %3430 = vmatpush1.msra.mxu0 %v2694
        %3431 = vmatprep.subr.mxu0 0.0
        %3432 = vmatpush1.msra.mxu0 %v2695
        %3433 = vmatprep.subr.mxu0 0.0
        %3434 = vmatpush1.msra.mxu0 %v2696
        %3435 = vmatprep.subr.mxu0 0.0
        %3436 = vmatpush1.msra.mxu0 %v2697
        %3437 = vmatprep.subr.mxu0 0.0
        %3438 = vmatpush1.msra.mxu0 %v2698
        %3439 = vmatprep.subr.mxu0 0.0
        %3440 = vmatpush1.msra.mxu0 %v2699
        %3441 = vmatprep.subr.mxu0 0.0
        %3442 = vmatpush1.msra.mxu0 %v2700
        %3443 = vmatprep.subr.mxu0 0.0
        %3444 = vmatpush1.msra.mxu0 %v2701
        %3445 = vmatprep.subr.mxu0 0.0
        %3446 = vmatpush1.msra.mxu0 %v2702
        %3447 = vmatprep.subr.mxu0 0.0
        %3448 = vmatpush1.msra.mxu0 %v2703
        %3449 = vmatprep.subr.mxu0 0.0
        %3450 = vmatpush1.msra.mxu0 %v2704
        %3451 = vmatprep.subr.mxu0 0.0
        %3452 = vmatpush1.msra.mxu0 %v2705
        %3453 = vmatprep.subr.mxu0 0.0
        %3454 = vmatpush1.msra.mxu0 %v2706
        %3455 = vmatprep.subr.mxu0 0.0
        %3456 = vmatpush1.msra.mxu0 %v2707
        %3457 = vmatprep.subr.mxu0 0.0
        %3458 = vmatpush1.msra.mxu0 %v2708
        %3459 = vmatprep.subr.mxu0 0.0
        %3460 = vmatpush1.msra.mxu0 %v2709
        %3461 = vmatprep.subr.mxu0 0.0
        %3462 = vmatpush1.msra.mxu0 %v2710
        %3463 = vmatprep.subr.mxu0 0.0
        %3464 = vmatpush1.msra.mxu0 %v2711
        %3465 = vmatprep.subr.mxu0 0.0
        %3466 = vmatpush1.msra.mxu0 %v2712
        %3467 = vmatprep.subr.mxu0 0.0
        %3468 = vmatpush1.msra.mxu0 %v2713
        %3469 = vmatprep.subr.mxu0 0.0
        %3470 = vmatpush1.msra.mxu0 %v2714
        %3471 = vmatprep.subr.mxu0 0.0
        %3472 = vmatpush1.msra.mxu0 %v2715
        %3473 = vmatprep.subr.mxu0 0.0
        %3474 = vmatpush1.msra.mxu0 %v2716
        %3475 = vmatprep.subr.mxu0 0.0
        %3476 = vmatpush1.msra.mxu0 %v2717
        %3477 = vmatprep.subr.mxu0 0.0
        %3478 = vmatpush1.msra.mxu0 %v2718
        %3479 = vmatprep.subr.mxu0 0.0
        %3480 = vmatpush1.msra.mxu0 %v2719
        %3481 = vmatprep.subr.mxu0 0.0
        %3482 = vmatpush1.msra.mxu0 %v2720
        %3483 = vmatprep.mubr.f32.mxu0 %v2347
        %3484 = vmatmul.mubr.f32.gmra.mrb[0].mxu0 %v2238
        %v3485 = vpop.f32.mrb[0].mxu0
        %v3486 = vadd.f32 %v3261, %v3485
        %v3487 = vpop.f32.mrb[0].mxu0
        %3488 = vmatprep.mubr.f32.mxu0 %v2349
        %3489 = vmatmul.mubr.f32.gmra.mrb[0].mxu0 %v2239
        %v3490 = vpop.f32.mrb[0].mxu0
        %v3491 = vadd.f32 %v3266, %v3490
        %v3492 = vpop.f32.mrb[0].mxu0
        %3493 = vmatprep.mubr.f32.mxu0 %v2352
        %3494 = vmatmul.mubr.f32.gmra.mrb[0].mxu0 %v2241
        %v3495 = vpop.f32.mrb[0].mxu0
        %v3496 = vadd.f32 %v3271, %v3495
        %v3497 = vpop.f32.mrb[0].mxu0
        %3498 = vmatprep.mubr.f32.mxu0 %v2354
        %3499 = vmatmul.mubr.f32.gmra.mrb[0].mxu0 %v2242
        %v3500 = vpop.f32.mrb[0].mxu0
        %v3501 = vadd.f32 %v3276, %v3500
        %v3502 = vpop.f32.mrb[0].mxu0
        %3503 = vmatprep.mubr.f32.mxu0 %v2357
        %3504 = vmatmul.mubr.f32.gmra.mrb[0].mxu0 %v2244
        %v3505 = vpop.f32.mrb[0].mxu0
        %v3506 = vadd.f32 %v3281, %v3505
        %v3507 = vpop.f32.mrb[0].mxu0
        %3508 = vmatprep.mubr.f32.mxu0 %v2359
        %3509 = vmatmul.mubr.f32.gmra.mrb[0].mxu0 %v2245
        %v3510 = vpop.f32.mrb[0].mxu0
        %v3511 = vadd.f32 %v3286, %v3510
        %v3512 = vpop.f32.mrb[0].mxu0
        %3513 = vmatprep.mubr.f32.mxu0 %v2362
        %3514 = vmatmul.mubr.f32.gmra.mrb[0].mxu0 %v2247
        %v3515 = vpop.f32.mrb[0].mxu0
        %v3516 = vadd.f32 %v3291, %v3515
        %v3517 = vpop.f32.mrb[0].mxu0
        %3518 = vmatprep.mubr.f32.mxu0 %v2364
        %3519 = vmatmul.mubr.f32.gmra.mrb[0].mxu0 %v2248
        %v3520 = vpop.f32.mrb[0].mxu0
        %v3521 = vadd.f32 %v3296, %v3520
        %v3522 = vpop.f32.mrb[0].mxu0
        %3523 = vmatprep.mubr.f32.mxu0 %v2367
        %3524 = vmatmul.mubr.f32.gmra.mrb[0].mxu0 %v2250
        %v3525 = vpop.f32.mrb[0].mxu0
        %v3526 = vadd.f32 %v3301, %v3525
        %v3527 = vpop.f32.mrb[0].mxu0
        %3528 = vmatprep.mubr.f32.mxu0 %v2369
        %3529 = vmatmul.mubr.f32.gmra.mrb[0].mxu0 %v2251
        %v3530 = vpop.f32.mrb[0].mxu0
        %v3531 = vadd.f32 %v3306, %v3530
        %v3532 = vpop.f32.mrb[0].mxu0
        %3533 = vmatprep.mubr.f32.mxu0 %v2372
        %3534 = vmatmul.mubr.f32.gmra.mrb[0].mxu0 %v2253
        %v3535 = vpop.f32.mrb[0].mxu0
        %v3536 = vadd.f32 %v3311, %v3535
        %v3537 = vpop.f32.mrb[0].mxu0
        %3538 = vmatprep.mubr.f32.mxu0 %v2374
        %3539 = vmatmul.mubr.f32.gmra.mrb[0].mxu0 %v2254
        %v3540 = vpop.f32.mrb[0].mxu0
        %v3541 = vadd.f32 %v3316, %v3540
        %v3542 = vpop.f32.mrb[0].mxu0
        %3543 = vmatprep.mubr.f32.mxu0 %v2377
        %3544 = vmatmul.mubr.f32.gmra.mrb[0].mxu0 %v2256
        %v3545 = vpop.f32.mrb[0].mxu0
        %v3546 = vadd.f32 %v3321, %v3545
        %v3547 = vpop.f32.mrb[0].mxu0
        %3548 = vmatprep.mubr.f32.mxu0 %v2379
        %3549 = vmatmul.mubr.f32.gmra.mrb[0].mxu0 %v2257
        %v3550 = vpop.f32.mrb[0].mxu0
        %v3551 = vadd.f32 %v3326, %v3550
        %v3552 = vpop.f32.mrb[0].mxu0
        %3553 = vmatprep.mubr.f32.mxu0 %v2382
        %3554 = vmatmul.mubr.f32.gmra.mrb[0].mxu0 %v2259
        %v3555 = vpop.f32.mrb[0].mxu0
        %v3556 = vadd.f32 %v3331, %v3555
        %v3557 = vpop.f32.mrb[0].mxu0
        %3558 = vmatprep.mubr.f32.mxu0 %v2384
        %3559 = vmatmul.mubr.f32.gmra.mrb[0].mxu0 %v2260
        %v3560 = vpop.f32.mrb[0].mxu0
        %v3561 = vadd.f32 %v3336, %v3560
        %v3562 = vpop.f32.mrb[0].mxu0
        %3563 = vmatprep.mubr.f32.mxu0 %v2387
        %3564 = vmatmul.mubr.f32.gmra.mrb[0].mxu0 %v2262
        %v3565 = vpop.f32.mrb[0].mxu0
        %v3566 = vadd.f32 %v3341, %v3565
        %v3567 = vpop.f32.mrb[0].mxu0
        %3568 = vmatprep.mubr.f32.mxu0 %v2389
        %3569 = vmatmul.mubr.f32.gmra.mrb[0].mxu0 %v2263
        %v3570 = vpop.f32.mrb[0].mxu0
        %v3571 = vadd.f32 %v3346, %v3570
        %v3572 = vpop.f32.mrb[0].mxu0
        %3573 = vmatprep.mubr.f32.mxu0 %v2392
        %3574 = vmatmul.mubr.f32.gmra.mrb[0].mxu0 %v2265
        %v3575 = vpop.f32.mrb[0].mxu0
        %v3576 = vadd.f32 %v3351, %v3575
        %v3577 = vpop.f32.mrb[0].mxu0
        %3578 = vmatprep.mubr.f32.mxu0 %v2394
        %3579 = vmatmul.mubr.f32.gmra.mrb[0].mxu0 %v2266
        %v3580 = vpop.f32.mrb[0].mxu0
        %v3581 = vadd.f32 %v3356, %v3580
        %v3582 = vpop.f32.mrb[0].mxu0
        %3583 = vmatprep.mubr.f32.mxu0 %v2397
        %3584 = vmatmul.mubr.f32.gmra.mrb[0].mxu0 %v2268
        %v3585 = vpop.f32.mrb[0].mxu0
        %v3586 = vadd.f32 %v3361, %v3585
        %v3587 = vpop.f32.mrb[0].mxu0
        %3588 = vmatprep.mubr.f32.mxu0 %v2399
        %3589 = vmatmul.mubr.f32.gmra.mrb[0].mxu0 %v2269
        %v3590 = vpop.f32.mrb[0].mxu0
        %v3591 = vadd.f32 %v3366, %v3590
        %v3592 = vpop.f32.mrb[0].mxu0
        %3593 = vmatprep.mubr.f32.mxu0 %v2402
        %3594 = vmatmul.mubr.f32.gmra.mrb[0].mxu0 %v2271
        %v3595 = vpop.f32.mrb[0].mxu0
        %v3596 = vadd.f32 %v3371, %v3595
        %v3597 = vpop.f32.mrb[0].mxu0
        %3598 = vmatprep.mubr.f32.mxu0 %v2404
        %3599 = vmatmul.mubr.f32.gmra.mrb[0].mxu0 %v2272
        %v3600 = vpop.f32.mrb[0].mxu0
        %v3601 = vadd.f32 %v3376, %v3600
        %v3602 = vpop.f32.mrb[0].mxu0
        %3603 = vmatprep.mubr.f32.mxu0 %v2407
        %3604 = vmatmul.mubr.f32.gmra.mrb[0].mxu0 %v2274
        %v3605 = vpop.f32.mrb[0].mxu0
        %v3606 = vadd.f32 %v3381, %v3605
        %v3607 = vpop.f32.mrb[0].mxu0
        %3608 = vmatprep.mubr.f32.mxu0 %v2409
        %3609 = vmatmul.mubr.f32.gmra.mrb[0].mxu0 %v2275
        %v3610 = vpop.f32.mrb[0].mxu0
        %v3611 = vadd.f32 %v3386, %v3610
        %v3612 = vpop.f32.mrb[0].mxu0
        %3613 = vmatprep.mubr.f32.mxu0 %v2412
        %3614 = vmatmul.mubr.f32.gmra.mrb[0].mxu0 %v2277
        %v3615 = vpop.f32.mrb[0].mxu0
        %v3616 = vadd.f32 %v3391, %v3615
        %v3617 = vpop.f32.mrb[0].mxu0
        %3618 = vmatprep.mubr.f32.mxu0 %v2414
        %3619 = vmatmul.mubr.f32.gmra.mrb[0].mxu0 %v2278
        %v3620 = vpop.f32.mrb[0].mxu0
        %v3621 = vadd.f32 %v3396, %v3620
        %v3622 = vpop.f32.mrb[0].mxu0
        %3623 = vmatprep.mubr.f32.mxu0 %v2564
        %3624 = vmatmul.mubr.f32.gmra.mrb[0].mxu0 %v2280
        %v3625 = vpop.f32.mrb[0].mxu0
        %v3626 = vadd.f32 %v3401, %v3625
        %v3627 = vpop.f32.mrb[0].mxu0
        %3628 = vmatprep.mubr.f32.mxu0 %v2566
        %3629 = vmatmul.mubr.f32.gmra.mrb[0].mxu0 %v2281
        %v3630 = vpop.f32.mrb[0].mxu0
        %v3631 = vadd.f32 %v3406, %v3630
        %v3632 = vpop.f32.mrb[0].mxu0
        %3633 = vmatprep.mubr.f32.mxu0 %v2581
        %3634 = vmatmul.mubr.f32.gmra.mrb[0].mxu0 %v2283
        %v3635 = vpop.f32.mrb[0].mxu0
        %v3636 = vadd.f32 %v3411, %v3635
        %v3637 = vpop.f32.mrb[0].mxu0
        %3638 = vmatprep.mubr.f32.mxu0 %v2583
        %3639 = vmatmul.mubr.f32.gmra.mrb[0].mxu0 %v2284
        %v3640 = vpop.f32.mrb[0].mxu0
        %v3641 = vadd.f32 %v3416, %v3640
        %v3642 = vpop.f32.mrb[0].mxu0
        %3643 = vdwg.mxu0
        %3644 = vmatprep.subr.mxu0 0.0
        %3645 = vmatpush1.msra.mxu0 %v2721
        %3646 = vmatprep.subr.mxu0 0.0
        %3647 = vmatpush1.msra.mxu0 %v2722
        %3648 = vmatprep.subr.mxu0 0.0
        %3649 = vmatpush1.msra.mxu0 %v2723
        %3650 = vmatprep.subr.mxu0 0.0
        %3651 = vmatpush1.msra.mxu0 %v2724
        %3652 = vmatprep.subr.mxu0 0.0
        %3653 = vmatpush1.msra.mxu0 %v2725
        %3654 = vmatprep.subr.mxu0 0.0
        %3655 = vmatpush1.msra.mxu0 %v2726
        %3656 = vmatprep.subr.mxu0 0.0
        %3657 = vmatpush1.msra.mxu0 %v2727
        %3658 = vmatprep.subr.mxu0 0.0
        %3659 = vmatpush1.msra.mxu0 %v2728
        %3660 = vmatprep.subr.mxu0 0.0
        %3661 = vmatpush1.msra.mxu0 %v2729
        %3662 = vmatprep.subr.mxu0 0.0
        %3663 = vmatpush1.msra.mxu0 %v2730
        %3664 = vmatprep.subr.mxu0 0.0
        %3665 = vmatpush1.msra.mxu0 %v2731
        %3666 = vmatprep.subr.mxu0 0.0
        %3667 = vmatpush1.msra.mxu0 %v2732
        %3668 = vmatprep.subr.mxu0 0.0
        %3669 = vmatpush1.msra.mxu0 %v2733
        %3670 = vmatprep.subr.mxu0 0.0
        %3671 = vmatpush1.msra.mxu0 %v2734
        %3672 = vmatprep.subr.mxu0 0.0
        %3673 = vmatpush1.msra.mxu0 %v2735
        %3674 = vmatprep.subr.mxu0 0.0
        %3675 = vmatpush1.msra.mxu0 %v2736
        %3676 = vmatprep.subr.mxu0 0.0
        %3677 = vmatpush1.msra.mxu0 0.0
        %3678 = vmatprep.subr.mxu0 0.0
        %3679 = vmatpush1.msra.mxu0 0.0
        %3680 = vmatprep.subr.mxu0 0.0
        %3681 = vmatpush1.msra.mxu0 0.0
        %3682 = vmatprep.subr.mxu0 0.0
        %3683 = vmatpush1.msra.mxu0 0.0
        %3684 = vmatprep.subr.mxu0 0.0
        %3685 = vmatpush1.msra.mxu0 0.0
        %3686 = vmatprep.subr.mxu0 0.0
        %3687 = vmatpush1.msra.mxu0 0.0
        %3688 = vmatprep.subr.mxu0 0.0
        %3689 = vmatpush1.msra.mxu0 0.0
        %3690 = vmatprep.subr.mxu0 0.0
        %3691 = vmatpush1.msra.mxu0 0.0
        %3692 = vmatprep.subr.mxu0 0.0
        %3693 = vmatpush1.msra.mxu0 0.0
        %3694 = vmatprep.subr.mxu0 0.0
        %3695 = vmatpush1.msra.mxu0 0.0
        %3696 = vmatprep.subr.mxu0 0.0
        %3697 = vmatpush1.msra.mxu0 0.0
        %3698 = vmatprep.subr.mxu0 0.0
        %3699 = vmatpush1.msra.mxu0 0.0
        %3700 = vmatprep.subr.mxu0 0.0
        %3701 = vmatpush1.msra.mxu0 0.0
        %3702 = vmatprep.subr.mxu0 0.0
        %3703 = vmatpush1.msra.mxu0 0.0
        %3704 = vmatprep.subr.mxu0 0.0
        %3705 = vmatpush1.msra.mxu0 0.0
        %3706 = vmatprep.subr.mxu0 0.0
        %3707 = vmatpush1.msra.mxu0 0.0
        %3708 = vmatprep.mubr.f32.mxu0 0.0
        %3709 = vmatmul.mubr.f32.gmra.mrb[0].mxu0 %v2459
        %v3710 = vpop.f32.mrb[0].mxu0
        %v3711 = vadd.f32 %v3486, %v3710
        %v3712 = vpop.f32.mrb[0].mxu0
        %3713 = vmatprep.mubr.f32.mxu0 0.0
        %3714 = vmatmul.mubr.f32.gmra.mrb[0].mxu0 %v2461
        %v3715 = vpop.f32.mrb[0].mxu0
        %v3716 = vadd.f32 %v3491, %v3715
        %v3717 = vpop.f32.mrb[0].mxu0
        %3718 = vmatprep.mubr.f32.mxu0 0.0
        %3719 = vmatmul.mubr.f32.gmra.mrb[0].mxu0 %v2464
        %v3720 = vpop.f32.mrb[0].mxu0
        %v3721 = vadd.f32 %v3496, %v3720
        %v3722 = vpop.f32.mrb[0].mxu0
        %3723 = vmatprep.mubr.f32.mxu0 0.0
        %3724 = vmatmul.mubr.f32.gmra.mrb[0].mxu0 %v2466
        %v3725 = vpop.f32.mrb[0].mxu0
        %v3726 = vadd.f32 %v3501, %v3725
        %v3727 = vpop.f32.mrb[0].mxu0
        %3728 = vmatprep.mubr.f32.mxu0 0.0
        %3729 = vmatmul.mubr.f32.gmra.mrb[0].mxu0 %v2469
        %v3730 = vpop.f32.mrb[0].mxu0
        %v3731 = vadd.f32 %v3506, %v3730
        %v3732 = vpop.f32.mrb[0].mxu0
        %3733 = vmatprep.mubr.f32.mxu0 0.0
        %3734 = vmatmul.mubr.f32.gmra.mrb[0].mxu0 %v2471
        %v3735 = vpop.f32.mrb[0].mxu0
        %v3736 = vadd.f32 %v3511, %v3735
        %v3737 = vpop.f32.mrb[0].mxu0
        %3738 = vmatprep.mubr.f32.mxu0 0.0
        %3739 = vmatmul.mubr.f32.gmra.mrb[0].mxu0 %v2474
        %v3740 = vpop.f32.mrb[0].mxu0
        %v3741 = vadd.f32 %v3516, %v3740
        %v3742 = vpop.f32.mrb[0].mxu0
        %3743 = vmatprep.mubr.f32.mxu0 0.0
        %3744 = vmatmul.mubr.f32.gmra.mrb[0].mxu0 %v2476
        %v3745 = vpop.f32.mrb[0].mxu0
        %v3746 = vadd.f32 %v3521, %v3745
        %v3747 = vpop.f32.mrb[0].mxu0
        %3748 = vmatprep.mubr.f32.mxu0 0.0
        %3749 = vmatmul.mubr.f32.gmra.mrb[0].mxu0 %v2479
        %v3750 = vpop.f32.mrb[0].mxu0
        %v3751 = vadd.f32 %v3526, %v3750
        %v3752 = vpop.f32.mrb[0].mxu0
        %3753 = vmatprep.mubr.f32.mxu0 0.0
        %3754 = vmatmul.mubr.f32.gmra.mrb[0].mxu0 %v2481
        %v3755 = vpop.f32.mrb[0].mxu0
        %v3756 = vadd.f32 %v3531, %v3755
        %v3757 = vpop.f32.mrb[0].mxu0
        %3758 = vmatprep.mubr.f32.mxu0 0.0
        %3759 = vmatmul.mubr.f32.gmra.mrb[0].mxu0 %v2484
        %v3760 = vpop.f32.mrb[0].mxu0
        %v3761 = vadd.f32 %v3536, %v3760
        %v3762 = vpop.f32.mrb[0].mxu0
        %3763 = vmatprep.mubr.f32.mxu0 0.0
        %3764 = vmatmul.mubr.f32.gmra.mrb[0].mxu0 %v2486
        %v3765 = vpop.f32.mrb[0].mxu0
        %v3766 = vadd.f32 %v3541, %v3765
        %v3767 = vpop.f32.mrb[0].mxu0
        %3768 = vmatprep.mubr.f32.mxu0 0.0
        %3769 = vmatmul.mubr.f32.gmra.mrb[0].mxu0 %v2489
        %v3770 = vpop.f32.mrb[0].mxu0
        %v3771 = vadd.f32 %v3546, %v3770
        %v3772 = vpop.f32.mrb[0].mxu0
        %3773 = vmatprep.mubr.f32.mxu0 0.0
        %3774 = vmatmul.mubr.f32.gmra.mrb[0].mxu0 %v2491
        %v3775 = vpop.f32.mrb[0].mxu0
        %v3776 = vadd.f32 %v3551, %v3775
        %v3777 = vpop.f32.mrb[0].mxu0
        %3778 = vmatprep.mubr.f32.mxu0 0.0
        %3779 = vmatmul.mubr.f32.gmra.mrb[0].mxu0 %v2494
        %v3780 = vpop.f32.mrb[0].mxu0
        %v3781 = vadd.f32 %v3556, %v3780
        %v3782 = vpop.f32.mrb[0].mxu0
        %3783 = vmatprep.mubr.f32.mxu0 0.0
        %3784 = vmatmul.mubr.f32.gmra.mrb[0].mxu0 %v2496
        %v3785 = vpop.f32.mrb[0].mxu0
        %v3786 = vadd.f32 %v3561, %v3785
        %v3787 = vpop.f32.mrb[0].mxu0
        %3788 = vmatprep.mubr.f32.mxu0 0.0
        %3789 = vmatmul.mubr.f32.gmra.mrb[0].mxu0 %v2499
        %v3790 = vpop.f32.mrb[0].mxu0
        %v3791 = vadd.f32 %v3566, %v3790
        %v3792 = vpop.f32.mrb[0].mxu0
        %3793 = vmatprep.mubr.f32.mxu0 0.0
        %3794 = vmatmul.mubr.f32.gmra.mrb[0].mxu0 %v2501
        %v3795 = vpop.f32.mrb[0].mxu0
        %v3796 = vadd.f32 %v3571, %v3795
        %v3797 = vpop.f32.mrb[0].mxu0
        %3798 = vmatprep.mubr.f32.mxu0 0.0
        %3799 = vmatmul.mubr.f32.gmra.mrb[0].mxu0 %v2504
        %v3800 = vpop.f32.mrb[0].mxu0
        %v3801 = vadd.f32 %v3576, %v3800
        %v3802 = vpop.f32.mrb[0].mxu0
        %3803 = vmatprep.mubr.f32.mxu0 0.0
        %3804 = vmatmul.mubr.f32.gmra.mrb[0].mxu0 %v2506
        %v3805 = vpop.f32.mrb[0].mxu0
        %v3806 = vadd.f32 %v3581, %v3805
        %v3807 = vpop.f32.mrb[0].mxu0
        %3808 = vmatprep.mubr.f32.mxu0 0.0
        %3809 = vmatmul.mubr.f32.gmra.mrb[0].mxu0 %v2509
        %v3810 = vpop.f32.mrb[0].mxu0
        %v3811 = vadd.f32 %v3586, %v3810
        %v3812 = vpop.f32.mrb[0].mxu0
        %3813 = vmatprep.mubr.f32.mxu0 0.0
        %3814 = vmatmul.mubr.f32.gmra.mrb[0].mxu0 %v2511
        %v3815 = vpop.f32.mrb[0].mxu0
        %v3816 = vadd.f32 %v3591, %v3815
        %v3817 = vpop.f32.mrb[0].mxu0
        %3818 = vmatprep.mubr.f32.mxu0 0.0
        %3819 = vmatmul.mubr.f32.gmra.mrb[0].mxu0 %v2514
        %v3820 = vpop.f32.mrb[0].mxu0
        %v3821 = vadd.f32 %v3596, %v3820
        %v3822 = vpop.f32.mrb[0].mxu0
        %3823 = vmatprep.mubr.f32.mxu0 0.0
        %3824 = vmatmul.mubr.f32.gmra.mrb[0].mxu0 %v2516
        %v3825 = vpop.f32.mrb[0].mxu0
        %v3826 = vadd.f32 %v3601, %v3825
        %v3827 = vpop.f32.mrb[0].mxu0
        %3828 = vmatprep.mubr.f32.mxu0 0.0
        %3829 = vmatmul.mubr.f32.gmra.mrb[0].mxu0 %v2519
        %v3830 = vpop.f32.mrb[0].mxu0
        %v3831 = vadd.f32 %v3606, %v3830
        %v3832 = vpop.f32.mrb[0].mxu0
        %3833 = vmatprep.mubr.f32.mxu0 0.0
        %3834 = vmatmul.mubr.f32.gmra.mrb[0].mxu0 %v2521
        %v3835 = vpop.f32.mrb[0].mxu0
        %v3836 = vadd.f32 %v3611, %v3835
        %v3837 = vpop.f32.mrb[0].mxu0
        %3838 = vmatprep.mubr.f32.mxu0 0.0
        %3839 = vmatmul.mubr.f32.gmra.mrb[0].mxu0 %v2524
        %v3840 = vpop.f32.mrb[0].mxu0
        %v3841 = vadd.f32 %v3616, %v3840
        %v3842 = vpop.f32.mrb[0].mxu0
        %3843 = vmatprep.mubr.f32.mxu0 0.0
        %3844 = vmatmul.mubr.f32.gmra.mrb[0].mxu0 %v2526
        %v3845 = vpop.f32.mrb[0].mxu0
        %v3846 = vadd.f32 %v3621, %v3845
        %v3847 = vpop.f32.mrb[0].mxu0
        %3848 = vmatprep.mubr.f32.mxu0 0.0
        %3849 = vmatmul.mubr.f32.gmra.mrb[0].mxu0 %v2571
        %v3850 = vpop.f32.mrb[0].mxu0
        %v3851 = vadd.f32 %v3626, %v3850
        %v3852 = vpop.f32.mrb[0].mxu0
        %3853 = vmatprep.mubr.f32.mxu0 0.0
        %3854 = vmatmul.mubr.f32.gmra.mrb[0].mxu0 %v2573
        %v3855 = vpop.f32.mrb[0].mxu0
        %v3856 = vadd.f32 %v3631, %v3855
        %v3857 = vpop.f32.mrb[0].mxu0
        %3858 = vmatprep.mubr.f32.mxu0 0.0
        %3859 = vmatmul.mubr.f32.gmra.mrb[0].mxu0 %v2588
        %v3860 = vpop.f32.mrb[0].mxu0
        %v3861 = vadd.f32 %v3636, %v3860
        %v3862 = vpop.f32.mrb[0].mxu0
        %3863 = vmatprep.mubr.f32.mxu0 0.0
        %3864 = vmatmul.mubr.f32.gmra.mrb[0].mxu0 %v2590
        %v3865 = vpop.f32.mrb[0].mxu0
        %v3866 = vadd.f32 %v3641, %v3865
        %v3867 = vpop.f32.mrb[0].mxu0
        %3868 = vdwg.mxu0
        %v3869 = vmax.f32 %v3711, 0.0
        %v3870 = vmax.f32 %v3716, 0.0
        %v3871 = vmax.f32 %v3721, 0.0
        %v3872 = vmax.f32 %v3726, 0.0
        %v3873 = vmax.f32 %v3731, 0.0
        %v3874 = vmax.f32 %v3736, 0.0
        %v3875 = vmax.f32 %v3741, 0.0
        %v3876 = vmax.f32 %v3746, 0.0
        %v3877 = vmax.f32 %v3751, 0.0
        %v3878 = vmax.f32 %v3756, 0.0
        %v3879 = vmax.f32 %v3761, 0.0
        %v3880 = vmax.f32 %v3766, 0.0
        %v3881 = vmax.f32 %v3771, 0.0
        %v3882 = vmax.f32 %v3776, 0.0
        %v3883 = vmax.f32 %v3781, 0.0
        %v3884 = vmax.f32 %v3786, 0.0
        %v3885 = vmax.f32 %v3791, 0.0
        %v3886 = vmax.f32 %v3796, 0.0
        %v3887 = vmax.f32 %v3801, 0.0
        %v3888 = vmax.f32 %v3806, 0.0
        %v3889 = vmax.f32 %v3811, 0.0
        %v3890 = vmax.f32 %v3816, 0.0
        %v3891 = vmax.f32 %v3821, 0.0
        %v3892 = vmax.f32 %v3826, 0.0
        %v3893 = vmax.f32 %v3831, 0.0
        %v3894 = vmax.f32 %v3836, 0.0
        %v3895 = vmax.f32 %v3841, 0.0
        %v3896 = vmax.f32 %v3846, 0.0
        %v3897 = vmax.f32 %v3851, 0.0
        %v3898 = vmax.f32 %v3856, 0.0
        %v3899 = vmax.f32 %v3861, 0.0
        %v3900 = vmax.f32 %v3866, 0.0
        %3901 = vst [vmem:[%s302] sm:$0xff] %v3869
        %3902 = vst [vmem:[%s302 + $0x8] sm:$0xff] %v3870
        %3903 = vst [vmem:[%s302 + $0x10] sm:$0xff] %v3871
        %3904 = vst [vmem:[%s302 + $0x18] sm:$0xff] %v3872
        %3905 = vst [vmem:[%s302 + $0x20] sm:$0xff] %v3873
        %3906 = vst [vmem:[%s302 + $0x28] sm:$0xff] %v3874
        %3907 = vst [vmem:[%s302 + $0x30] sm:$0xff] %v3875
        %3908 = vst [vmem:[%s302 + $0x38] sm:$0xff] %v3876
        %3909 = vst [vmem:[%s302 + $0x40] sm:$0xff] %v3877
        %3910 = vst [vmem:[%s302 + $0x48] sm:$0xff] %v3878
        %3911 = vst [vmem:[%s302 + $0x50] sm:$0xff] %v3879
        %3912 = vst [vmem:[%s302 + $0x58] sm:$0xff] %v3880
        %3913 = vst [vmem:[%s302 + $0x60] sm:$0xff] %v3881
        %3914 = vst [vmem:[%s302 + $0x68] sm:$0xff] %v3882
        %3915 = vst [vmem:[%s302 + $0x70] sm:$0xff] %v3883
        %3916 = vst [vmem:[%s302 + $0x78] sm:$0xff] %v3884
        %3917 = vst [vmem:[%s302 + $0x80] sm:$0xff] %v3885
        %3918 = vst [vmem:[%s302 + $0x88] sm:$0xff] %v3886
        %3919 = vst [vmem:[%s302 + $0x90] sm:$0xff] %v3887
        %3920 = vst [vmem:[%s302 + $0x98] sm:$0xff] %v3888
        %3921 = vst [vmem:[%s302 + $0xa0] sm:$0xff] %v3889
        %3922 = vst [vmem:[%s302 + $0xa8] sm:$0xff] %v3890
        %3923 = vst [vmem:[%s302 + $0xb0] sm:$0xff] %v3891
        %3924 = vst [vmem:[%s302 + $0xb8] sm:$0xff] %v3892
        %3925 = vst [vmem:[%s302 + $0xc0] sm:$0xff] %v3893
        %3926 = vst [vmem:[%s302 + $0xc8] sm:$0xff] %v3894
        %3927 = vst [vmem:[%s302 + $0xd0] sm:$0xff] %v3895
        %3928 = vst [vmem:[%s302 + $0xd8] sm:$0xff] %v3896
        %3929 = vst [vmem:[%s302 + $0xe0] sm:$0xff] %v3897
        %3930 = vst [vmem:[%s302 + $0xe8] sm:$0xff] %v3898
        %3931 = vst [vmem:[%s302 + $0xf0] sm:$0xff] %v3899
        %3932 = vst [vmem:[%s302 + $0xf8] sm:$0xff] %v3900
        %v3933 = vld [vmem:[%s302] ss:$2 sm:$0xff]
        %s3934 = scalar_lea.vmem %s302, 32 [#allocation10]
        %v3935 = vld [vmem:[%s3934] ss:$2 sm:$0xff]
        %s3936 = scalar_lea.vmem %s302, 64 [#allocation10]
        %v3937 = vld [vmem:[%s3936] ss:$2 sm:$0xff]
        %s3938 = scalar_lea.vmem %s302, 96 [#allocation10]
        %v3939 = vld [vmem:[%s3938] ss:$2 sm:$0xff]
        %s3940 = scalar_lea.vmem %s302, 128 [#allocation10]
        %v3941 = vld [vmem:[%s3940] ss:$2 sm:$0xff]
        %s3942 = scalar_lea.vmem %s302, 160 [#allocation10]
        %v3943 = vld [vmem:[%s3942] ss:$2 sm:$0xff]
        %s3944 = scalar_lea.vmem %s302, 192 [#allocation10]
        %v3945 = vld [vmem:[%s3944] ss:$2 sm:$0xff]
        %s3946 = scalar_lea.vmem %s302, 224 [#allocation10]
        %v3947 = vld [vmem:[%s3946] ss:$2 sm:$0xff]
        %s3948 = scalar_lea.vmem %s302, 1 [#allocation10]
        %v3949 = vld [vmem:[%s3948] ss:$2 sm:$0xff]
        %s3950 = scalar_lea.vmem %s302, 33 [#allocation10]
        %v3951 = vld [vmem:[%s3950] ss:$2 sm:$0xff]
        %s3952 = scalar_lea.vmem %s302, 65 [#allocation10]
        %v3953 = vld [vmem:[%s3952] ss:$2 sm:$0xff]
        %s3954 = scalar_lea.vmem %s302, 97 [#allocation10]
        %v3955 = vld [vmem:[%s3954] ss:$2 sm:$0xff]
        %s3956 = scalar_lea.vmem %s302, 129 [#allocation10]
        %v3957 = vld [vmem:[%s3956] ss:$2 sm:$0xff]
        %s3958 = scalar_lea.vmem %s302, 161 [#allocation10]
        %v3959 = vld [vmem:[%s3958] ss:$2 sm:$0xff]
        %s3960 = scalar_lea.vmem %s302, 193 [#allocation10]
        %v3961 = vld [vmem:[%s3960] ss:$2 sm:$0xff]
        %s3962 = scalar_lea.vmem %s302, 225 [#allocation10]
        %v3963 = vld [vmem:[%s3962] ss:$2 sm:$0xff]
        %s3964 = scalar_lea.vmem %s302, 16 [#allocation10]
        %v3965 = vld [vmem:[%s3964] ss:$2 sm:$0xff]
        %s3966 = scalar_lea.vmem %s3964, 32 [#allocation10]
        %v3967 = vld [vmem:[%s3966] ss:$2 sm:$0xff]
        %s3968 = scalar_lea.vmem %s3964, 64 [#allocation10]
        %v3969 = vld [vmem:[%s3968] ss:$2 sm:$0xff]
        %s3970 = scalar_lea.vmem %s3964, 96 [#allocation10]
        %v3971 = vld [vmem:[%s3970] ss:$2 sm:$0xff]
        %s3972 = scalar_lea.vmem %s3964, 128 [#allocation10]
        %v3973 = vld [vmem:[%s3972] ss:$2 sm:$0xff]
        %s3974 = scalar_lea.vmem %s3964, 160 [#allocation10]
        %v3975 = vld [vmem:[%s3974] ss:$2 sm:$0xff]
        %s3976 = scalar_lea.vmem %s3964, 192 [#allocation10]
        %v3977 = vld [vmem:[%s3976] ss:$2 sm:$0xff]
        %s3978 = scalar_lea.vmem %s3964, 224 [#allocation10]
        %v3979 = vld [vmem:[%s3978] ss:$2 sm:$0xff]
        %s3980 = scalar_lea.vmem %s3964, 1 [#allocation10]
        %v3981 = vld [vmem:[%s3980] ss:$2 sm:$0xff]
        %s3982 = scalar_lea.vmem %s3964, 33 [#allocation10]
        %v3983 = vld [vmem:[%s3982] ss:$2 sm:$0xff]
        %s3984 = scalar_lea.vmem %s3964, 65 [#allocation10]
        %v3985 = vld [vmem:[%s3984] ss:$2 sm:$0xff]
        %s3986 = scalar_lea.vmem %s3964, 97 [#allocation10]
        %v3987 = vld [vmem:[%s3986] ss:$2 sm:$0xff]
        %s3988 = scalar_lea.vmem %s3964, 129 [#allocation10]
        %v3989 = vld [vmem:[%s3988] ss:$2 sm:$0xff]
        %s3990 = scalar_lea.vmem %s3964, 161 [#allocation10]
        %v3991 = vld [vmem:[%s3990] ss:$2 sm:$0xff]
        %s3992 = scalar_lea.vmem %s3964, 193 [#allocation10]
        %v3993 = vld [vmem:[%s3992] ss:$2 sm:$0xff]
        %s3994 = scalar_lea.vmem %s3964, 225 [#allocation10]
        %v3995 = vld [vmem:[%s3994] ss:$2 sm:$0xff]
        %v3996 = vmax.f32 %v3933, %v3949
        %v3997 = vmax.f32 %v3935, %v3951
        %v3998 = vmax.f32 %v3937, %v3953
        %v3999 = vmax.f32 %v3939, %v3955
        %v4000 = vmax.f32 %v3941, %v3957
        %v4001 = vmax.f32 %v3943, %v3959
        %v4002 = vmax.f32 %v3945, %v3961
        %v4003 = vmax.f32 %v3947, %v3963
        %v4004 = vmax.f32 %v3965, %v3981
        %v4005 = vmax.f32 %v3967, %v3983
        %v4006 = vmax.f32 %v3969, %v3985
        %v4007 = vmax.f32 %v3971, %v3987
        %v4008 = vmax.f32 %v3973, %v3989
        %v4009 = vmax.f32 %v3975, %v3991
        %v4010 = vmax.f32 %v3977, %v3993
        %v4011 = vmax.f32 %v3979, %v3995
        %v4012 = vmax.f32 %v3996, %v4004
        %v4013 = vmax.f32 %v3997, %v4005
        %v4014 = vmax.f32 %v3998, %v4006
        %v4015 = vmax.f32 %v3999, %v4007
        %v4016 = vmax.f32 %v4000, %v4008
        %v4017 = vmax.f32 %v4001, %v4009
        %v4018 = vmax.f32 %v4002, %v4010
        %v4019 = vmax.f32 %v4003, %v4011
        %4020 = vst [vmem:[%s309] sm:$0xff] %v4012
        %4021 = vst [vmem:[%s309 + $0x8] sm:$0xff] %v4013
        %4022 = vst [vmem:[%s309 + $0x10] sm:$0xff] %v4014
        %4023 = vst [vmem:[%s309 + $0x18] sm:$0xff] %v4015
        %4024 = vst [vmem:[%s309 + $0x20] sm:$0xff] %v4016
        %4025 = vst [vmem:[%s309 + $0x28] sm:$0xff] %v4017
        %4026 = vst [vmem:[%s309 + $0x30] sm:$0xff] %v4018
        %4027 = vst [vmem:[%s309 + $0x38] sm:$0xff] %v4019
        %s4028 = sand.u32 %s146, 1
        %s4029 = scalar_lea.sflag [#allocation6], %s4028
        %s4030 = sand.u32 %s146, 1
        %s4031 = smul.addr %s4030, 256
        %s4032 = scalar_lea.vmem [#allocation10], %s4031
        %s4033 = sand.u32 %s172, 1
        %s4034 = scalar_lea.sflag [#allocation12], %s4033
        %s4035 = sand.u32 %s172, 1
        %s4036 = smul.addr %s4035, 64
        %s4037 = scalar_lea.vmem [#allocation11], %s4036
        // Predicated region
        $region53: #{tpu_custom_call.1} parent=39 // pred_check
          %p4038 = pneg %p156
        $region54: #{tpu_custom_call.1} parent=39 // pred_check_branch
          %4040 = sbr.rel (%p4038) target = $region56
        $region55: #{tpu_custom_call.1} parent=39 // pred_region
          %s4042 = ssub.s32 4096, 4096
          %4043 = vsyncadd %s4029, %s4042
          %s4044 = smul.addr %s28, 32
          %s4045 = smul.addr %s4044, 128
          %s4046 = scalar_lea.hbm %s5, %s4045
          %s4047 = sshll.u32 %s4032, 4
          %s4048 = int_to_ptr.vmem [resolvable:$true] %s4047
          %4053 = dma.vmem_to_hbm [thread:$0]  %s4048, 4096, %s4046, %s4029, 128, 128, 8
        $region56: #{tpu_custom_call.1} parent=39 // pred_fallthru
          _
        // Predicated region
        $region57: #{tpu_custom_call.1} parent=39 // pred_check
          %p4054 = pneg %p182
        $region58: #{tpu_custom_call.1} parent=39 // pred_check_branch
          %4056 = sbr.rel (%p4054) target = $region60
        $region59: #{tpu_custom_call.1} parent=39 // pred_region
          %s4058 = ssub.s32 1024, 1024
          %4059 = vsyncadd %s4034, %s4058
          %s4060 = smul.addr %s28, 8
          %s4061 = smul.addr %s4060, 128
          %s4062 = scalar_lea.hbm %s6, %s4061
          %s4063 = sshll.u32 %s4037, 4
          %s4064 = int_to_ptr.vmem [resolvable:$true] %s4063
          %4069 = dma.vmem_to_hbm [thread:$0]  %s4064, 1024, %s4062, %s4034, 128, 128, 8
        $region60: #{tpu_custom_call.1} parent=39 // pred_fallthru
          _
      $region40: #{tpu_custom_call.1} parent=5 // pred_fallthru
        _
      %p4070 = scmp.le.s32.totalorder 2, %s23
      // Predicated region
      $region61: #{tpu_custom_call.1} parent=5 // pred_check
        %p4071 = pneg %p4070
      $region62: #{tpu_custom_call.1} parent=5 // pred_check_branch
        %4073 = sbr.rel (%p4071) target = $region64
      $region63: #{tpu_custom_call.1} parent=5 // pred_region
        %s4074 = ssub.s32 %s23, 2
        // Predicated region
        $region65: #{tpu_custom_call.1} parent=63 // pred_check
          %p4075 = pneg %p162
        $region66: #{tpu_custom_call.1} parent=63 // pred_check_branch
          %4077 = sbr.rel (%p4075) target = $region68
        $region67: #{tpu_custom_call.1} parent=63 // pred_region
          %s4078 = sand.u32 %s147, 1
          %s4079 = scalar_lea.sflag [#allocation6], %s4078
          %s4080 = sand.u32 %s147, 1
          %s4081 = smul.addr %s4080, 256
          %s4082 = scalar_lea.vmem [#allocation10], %s4081
          %4083 = dma.done %s4079, 4096
        $region68: #{tpu_custom_call.1} parent=63 // pred_fallthru
          _
        // Predicated region
        $region69: #{tpu_custom_call.1} parent=63 // pred_check
          %p4084 = pneg %p188
        $region70: #{tpu_custom_call.1} parent=63 // pred_check_branch
          %4086 = sbr.rel (%p4084) target = $region72
        $region71: #{tpu_custom_call.1} parent=63 // pred_region
          %s4087 = sand.u32 %s173, 1
          %s4088 = scalar_lea.sflag [#allocation12], %s4087
          %s4089 = sand.u32 %s173, 1
          %s4090 = smul.addr %s4089, 64
          %s4091 = scalar_lea.vmem [#allocation11], %s4090
          %4092 = dma.done %s4088, 1024
        $region72: #{tpu_custom_call.1} parent=63 // pred_fallthru
          _
      $region64: #{tpu_custom_call.1} parent=5 // pred_fallthru
        _
    $region6: #{tpu_custom_call.1} parent=1 // loop_footer
      %s27 = sadd.s32 1, %s23
    $region7: #{tpu_custom_call.1} parent=1 // loop_footer_branch
      %22 = sbr.rel target = $region3
    $region8: #{tpu_custom_call.1} parent=1 // loop_exit
      _
    %4093 = vsyncpa [#allocation5], 1
    %s4094 = scalar_lea.sflag [#allocation5], 1
    %4095 = vsyncpa %s4094, 1
    %4096 = vsyncpa [#allocation8], 1
    %4097 = vsyncpa [#allocation6], 1
    %s4098 = scalar_lea.sflag [#allocation6], 1
    %4099 = vsyncpa %s4098, 1
    %4100 = vsyncpa [#allocation12], 1
    %s4101 = scalar_lea.sflag [#allocation12], 1
    %4102 = vsyncpa %s4101, 1

</llo_original>
